<compile_context>
chip_gen: v6e
topology: v6e:2x2x1
jax: 0.10.0
libtpu: 0.0.40
codegen_flags: <defaults>
</compile_context>

<pallas_src>
import functools

import jax
import jax.numpy as jnp
from jax.experimental import pallas as pl
from jax.experimental.pallas import tpu as pltpu

_VMEM_LIMIT = 32 * 1024 * 1024   # explicit scoped-VMEM headroom (safe on v5e/v6e/v7x)


# ----------------------------------------------------------------------------------
# Per-channel sum / sum-of-squares reduction (for BatchNorm statistics of the input).
# Lane-dense layout: the array is viewed as (rows, 128) so every load uses all 128
# lanes; the per-channel fold of the 128 column-sums is a tiny host-side reshape.
# ----------------------------------------------------------------------------------
def _colsum_kernel(x_ref, sum_ref, sq_ref):
    @pl.when(pl.program_id(0) == 0)
    def _init():
        sum_ref[...] = jnp.zeros_like(sum_ref)
        sq_ref[...] = jnp.zeros_like(sq_ref)

    x = x_ref[...].astype(jnp.float32)
    sum_ref[...] += jnp.sum(x, axis=0, keepdims=True)
    sq_ref[...] += jnp.sum(x * x, axis=0, keepdims=True)


def _pick_row_tile(rows, cap=1024):
    """Largest legal row-tile: whole array if small, else a multiple-of-8 divisor."""
    if rows <= cap:
        return rows
    for t in range(cap, 7, -1):
        if rows % t == 0 and t % 8 == 0:
            return t
    return rows  # last resort: single block


def channel_sums(x_flat, C):
    """Per-channel sum and sum-of-squares of a channels-minor array."""
    total = x_flat.size
    # Lane-dense path: pack 128/C channel groups per 128-lane row.
    L = 128 if (total % 128 == 0 and 128 % C == 0) else C
    rows = total // L
    x2d = x_flat.reshape(rows, L)
    tm = _pick_row_tile(rows)

    sums, sq = pl.pallas_call(
        _colsum_kernel,
        out_shape=(jax.ShapeDtypeStruct((1, L), jnp.float32),
                   jax.ShapeDtypeStruct((1, L), jnp.float32)),
        grid=(rows // tm,),
        in_specs=[pl.BlockSpec((tm, L), lambda i: (i, 0))],
        out_specs=(pl.BlockSpec((1, L), lambda i: (0, 0)),
                   pl.BlockSpec((1, L), lambda i: (0, 0))),
        compiler_params=pltpu.CompilerParams(
            dimension_semantics=("arbitrary",),
            vmem_limit_bytes=_VMEM_LIMIT),
    )(x2d)

    ch_sum = sums.reshape(L // C, C).sum(axis=0)
    ch_sq = sq.reshape(L // C, C).sum(axis=0)
    return ch_sum, ch_sq, total // C


def bn_scale_shift(ch_sum, ch_sq, count, gamma, beta, eps):
    """Per-channel (scale, shift) for PyTorch train-mode BatchNorm (biased variance)."""
    mean = ch_sum / count
    var = ch_sq / count - mean * mean
    # TODO(synk): E[x^2]-mean^2 can lose precision for large-|mean| inputs; fine here.
    scale = gamma.astype(jnp.float32) * jax.lax.rsqrt(var + eps)
    shift = beta.astype(jnp.float32) - mean * scale
    return scale, shift


# ----------------------------------------------------------------------------------
# Fused [BN-apply + ReLU + Conv3d (+bias) (+residual) (+BN-stats epilogue)] kernel.
# ----------------------------------------------------------------------------------
def _expand_weight_width(w_dhwio, W, p):
    """(KD,KH,KW,Ci,Co) -> (KD*KH, Wp*Ci, W*Co) block-banded matrices.

    Folds the KW width taps and the whole W axis into a single matmul per (kd,kh), so
    the matmul lane axes carry Wp*Ci (K) and W*Co (N) instead of Ci=8 / Co=8.
    Note: the expanded weight scales ~W^2/KW; tile W for very wide volumes.
    """
    KD, KH, KW, Ci, Co = w_dhwio.shape
    Wp = W + 2 * p
    sel = (jnp.arange(Wp)[None, :, None] ==
           (jnp.arange(W)[None, None, :] + jnp.arange(KW)[:, None, None]))
    sel = sel.astype(w_dhwio.dtype)                       # (KW, Wp, W)
    wt = w_dhwio.reshape(KD * KH, KW, Ci, Co)
    wexp = jnp.einsum("kxw,tkio->txiwo", sel, wt)         # (T, Wp, Ci, W, Co)
    return wexp.reshape(KD * KH, Wp * Ci, W * Co)


def _fused_bn_relu_conv_kernel(x_ref, scale_ref, shift_ref, w_ref, b_ref, *rest,
                               D, H, W, C, K, p, compute_stats, add_residual):
    i = 0
    res_ref = None
    if add_residual:
        res_ref = rest[i]; i += 1
    out_ref = rest[i]; i += 1
    if compute_stats:
        sum_ref, sq_ref = rest[i], rest[i + 1]; i += 2
    xp_ref, acc_ref = rest[i], rest[i + 1]

    Hp = H + 2 * p
    WC = W * C

    if compute_stats:
        @pl.when(pl.program_id(0) == 0)
        def _init_stats():
            sum_ref[...] = jnp.zeros_like(sum_ref)
            sq_ref[...] = jnp.zeros_like(sq_ref)

    # --- Build the zero-padded, BN+ReLU-normalized activation in VMEM (no HBM pad). ---
    xp_ref[...] = jnp.zeros_like(xp_ref)
    for d in range(D):
        xhat = x_ref[0, d].astype(jnp.float32) * scale_ref[...] + shift_ref[...]
        xhat = jnp.maximum(xhat, 0.0)
        xp_ref[pl.ds((d + p) * Hp + p, H), pl.ds(p * C, WC)] = xhat

    # --- 3-D conv as K*K width-unrolled matmuls, accumulated in a VMEM scratch. ---
    acc_ref[...] = jnp.zeros_like(acc_ref)
    for kd in range(K):
        for kh in range(K):
            t = kd * K + kh
            lhs = xp_ref[pl.ds(kd * Hp + kh, D * Hp), :]          # (D*Hp, Wp*C)
            acc_ref[...] += jnp.dot(lhs, w_ref[t],
                                    preferred_element_type=jnp.float32)

    # --- Epilogue: bias, (BN2 statistics), (residual), store. ---
    for d in range(D):
        y = acc_ref[pl.ds(d * Hp, H), :] + b_ref[...]             # (H, W*C), f32
        if compute_stats:
            sum_ref[...] += jnp.sum(y, axis=0, keepdims=True)
            sq_ref[...] += jnp.sum(y * y, axis=0, keepdims=True)
        if add_residual:
            y = y + res_ref[0, d].astype(jnp.float32)
        out_ref[0, d] = y.astype(out_ref.dtype)


def fused_bn_relu_conv(x_flat, scale, shift, w_dhwio, bias, *, C, kernel_size, padding,
                       residual=None, compute_stats=False):
    """y = Conv3d(relu(x*scale+shift)) [+ residual]; optionally return per-(w,c) stats of y."""
    N, D, H, WC = x_flat.shape
    W = WC // C
    K, p = kernel_size, padding
    Hp, Wp, Dp = H + 2 * p, W + 2 * p, D + 2 * p

    wexp = _expand_weight_width(w_dhwio, W, p).astype(jnp.float32)  # (K*K, Wp*C, W*C)
    scale_t = jnp.tile(scale.astype(jnp.float32), W).reshape(1, WC)
    shift_t = jnp.tile(shift.astype(jnp.float32), W).reshape(1, WC)
    bias_t = jnp.tile(bias.astype(jnp.float32), W).reshape(1, WC)

    kernel = functools.partial(
        _fused_bn_relu_conv_kernel, D=D, H=H, W=W, C=C, K=K, p=p,
        compute_stats=compute_stats, add_residual=residual is not None)

    in_specs = [
        pl.BlockSpec((1, D, H, WC), lambda n: (n, 0, 0, 0)),          # x
        pl.BlockSpec((1, WC), lambda n: (0, 0)),                      # BN scale (tiled)
        pl.BlockSpec((1, WC), lambda n: (0, 0)),                      # BN shift (tiled)
        pl.BlockSpec((K * K, Wp * C, WC), lambda n: (0, 0, 0)),       # expanded weights
        pl.BlockSpec((1, WC), lambda n: (0, 0)),                      # bias (tiled)
    ]
    args = [x_flat, scale_t, shift_t, wexp, bias_t]
    if residual is not None:
        in_specs.append(pl.BlockSpec((1, D, H, WC), lambda n: (n, 0, 0, 0)))
        args.append(residual)

    y_shape = jax.ShapeDtypeStruct((N, D, H, WC), x_flat.dtype)
    y_spec = pl.BlockSpec((1, D, H, WC), lambda n: (n, 0, 0, 0))
    if compute_stats:
        stat_shape = jax.ShapeDtypeStruct((1, WC), jnp.float32)
        stat_spec = pl.BlockSpec((1, WC), lambda n: (0, 0))
        out_shape = (y_shape, stat_shape, stat_shape)
        out_specs = (y_spec, stat_spec, stat_spec)
        grid_sem = ("arbitrary",)       # shared stat accumulators -> sequential grid
    else:
        out_shape = y_shape
        out_specs = y_spec
        grid_sem = ("parallel",)        # independent per-batch blocks -> megacore OK

    # TODO(synk): for volumes that exceed VMEM (e.g. v7x 64 MiB), tile D with a KD-row
    # halo via manual make_async_copy double-buffering instead of one volume per step.
    return pl.pallas_call(
        kernel,
        out_shape=out_shape,
        grid=(N,),
        in_specs=in_specs,
        out_specs=out_specs,
        scratch_shapes=[
            pltpu.VMEM((Dp * Hp + 2 * p, Wp * C), jnp.float32),   # padded BN-ReLU activation
            pltpu.VMEM((D * Hp, WC), jnp.float32),                # f32 conv accumulator
        ],
        compiler_params=pltpu.CompilerParams(
            dimension_semantics=grid_sem,
            vmem_limit_bytes=_VMEM_LIMIT),
    )(*args)


# ----------------------------------------------------------------------------------
# ResBlock3D forward
# ----------------------------------------------------------------------------------
def res_block_3d(x_ncdhw, params, kernel_size=3, padding=1, eps=1e-5):
    assert kernel_size == 2 * padding + 1, "ResBlock3D preserves spatial resolution"
    N, C, D, H, W = x_ncdhw.shape
    # PyTorch NCDHW -> NDHWC, with (W, C) folded onto the lane axis (free reshape).
    x = jnp.transpose(x_ncdhw, (0, 2, 3, 4, 1)).reshape(N, D, H, W * C)

    # BN1 statistics (Pallas reduction) -> fused BN1+ReLU+conv1 (+BN2-stats epilogue).
    s1, q1, cnt = channel_sums(x, C)
    scale1, shift1 = bn_scale_shift(s1, q1, cnt, params["gamma1"], params["beta1"], eps)
    h1, hsum, hsq = fused_bn_relu_conv(
        x, scale1, shift1, params["w1"], params["b1"],
        C=C, kernel_size=kernel_size, padding=padding, compute_stats=True)

    # BN2 scale/shift from the fused statistics, then fused BN2+ReLU+conv2+residual.
    s2 = hsum.reshape(W, C).sum(axis=0)
    q2 = hsq.reshape(W, C).sum(axis=0)
    scale2, shift2 = bn_scale_shift(s2, q2, cnt, params["gamma2"], params["beta2"], eps)
    out = fused_bn_relu_conv(
        h1, scale2, shift2, params["w2"], params["b2"],
        C=C, kernel_size=kernel_size, padding=padding, residual=x, compute_stats=False)

    # TODO(synk): BatchNorm running_mean/running_var buffer updates (training-time
    # bookkeeping) are not materialized; forward math matches PyTorch train mode.
    return out.reshape(N, D, H, W, C).transpose(0, 4, 1, 2, 3)  # back to NCDHW


# ----------------------------------------------------------------------------------
# Pure-JAX reference for verification
# ----------------------------------------------------------------------------------
def _ref_bn(x, gamma, beta, eps):
    mean = jnp.mean(x, axis=(0, 1, 2, 3), keepdims=True)
    var = jnp.var(x, axis=(0, 1, 2, 3), keepdims=True)
    return gamma * (x - mean) * jax.lax.rsqrt(var + eps) + beta


def _ref_conv(x, w, b, p):
    out = jax.lax.conv_general_dilated(
        x, w, window_strides=(1, 1, 1), padding=[(p, p)] * 3,
        dimension_numbers=("NDHWC", "DHWIO", "NDHWC"))
    return out + b


def res_block_3d_reference(x_ncdhw, params, kernel_size=3, padding=1, eps=1e-5):
    x = jnp.transpose(x_ncdhw, (0, 2, 3, 4, 1))
    h = jax.nn.relu(_ref_bn(x, params["gamma1"], params["beta1"], eps))
    h = _ref_conv(h, params["w1"], params["b1"], padding)
    h = jax.nn.relu(_ref_bn(h, params["gamma2"], params["beta2"], eps))
    h = _ref_conv(h, params["w2"], params["b2"], padding)
    out = h + x
    return jnp.transpose(out, (0, 4, 1, 2, 3))


if __name__ == "__main__":
    key = jax.random.PRNGKey(0)
    N, C, D, H, W = 2, 8, 4, 8, 8          # small shapes, PyTorch-style NCDHW input
    ks, pad = 3, 1                          # kernel_size=3, padding=1 (same resolution)
    k = jax.random.split(key, 9)
    x = jax.random.normal(k[0], (N, C, D, H, W), jnp.float32)
    params = {
        # BatchNorm affine params (deterministic, non-trivial)
        "gamma1": 1.0 + 0.1 * jax.random.normal(k[1], (C,), jnp.float32),
        "beta1": 0.1 * jax.random.normal(k[2], (C,), jnp.float32),
        "gamma2": 1.0 + 0.1 * jax.random.normal(k[5], (C,), jnp.float32),
        "beta2": 0.1 * jax.random.normal(k[6], (C,), jnp.float32),
        # Conv weights stored as (KD, KH, KW, Ci, Co); Conv biases (Co,)
        "w1": 0.1 * jax.random.normal(k[3], (ks, ks, ks, C, C), jnp.float32),
        "b1": 0.1 * jax.random.normal(k[4], (C,), jnp.float32),
        "w2": 0.1 * jax.random.normal(k[7], (ks, ks, ks, C, C), jnp.float32),
        "b2": 0.1 * jax.random.normal(k[8], (C,), jnp.float32),
    }

    fwd = jax.jit(functools.partial(res_block_3d, kernel_size=ks, padding=pad))
    out = jax.block_until_ready(fwd(x, params))

    ref = res_block_3d_reference(x, params, kernel_size=ks, padding=pad)
    err = float(jnp.max(jnp.abs(out - ref)))
    assert out.shape == (N, C, D, H, W), out.shape
    # Tolerance accounts for default (single-pass bf16) MXU precision of the conv
    # matmuls vs the XLA reference (HIGHEST was dropped per the perf review).
    assert err < 5e-2, f"max abs error too large: {err}"
    print("KERNEL_OK")
</pallas_src>

<mosaic_0001>
module attributes {stable_mosaic.version = 11 : i64} {
  func.func @_colsum_kernel(%arg0: i32, %arg1: memref<32x128xf32, #tpu.memory_space<vmem>>, %arg2: memref<1x128xf32, #tpu.memory_space<vmem>>, %arg3: memref<1x128xf32, #tpu.memory_space<vmem>>) attributes {dimension_semantics = [#tpu.dimension_semantics<arbitrary>], iteration_bounds = array<i64: 1>, scalar_prefetch = 0 : i64, scratch_operands = 0 : i64, tpu.core_type = #tpu.core_type<tc>, window_params = [{transform_indices = @transform_0, window_bounds = array<i64: 32, 128>}, {pipeline_mode = #tpu.pipeline_mode<synchronous>, transform_indices = @transform_1, window_bounds = array<i64: 1, 128>}, {pipeline_mode = #tpu.pipeline_mode<synchronous>, transform_indices = @transform_2, window_bounds = array<i64: 1, 128>}]} {
    %c0_i32 = arith.constant 0 : i32
    %0 = arith.cmpi eq, %arg0, %c0_i32 : i32
    %1 = arith.extui %0 : i1 to i32
    %c0_i32_0 = arith.constant 0 : i32
    %2 = arith.cmpi ne, %1, %c0_i32_0 : i32
    scf.if %2 {
      %cst_11 = arith.constant 0.000000e+00 : f32
      %15 = vector.broadcast %cst_11 : f32 to vector<1x128xf32>
      %c0_12 = arith.constant 0 : index
      %c0_13 = arith.constant 0 : index
      %16 = vector.load %arg2[%c0_12, %c0_13] : memref<1x128xf32, #tpu.memory_space<vmem>>, vector<1x128xf32>
      tpu.vector_store %arg2[%c0_12, %c0_13], %15 {strides = array<i32>} : memref<1x128xf32, #tpu.memory_space<vmem>>, vector<1x128xf32>,
      %cst_14 = arith.constant 0.000000e+00 : f32
      %17 = vector.broadcast %cst_14 : f32 to vector<1x128xf32>
      %c0_15 = arith.constant 0 : index
      %c0_16 = arith.constant 0 : index
      %18 = vector.load %arg3[%c0_15, %c0_16] : memref<1x128xf32, #tpu.memory_space<vmem>>, vector<1x128xf32>
      tpu.vector_store %arg3[%c0_15, %c0_16], %17 {strides = array<i32>} : memref<1x128xf32, #tpu.memory_space<vmem>>, vector<1x128xf32>,
    } else {
    }
    %c0 = arith.constant 0 : index
    %c0_1 = arith.constant 0 : index
    %3 = vector.load %arg1[%c0, %c0_1] : memref<32x128xf32, #tpu.memory_space<vmem>>, vector<32x128xf32>
    %c0_2 = arith.constant 0 : index
    %c0_3 = arith.constant 0 : index
    %4 = vector.load %arg2[%c0_2, %c0_3] : memref<1x128xf32, #tpu.memory_space<vmem>>, vector<1x128xf32>
    %cst = arith.constant dense<0.000000e+00> : vector<128xf32>
    %5 = vector.multi_reduction <add>, %3, %cst [0] : vector<32x128xf32> to vector<128xf32>
    %6 = vector.shape_cast %5 : vector<128xf32> to vector<1x128xf32>
    %7 = arith.addf %4, %6 : vector<1x128xf32>
    %c0_4 = arith.constant 0 : index
    %c0_5 = arith.constant 0 : index
    %8 = vector.load %arg2[%c0_4, %c0_5] : memref<1x128xf32, #tpu.memory_space<vmem>>, vector<1x128xf32>
    tpu.vector_store %arg2[%c0_4, %c0_5], %7 {strides = array<i32>} : memref<1x128xf32, #tpu.memory_space<vmem>>, vector<1x128xf32>,
    %c0_6 = arith.constant 0 : index
    %c0_7 = arith.constant 0 : index
    %9 = vector.load %arg3[%c0_6, %c0_7] : memref<1x128xf32, #tpu.memory_space<vmem>>, vector<1x128xf32>
    %10 = arith.mulf %3, %3 : vector<32x128xf32>
    %cst_8 = arith.constant dense<0.000000e+00> : vector<128xf32>
    %11 = vector.multi_reduction <add>, %10, %cst_8 [0] : vector<32x128xf32> to vector<128xf32>
    %12 = vector.shape_cast %11 : vector<128xf32> to vector<1x128xf32>
    %13 = arith.addf %9, %12 : vector<1x128xf32>
    %c0_9 = arith.constant 0 : index
    %c0_10 = arith.constant 0 : index
    %14 = vector.load %arg3[%c0_9, %c0_10] : memref<1x128xf32, #tpu.memory_space<vmem>>, vector<1x128xf32>
    tpu.vector_store %arg3[%c0_9, %c0_10], %13 {strides = array<i32>} : memref<1x128xf32, #tpu.memory_space<vmem>>, vector<1x128xf32>,
    return
  }
  func.func @transform_0(%arg0: i32) -> (i32, i32) {
    %c0_i32 = arith.constant 0 : i32
    %c0_i32_0 = arith.constant 0 : i32
    return %arg0, %c0_i32 : i32, i32
  }
  func.func @transform_1(%arg0: i32) -> (i32, i32) {
    %c0_i32 = arith.constant 0 : i32
    %c0_i32_0 = arith.constant 0 : i32
    %c0_i32_1 = arith.constant 0 : i32
    return %c0_i32, %c0_i32_0 : i32, i32
  }
  func.func @transform_2(%arg0: i32) -> (i32, i32) {
    %c0_i32 = arith.constant 0 : i32
    %c0_i32_0 = arith.constant 0 : i32
    %c0_i32_1 = arith.constant 0 : i32
    return %c0_i32, %c0_i32_0 : i32, i32
  }
}

module attributes {stable_mosaic.version = 11 : i64} {
  func.func @_fused_bn_relu_conv_kernel(%arg0: i32, %arg1: memref<1x4x8x64xf32, #tpu.memory_space<vmem>>, %arg2: memref<1x64xf32, #tpu.memory_space<vmem>>, %arg3: memref<1x64xf32, #tpu.memory_space<vmem>>, %arg4: memref<9x80x64xf32, #tpu.memory_space<vmem>>, %arg5: memref<1x64xf32, #tpu.memory_space<vmem>>, %arg6: memref<1x4x8x64xf32, #tpu.memory_space<vmem>>, %arg7: memref<1x64xf32, #tpu.memory_space<vmem>>, %arg8: memref<1x64xf32, #tpu.memory_space<vmem>>, %arg9: memref<62x80xf32, #tpu.memory_space<vmem>>, %arg10: memref<40x64xf32, #tpu.memory_space<vmem>>) attributes {dimension_semantics = [#tpu.dimension_semantics<arbitrary>], iteration_bounds = array<i64: 2>, scalar_prefetch = 0 : i64, scratch_operands = 2 : i64, tpu.core_type = #tpu.core_type<tc>, window_params = [{transform_indices = @transform_0, window_bounds = array<i64: 1, 4, 8, 64>}, {pipeline_mode = #tpu.pipeline_mode<synchronous>, transform_indices = @transform_1, window_bounds = array<i64: 1, 64>}, {pipeline_mode = #tpu.pipeline_mode<synchronous>, transform_indices = @transform_2, window_bounds = array<i64: 1, 64>}, {pipeline_mode = #tpu.pipeline_mode<synchronous>, transform_indices = @transform_3, window_bounds = array<i64: 9, 80, 64>}, {pipeline_mode = #tpu.pipeline_mode<synchronous>, transform_indices = @transform_4, window_bounds = array<i64: 1, 64>}, {transform_indices = @transform_5, window_bounds = array<i64: 1, 4, 8, 64>}, {pipeline_mode = #tpu.pipeline_mode<synchronous>, transform_indices = @transform_6, window_bounds = array<i64: 1, 64>}, {pipeline_mode = #tpu.pipeline_mode<synchronous>, transform_indices = @transform_7, window_bounds = array<i64: 1, 64>}]} {
    %c0_i32 = arith.constant 0 : i32
    %0 = arith.cmpi eq, %arg0, %c0_i32 : i32
    %1 = arith.extui %0 : i1 to i32
    %c0_i32_0 = arith.constant 0 : i32
    %2 = arith.cmpi ne, %1, %c0_i32_0 : i32
    scf.if %2 {
      %cst_194 = arith.constant 0.000000e+00 : f32
      %186 = vector.broadcast %cst_194 : f32 to vector<1x64xf32>
      %c0_195 = arith.constant 0 : index
      %c0_196 = arith.constant 0 : index
      %187 = vector.load %arg7[%c0_195, %c0_196] : memref<1x64xf32, #tpu.memory_space<vmem>>, vector<1x64xf32>
      tpu.vector_store %arg7[%c0_195, %c0_196], %186 {strides = array<i32>} : memref<1x64xf32, #tpu.memory_space<vmem>>, vector<1x64xf32>,
      %cst_197 = arith.constant 0.000000e+00 : f32
      %188 = vector.broadcast %cst_197 : f32 to vector<1x64xf32>
      %c0_198 = arith.constant 0 : index
      %c0_199 = arith.constant 0 : index
      %189 = vector.load %arg8[%c0_198, %c0_199] : memref<1x64xf32, #tpu.memory_space<vmem>>, vector<1x64xf32>
      tpu.vector_store %arg8[%c0_198, %c0_199], %188 {strides = array<i32>} : memref<1x64xf32, #tpu.memory_space<vmem>>, vector<1x64xf32>,
    } else {
    }
    %cst = arith.constant 0.000000e+00 : f32
    %3 = vector.broadcast %cst : f32 to vector<62x80xf32>
    %c0 = arith.constant 0 : index
    %c0_1 = arith.constant 0 : index
    %4 = vector.load %arg9[%c0, %c0_1] : memref<62x80xf32, #tpu.memory_space<vmem>>, vector<62x80xf32>
    tpu.vector_store %arg9[%c0, %c0_1], %3 {strides = array<i32>} : memref<62x80xf32, #tpu.memory_space<vmem>>, vector<62x80xf32>,
    %c0_2 = arith.constant 0 : index
    %c0_3 = arith.constant 0 : index
    %c0_4 = arith.constant 0 : index
    %c0_5 = arith.constant 0 : index
    %5 = vector.load %arg1[%c0_2, %c0_3, %c0_4, %c0_5] : memref<1x4x8x64xf32, #tpu.memory_space<vmem>>, vector<1x1x8x64xf32>
    %6 = vector.shape_cast %5 : vector<1x1x8x64xf32> to vector<8x64xf32>
    %c0_6 = arith.constant 0 : index
    %c0_7 = arith.constant 0 : index
    %7 = vector.load %arg2[%c0_6, %c0_7] : memref<1x64xf32, #tpu.memory_space<vmem>>, vector<1x64xf32>
    %8 = vector.broadcast %7 : vector<1x64xf32> to vector<8x64xf32>
    %9 = arith.mulf %6, %8 : vector<8x64xf32>
    %c0_8 = arith.constant 0 : index
    %c0_9 = arith.constant 0 : index
    %10 = vector.load %arg3[%c0_8, %c0_9] : memref<1x64xf32, #tpu.memory_space<vmem>>, vector<1x64xf32>
    %11 = vector.broadcast %10 : vector<1x64xf32> to vector<8x64xf32>
    %12 = arith.addf %9, %11 : vector<8x64xf32>
    %cst_10 = arith.constant 0.000000e+00 : f32
    %13 = vector.broadcast %cst_10 : f32 to vector<8x64xf32>
    %14 = arith.maximumf %12, %13 : vector<8x64xf32>
    %c11 = arith.constant 11 : index
    %c8 = arith.constant 8 : index
    %15 = vector.load %arg9[%c11, %c8] : memref<62x80xf32, #tpu.memory_space<vmem>>, vector<8x64xf32>
    tpu.vector_store %arg9[%c11, %c8], %14 {strides = array<i32>} : memref<62x80xf32, #tpu.memory_space<vmem>>, vector<8x64xf32>,
    %c0_11 = arith.constant 0 : index
    %c1 = arith.constant 1 : index
    %c0_12 = arith.constant 0 : index
    %c0_13 = arith.constant 0 : index
    %16 = vector.load %arg1[%c0_11, %c1, %c0_12, %c0_13] : memref<1x4x8x64xf32, #tpu.memory_space<vmem>>, vector<1x1x8x64xf32>
    %17 = vector.shape_cast %16 : vector<1x1x8x64xf32> to vector<8x64xf32>
    %c0_14 = arith.constant 0 : index
    %c0_15 = arith.constant 0 : index
    %18 = vector.load %arg2[%c0_14, %c0_15] : memref<1x64xf32, #tpu.memory_space<vmem>>, vector<1x64xf32>
    %19 = vector.broadcast %18 : vector<1x64xf32> to vector<8x64xf32>
    %20 = arith.mulf %17, %19 : vector<8x64xf32>
    %c0_16 = arith.constant 0 : index
    %c0_17 = arith.constant 0 : index
    %21 = vector.load %arg3[%c0_16, %c0_17] : memref<1x64xf32, #tpu.memory_space<vmem>>, vector<1x64xf32>
    %22 = vector.broadcast %21 : vector<1x64xf32> to vector<8x64xf32>
    %23 = arith.addf %20, %22 : vector<8x64xf32>
    %cst_18 = arith.constant 0.000000e+00 : f32
    %24 = vector.broadcast %cst_18 : f32 to vector<8x64xf32>
    %25 = arith.maximumf %23, %24 : vector<8x64xf32>
    %c21 = arith.constant 21 : index
    %c8_19 = arith.constant 8 : index
    %26 = vector.load %arg9[%c21, %c8_19] : memref<62x80xf32, #tpu.memory_space<vmem>>, vector<8x64xf32>
    tpu.vector_store %arg9[%c21, %c8_19], %25 {strides = array<i32>} : memref<62x80xf32, #tpu.memory_space<vmem>>, vector<8x64xf32>,
    %c0_20 = arith.constant 0 : index
    %c2 = arith.constant 2 : index
    %c0_21 = arith.constant 0 : index
    %c0_22 = arith.constant 0 : index
    %27 = vector.load %arg1[%c0_20, %c2, %c0_21, %c0_22] : memref<1x4x8x64xf32, #tpu.memory_space<vmem>>, vector<1x1x8x64xf32>
    %28 = vector.shape_cast %27 : vector<1x1x8x64xf32> to vector<8x64xf32>
    %c0_23 = arith.constant 0 : index
    %c0_24 = arith.constant 0 : index
    %29 = vector.load %arg2[%c0_23, %c0_24] : memref<1x64xf32, #tpu.memory_space<vmem>>, vector<1x64xf32>
    %30 = vector.broadcast %29 : vector<1x64xf32> to vector<8x64xf32>
    %31 = arith.mulf %28, %30 : vector<8x64xf32>
    %c0_25 = arith.constant 0 : index
    %c0_26 = arith.constant 0 : index
    %32 = vector.load %arg3[%c0_25, %c0_26] : memref<1x64xf32, #tpu.memory_space<vmem>>, vector<1x64xf32>
    %33 = vector.broadcast %32 : vector<1x64xf32> to vector<8x64xf32>
    %34 = arith.addf %31, %33 : vector<8x64xf32>
    %cst_27 = arith.constant 0.000000e+00 : f32
    %35 = vector.broadcast %cst_27 : f32 to vector<8x64xf32>
    %36 = arith.maximumf %34, %35 : vector<8x64xf32>
    %c31 = arith.constant 31 : index
    %c8_28 = arith.constant 8 : index
    %37 = vector.load %arg9[%c31, %c8_28] : memref<62x80xf32, #tpu.memory_space<vmem>>, vector<8x64xf32>
    tpu.vector_store %arg9[%c31, %c8_28], %36 {strides = array<i32>} : memref<62x80xf32, #tpu.memory_space<vmem>>, vector<8x64xf32>,
    %c0_29 = arith.constant 0 : index
    %c3 = arith.constant 3 : index
    %c0_30 = arith.constant 0 : index
    %c0_31 = arith.constant 0 : index
    %38 = vector.load %arg1[%c0_29, %c3, %c0_30, %c0_31] : memref<1x4x8x64xf32, #tpu.memory_space<vmem>>, vector<1x1x8x64xf32>
    %39 = vector.shape_cast %38 : vector<1x1x8x64xf32> to vector<8x64xf32>
    %c0_32 = arith.constant 0 : index
    %c0_33 = arith.constant 0 : index
    %40 = vector.load %arg2[%c0_32, %c0_33] : memref<1x64xf32, #tpu.memory_space<vmem>>, vector<1x64xf32>
    %41 = vector.broadcast %40 : vector<1x64xf32> to vector<8x64xf32>
    %42 = arith.mulf %39, %41 : vector<8x64xf32>
    %c0_34 = arith.constant 0 : index
    %c0_35 = arith.constant 0 : index
    %43 = vector.load %arg3[%c0_34, %c0_35] : memref<1x64xf32, #tpu.memory_space<vmem>>, vector<1x64xf32>
    %44 = vector.broadcast %43 : vector<1x64xf32> to vector<8x64xf32>
    %45 = arith.addf %42, %44 : vector<8x64xf32>
    %cst_36 = arith.constant 0.000000e+00 : f32
    %46 = vector.broadcast %cst_36 : f32 to vector<8x64xf32>
    %47 = arith.maximumf %45, %46 : vector<8x64xf32>
    %c41 = arith.constant 41 : index
    %c8_37 = arith.constant 8 : index
    %48 = vector.load %arg9[%c41, %c8_37] : memref<62x80xf32, #tpu.memory_space<vmem>>, vector<8x64xf32>
    tpu.vector_store %arg9[%c41, %c8_37], %47 {strides = array<i32>} : memref<62x80xf32, #tpu.memory_space<vmem>>, vector<8x64xf32>,
    %cst_38 = arith.constant 0.000000e+00 : f32
    %49 = vector.broadcast %cst_38 : f32 to vector<40x64xf32>
    %c0_39 = arith.constant 0 : index
    %c0_40 = arith.constant 0 : index
    %50 = vector.load %arg10[%c0_39, %c0_40] : memref<40x64xf32, #tpu.memory_space<vmem>>, vector<40x64xf32>
    tpu.vector_store %arg10[%c0_39, %c0_40], %49 {strides = array<i32>} : memref<40x64xf32, #tpu.memory_space<vmem>>, vector<40x64xf32>,
    %c0_41 = arith.constant 0 : index
    %c0_42 = arith.constant 0 : index
    %51 = vector.load %arg9[%c0_41, %c0_42] : memref<62x80xf32, #tpu.memory_space<vmem>>, vector<40x80xf32>
    %c0_43 = arith.constant 0 : index
    %c0_44 = arith.constant 0 : index
    %52 = vector.load %arg10[%c0_43, %c0_44] : memref<40x64xf32, #tpu.memory_space<vmem>>, vector<40x64xf32>
    %c0_45 = arith.constant 0 : index
    %c0_46 = arith.constant 0 : index
    %c0_47 = arith.constant 0 : index
    %53 = vector.load %arg4[%c0_45, %c0_46, %c0_47] : memref<9x80x64xf32, #tpu.memory_space<vmem>>, vector<1x80x64xf32>
    %54 = vector.shape_cast %53 : vector<1x80x64xf32> to vector<80x64xf32>
    %cst_48 = arith.constant dense<0.000000e+00> : vector<40x64xf32>
    %55 = tpu.matmul %51, %54, %cst_48 {dimension_numbers = #tpu.dot_dimension_numbers<[1], [0], [0], [1], [0, 0, 1, 1], [], []>} : vector<40x80xf32>, vector<80x64xf32>, vector<40x64xf32> -> vector<40x64xf32>
    %56 = arith.addf %52, %55 : vector<40x64xf32>
    %c0_49 = arith.constant 0 : index
    %c0_50 = arith.constant 0 : index
    %57 = vector.load %arg10[%c0_49, %c0_50] : memref<40x64xf32, #tpu.memory_space<vmem>>, vector<40x64xf32>
    tpu.vector_store %arg10[%c0_49, %c0_50], %56 {strides = array<i32>} : memref<40x64xf32, #tpu.memory_space<vmem>>, vector<40x64xf32>,
    %c1_51 = arith.constant 1 : index
    %c0_52 = arith.constant 0 : index
    %58 = vector.load %arg9[%c1_51, %c0_52] : memref<62x80xf32, #tpu.memory_space<vmem>>, vector<40x80xf32>
    %c0_53 = arith.constant 0 : index
    %c0_54 = arith.constant 0 : index
    %59 = vector.load %arg10[%c0_53, %c0_54] : memref<40x64xf32, #tpu.memory_space<vmem>>, vector<40x64xf32>
    %c1_55 = arith.constant 1 : index
    %c0_56 = arith.constant 0 : index
    %c0_57 = arith.constant 0 : index
    %60 = vector.load %arg4[%c1_55, %c0_56, %c0_57] : memref<9x80x64xf32, #tpu.memory_space<vmem>>, vector<1x80x64xf32>
    %61 = vector.shape_cast %60 : vector<1x80x64xf32> to vector<80x64xf32>
    %cst_58 = arith.constant dense<0.000000e+00> : vector<40x64xf32>
    %62 = tpu.matmul %58, %61, %cst_58 {dimension_numbers = #tpu.dot_dimension_numbers<[1], [0], [0], [1], [0, 0, 1, 1], [], []>} : vector<40x80xf32>, vector<80x64xf32>, vector<40x64xf32> -> vector<40x64xf32>
    %63 = arith.addf %59, %62 : vector<40x64xf32>
    %c0_59 = arith.constant 0 : index
    %c0_60 = arith.constant 0 : index
    %64 = vector.load %arg10[%c0_59, %c0_60] : memref<40x64xf32, #tpu.memory_space<vmem>>, vector<40x64xf32>
    tpu.vector_store %arg10[%c0_59, %c0_60], %63 {strides = array<i32>} : memref<40x64xf32, #tpu.memory_space<vmem>>, vector<40x64xf32>,
    %c2_61 = arith.constant 2 : index
    %c0_62 = arith.constant 0 : index
    %65 = vector.load %arg9[%c2_61, %c0_62] : memref<62x80xf32, #tpu.memory_space<vmem>>, vector<40x80xf32>
    %c0_63 = arith.constant 0 : index
    %c0_64 = arith.constant 0 : index
    %66 = vector.load %arg10[%c0_63, %c0_64] : memref<40x64xf32, #tpu.memory_space<vmem>>, vector<40x64xf32>
    %c2_65 = arith.constant 2 : index
    %c0_66 = arith.constant 0 : index
    %c0_67 = arith.constant 0 : index
    %67 = vector.load %arg4[%c2_65, %c0_66, %c0_67] : memref<9x80x64xf32, #tpu.memory_space<vmem>>, vector<1x80x64xf32>
    %68 = vector.shape_cast %67 : vector<1x80x64xf32> to vector<80x64xf32>
    %cst_68 = arith.constant dense<0.000000e+00> : vector<40x64xf32>
    %69 = tpu.matmul %65, %68, %cst_68 {dimension_numbers = #tpu.dot_dimension_numbers<[1], [0], [0], [1], [0, 0, 1, 1], [], []>} : vector<40x80xf32>, vector<80x64xf32>, vector<40x64xf32> -> vector<40x64xf32>
    %70 = arith.addf %66, %69 : vector<40x64xf32>
    %c0_69 = arith.constant 0 : index
    %c0_70 = arith.constant 0 : index
    %71 = vector.load %arg10[%c0_69, %c0_70] : memref<40x64xf32, #tpu.memory_space<vmem>>, vector<40x64xf32>
    tpu.vector_store %arg10[%c0_69, %c0_70], %70 {strides = array<i32>} : memref<40x64xf32, #tpu.memory_space<vmem>>, vector<40x64xf32>,
    %c10 = arith.constant 10 : index
    %c0_71 = arith.constant 0 : index
    %72 = vector.load %arg9[%c10, %c0_71] : memref<62x80xf32, #tpu.memory_space<vmem>>, vector<40x80xf32>
    %c0_72 = arith.constant 0 : index
    %c0_73 = arith.constant 0 : index
    %73 = vector.load %arg10[%c0_72, %c0_73] : memref<40x64xf32, #tpu.memory_space<vmem>>, vector<40x64xf32>
    %c3_74 = arith.constant 3 : index
    %c0_75 = arith.constant 0 : index
    %c0_76 = arith.constant 0 : index
    %74 = vector.load %arg4[%c3_74, %c0_75, %c0_76] : memref<9x80x64xf32, #tpu.memory_space<vmem>>, vector<1x80x64xf32>
    %75 = vector.shape_cast %74 : vector<1x80x64xf32> to vector<80x64xf32>
    %cst_77 = arith.constant dense<0.000000e+00> : vector<40x64xf32>
    %76 = tpu.matmul %72, %75, %cst_77 {dimension_numbers = #tpu.dot_dimension_numbers<[1], [0], [0], [1], [0, 0, 1, 1], [], []>} : vector<40x80xf32>, vector<80x64xf32>, vector<40x64xf32> -> vector<40x64xf32>
    %77 = arith.addf %73, %76 : vector<40x64xf32>
    %c0_78 = arith.constant 0 : index
    %c0_79 = arith.constant 0 : index
    %78 = vector.load %arg10[%c0_78, %c0_79] : memref<40x64xf32, #tpu.memory_space<vmem>>, vector<40x64xf32>
    tpu.vector_store %arg10[%c0_78, %c0_79], %77 {strides = array<i32>} : memref<40x64xf32, #tpu.memory_space<vmem>>, vector<40x64xf32>,
    %c11_80 = arith.constant 11 : index
    %c0_81 = arith.constant 0 : index
    %79 = vector.load %arg9[%c11_80, %c0_81] : memref<62x80xf32, #tpu.memory_space<vmem>>, vector<40x80xf32>
    %c0_82 = arith.constant 0 : index
    %c0_83 = arith.constant 0 : index
    %80 = vector.load %arg10[%c0_82, %c0_83] : memref<40x64xf32, #tpu.memory_space<vmem>>, vector<40x64xf32>
    %c4 = arith.constant 4 : index
    %c0_84 = arith.constant 0 : index
    %c0_85 = arith.constant 0 : index
    %81 = vector.load %arg4[%c4, %c0_84, %c0_85] : memref<9x80x64xf32, #tpu.memory_space<vmem>>, vector<1x80x64xf32>
    %82 = vector.shape_cast %81 : vector<1x80x64xf32> to vector<80x64xf32>
    %cst_86 = arith.constant dense<0.000000e+00> : vector<40x64xf32>
    %83 = tpu.matmul %79, %82, %cst_86 {dimension_numbers = #tpu.dot_dimension_numbers<[1], [0], [0], [1], [0, 0, 1, 1], [], []>} : vector<40x80xf32>, vector<80x64xf32>, vector<40x64xf32> -> vector<40x64xf32>
    %84 = arith.addf %80, %83 : vector<40x64xf32>
    %c0_87 = arith.constant 0 : index
    %c0_88 = arith.constant 0 : index
    %85 = vector.load %arg10[%c0_87, %c0_88] : memref<40x64xf32, #tpu.memory_space<vmem>>, vector<40x64xf32>
    tpu.vector_store %arg10[%c0_87, %c0_88], %84 {strides = array<i32>} : memref<40x64xf32, #tpu.memory_space<vmem>>, vector<40x64xf32>,
    %c12 = arith.constant 12 : index
    %c0_89 = arith.constant 0 : index
    %86 = vector.load %arg9[%c12, %c0_89] : memref<62x80xf32, #tpu.memory_space<vmem>>, vector<40x80xf32>
    %c0_90 = arith.constant 0 : index
    %c0_91 = arith.constant 0 : index
    %87 = vector.load %arg10[%c0_90, %c0_91] : memref<40x64xf32, #tpu.memory_space<vmem>>, vector<40x64xf32>
    %c5 = arith.constant 5 : index
    %c0_92 = arith.constant 0 : index
    %c0_93 = arith.constant 0 : index
    %88 = vector.load %arg4[%c5, %c0_92, %c0_93] : memref<9x80x64xf32, #tpu.memory_space<vmem>>, vector<1x80x64xf32>
    %89 = vector.shape_cast %88 : vector<1x80x64xf32> to vector<80x64xf32>
    %cst_94 = arith.constant dense<0.000000e+00> : vector<40x64xf32>
    %90 = tpu.matmul %86, %89, %cst_94 {dimension_numbers = #tpu.dot_dimension_numbers<[1], [0], [0], [1], [0, 0, 1, 1], [], []>} : vector<40x80xf32>, vector<80x64xf32>, vector<40x64xf32> -> vector<40x64xf32>
    %91 = arith.addf %87, %90 : vector<40x64xf32>
    %c0_95 = arith.constant 0 : index
    %c0_96 = arith.constant 0 : index
    %92 = vector.load %arg10[%c0_95, %c0_96] : memref<40x64xf32, #tpu.memory_space<vmem>>, vector<40x64xf32>
    tpu.vector_store %arg10[%c0_95, %c0_96], %91 {strides = array<i32>} : memref<40x64xf32, #tpu.memory_space<vmem>>, vector<40x64xf32>,
    %c20 = arith.constant 20 : index
    %c0_97 = arith.constant 0 : index
    %93 = vector.load %arg9[%c20, %c0_97] : memref<62x80xf32, #tpu.memory_space<vmem>>, vector<40x80xf32>
    %c0_98 = arith.constant 0 : index
    %c0_99 = arith.constant 0 : index
    %94 = vector.load %arg10[%c0_98, %c0_99] : memref<40x64xf32, #tpu.memory_space<vmem>>, vector<40x64xf32>
    %c6 = arith.constant 6 : index
    %c0_100 = arith.constant 0 : index
    %c0_101 = arith.constant 0 : index
    %95 = vector.load %arg4[%c6, %c0_100, %c0_101] : memref<9x80x64xf32, #tpu.memory_space<vmem>>, vector<1x80x64xf32>
    %96 = vector.shape_cast %95 : vector<1x80x64xf32> to vector<80x64xf32>
    %cst_102 = arith.constant dense<0.000000e+00> : vector<40x64xf32>
    %97 = tpu.matmul %93, %96, %cst_102 {dimension_numbers = #tpu.dot_dimension_numbers<[1], [0], [0], [1], [0, 0, 1, 1], [], []>} : vector<40x80xf32>, vector<80x64xf32>, vector<40x64xf32> -> vector<40x64xf32>
    %98 = arith.addf %94, %97 : vector<40x64xf32>
    %c0_103 = arith.constant 0 : index
    %c0_104 = arith.constant 0 : index
    %99 = vector.load %arg10[%c0_103, %c0_104] : memref<40x64xf32, #tpu.memory_space<vmem>>, vector<40x64xf32>
    tpu.vector_store %arg10[%c0_103, %c0_104], %98 {strides = array<i32>} : memref<40x64xf32, #tpu.memory_space<vmem>>, vector<40x64xf32>,
    %c21_105 = arith.constant 21 : index
    %c0_106 = arith.constant 0 : index
    %100 = vector.load %arg9[%c21_105, %c0_106] : memref<62x80xf32, #tpu.memory_space<vmem>>, vector<40x80xf32>
    %c0_107 = arith.constant 0 : index
    %c0_108 = arith.constant 0 : index
    %101 = vector.load %arg10[%c0_107, %c0_108] : memref<40x64xf32, #tpu.memory_space<vmem>>, vector<40x64xf32>
    %c7 = arith.constant 7 : index
    %c0_109 = arith.constant 0 : index
    %c0_110 = arith.constant 0 : index
    %102 = vector.load %arg4[%c7, %c0_109, %c0_110] : memref<9x80x64xf32, #tpu.memory_space<vmem>>, vector<1x80x64xf32>
    %103 = vector.shape_cast %102 : vector<1x80x64xf32> to vector<80x64xf32>
    %cst_111 = arith.constant dense<0.000000e+00> : vector<40x64xf32>
    %104 = tpu.matmul %100, %103, %cst_111 {dimension_numbers = #tpu.dot_dimension_numbers<[1], [0], [0], [1], [0, 0, 1, 1], [], []>} : vector<40x80xf32>, vector<80x64xf32>, vector<40x64xf32> -> vector<40x64xf32>
    %105 = arith.addf %101, %104 : vector<40x64xf32>
    %c0_112 = arith.constant 0 : index
    %c0_113 = arith.constant 0 : index
    %106 = vector.load %arg10[%c0_112, %c0_113] : memref<40x64xf32, #tpu.memory_space<vmem>>, vector<40x64xf32>
    tpu.vector_store %arg10[%c0_112, %c0_113], %105 {strides = array<i32>} : memref<40x64xf32, #tpu.memory_space<vmem>>, vector<40x64xf32>,
    %c22 = arith.constant 22 : index
    %c0_114 = arith.constant 0 : index
    %107 = vector.load %arg9[%c22, %c0_114] : memref<62x80xf32, #tpu.memory_space<vmem>>, vector<40x80xf32>
    %c0_115 = arith.constant 0 : index
    %c0_116 = arith.constant 0 : index
    %108 = vector.load %arg10[%c0_115, %c0_116] : memref<40x64xf32, #tpu.memory_space<vmem>>, vector<40x64xf32>
    %c8_117 = arith.constant 8 : index
    %c0_118 = arith.constant 0 : index
    %c0_119 = arith.constant 0 : index
    %109 = vector.load %arg4[%c8_117, %c0_118, %c0_119] : memref<9x80x64xf32, #tpu.memory_space<vmem>>, vector<1x80x64xf32>
    %110 = vector.shape_cast %109 : vector<1x80x64xf32> to vector<80x64xf32>
    %cst_120 = arith.constant dense<0.000000e+00> : vector<40x64xf32>
    %111 = tpu.matmul %107, %110, %cst_120 {dimension_numbers = #tpu.dot_dimension_numbers<[1], [0], [0], [1], [0, 0, 1, 1], [], []>} : vector<40x80xf32>, vector<80x64xf32>, vector<40x64xf32> -> vector<40x64xf32>
    %112 = arith.addf %108, %111 : vector<40x64xf32>
    %c0_121 = arith.constant 0 : index
    %c0_122 = arith.constant 0 : index
    %113 = vector.load %arg10[%c0_121, %c0_122] : memref<40x64xf32, #tpu.memory_space<vmem>>, vector<40x64xf32>
    tpu.vector_store %arg10[%c0_121, %c0_122], %112 {strides = array<i32>} : memref<40x64xf32, #tpu.memory_space<vmem>>, vector<40x64xf32>,
    %c0_123 = arith.constant 0 : index
    %c0_124 = arith.constant 0 : index
    %114 = vector.load %arg10[%c0_123, %c0_124] : memref<40x64xf32, #tpu.memory_space<vmem>>, vector<8x64xf32>
    %c0_125 = arith.constant 0 : index
    %c0_126 = arith.constant 0 : index
    %115 = vector.load %arg5[%c0_125, %c0_126] : memref<1x64xf32, #tpu.memory_space<vmem>>, vector<1x64xf32>
    %116 = vector.broadcast %115 : vector<1x64xf32> to vector<8x64xf32>
    %117 = arith.addf %114, %116 : vector<8x64xf32>
    %c0_127 = arith.constant 0 : index
    %c0_128 = arith.constant 0 : index
    %118 = vector.load %arg7[%c0_127, %c0_128] : memref<1x64xf32, #tpu.memory_space<vmem>>, vector<1x64xf32>
    %cst_129 = arith.constant dense<0.000000e+00> : vector<64xf32>
    %119 = vector.multi_reduction <add>, %117, %cst_129 [0] : vector<8x64xf32> to vector<64xf32>
    %120 = vector.shape_cast %119 : vector<64xf32> to vector<1x64xf32>
    %121 = arith.addf %118, %120 : vector<1x64xf32>
    %c0_130 = arith.constant 0 : index
    %c0_131 = arith.constant 0 : index
    %122 = vector.load %arg7[%c0_130, %c0_131] : memref<1x64xf32, #tpu.memory_space<vmem>>, vector<1x64xf32>
    tpu.vector_store %arg7[%c0_130, %c0_131], %121 {strides = array<i32>} : memref<1x64xf32, #tpu.memory_space<vmem>>, vector<1x64xf32>,
    %c0_132 = arith.constant 0 : index
    %c0_133 = arith.constant 0 : index
    %123 = vector.load %arg8[%c0_132, %c0_133] : memref<1x64xf32, #tpu.memory_space<vmem>>, vector<1x64xf32>
    %124 = arith.mulf %117, %117 : vector<8x64xf32>
    %cst_134 = arith.constant dense<0.000000e+00> : vector<64xf32>
    %125 = vector.multi_reduction <add>, %124, %cst_134 [0] : vector<8x64xf32> to vector<64xf32>
    %126 = vector.shape_cast %125 : vector<64xf32> to vector<1x64xf32>
    %127 = arith.addf %123, %126 : vector<1x64xf32>
    %c0_135 = arith.constant 0 : index
    %c0_136 = arith.constant 0 : index
    %128 = vector.load %arg8[%c0_135, %c0_136] : memref<1x64xf32, #tpu.memory_space<vmem>>, vector<1x64xf32>
    tpu.vector_store %arg8[%c0_135, %c0_136], %127 {strides = array<i32>} : memref<1x64xf32, #tpu.memory_space<vmem>>, vector<1x64xf32>,
    %c0_137 = arith.constant 0 : index
    %c0_138 = arith.constant 0 : index
    %c0_139 = arith.constant 0 : index
    %c0_140 = arith.constant 0 : index
    %129 = vector.load %arg6[%c0_137, %c0_138, %c0_139, %c0_140] : memref<1x4x8x64xf32, #tpu.memory_space<vmem>>, vector<1x1x8x64xf32>
    %130 = vector.shape_cast %129 : vector<1x1x8x64xf32> to vector<8x64xf32>
    %131 = vector.shape_cast %117 : vector<8x64xf32> to vector<1x1x8x64xf32>
    tpu.vector_store %arg6[%c0_137, %c0_138, %c0_139, %c0_140], %131 {strides = array<i32>} : memref<1x4x8x64xf32, #tpu.memory_space<vmem>>, vector<1x1x8x64xf32>,
    %c10_141 = arith.constant 10 : index
    %c0_142 = arith.constant 0 : index
    %132 = vector.load %arg10[%c10_141, %c0_142] : memref<40x64xf32, #tpu.memory_space<vmem>>, vector<8x64xf32>
    %c0_143 = arith.constant 0 : index
    %c0_144 = arith.constant 0 : index
    %133 = vector.load %arg5[%c0_143, %c0_144] : memref<1x64xf32, #tpu.memory_space<vmem>>, vector<1x64xf32>
    %134 = vector.broadcast %133 : vector<1x64xf32> to vector<8x64xf32>
    %135 = arith.addf %132, %134 : vector<8x64xf32>
    %c0_145 = arith.constant 0 : index
    %c0_146 = arith.constant 0 : index
    %136 = vector.load %arg7[%c0_145, %c0_146] : memref<1x64xf32, #tpu.memory_space<vmem>>, vector<1x64xf32>
    %cst_147 = arith.constant dense<0.000000e+00> : vector<64xf32>
    %137 = vector.multi_reduction <add>, %135, %cst_147 [0] : vector<8x64xf32> to vector<64xf32>
    %138 = vector.shape_cast %137 : vector<64xf32> to vector<1x64xf32>
    %139 = arith.addf %136, %138 : vector<1x64xf32>
    %c0_148 = arith.constant 0 : index
    %c0_149 = arith.constant 0 : index
    %140 = vector.load %arg7[%c0_148, %c0_149] : memref<1x64xf32, #tpu.memory_space<vmem>>, vector<1x64xf32>
    tpu.vector_store %arg7[%c0_148, %c0_149], %139 {strides = array<i32>} : memref<1x64xf32, #tpu.memory_space<vmem>>, vector<1x64xf32>,
    %c0_150 = arith.constant 0 : index
    %c0_151 = arith.constant 0 : index
    %141 = vector.load %arg8[%c0_150, %c0_151] : memref<1x64xf32, #tpu.memory_space<vmem>>, vector<1x64xf32>
    %142 = arith.mulf %135, %135 : vector<8x64xf32>
    %cst_152 = arith.constant dense<0.000000e+00> : vector<64xf32>
    %143 = vector.multi_reduction <add>, %142, %cst_152 [0] : vector<8x64xf32> to vector<64xf32>
    %144 = vector.shape_cast %143 : vector<64xf32> to vector<1x64xf32>
    %145 = arith.addf %141, %144 : vector<1x64xf32>
    %c0_153 = arith.constant 0 : index
    %c0_154 = arith.constant 0 : index
    %146 = vector.load %arg8[%c0_153, %c0_154] : memref<1x64xf32, #tpu.memory_space<vmem>>, vector<1x64xf32>
    tpu.vector_store %arg8[%c0_153, %c0_154], %145 {strides = array<i32>} : memref<1x64xf32, #tpu.memory_space<vmem>>, vector<1x64xf32>,
    %c0_155 = arith.constant 0 : index
    %c1_156 = arith.constant 1 : index
    %c0_157 = arith.constant 0 : index
    %c0_158 = arith.constant 0 : index
    %147 = vector.load %arg6[%c0_155, %c1_156, %c0_157, %c0_158] : memref<1x4x8x64xf32, #tpu.memory_space<vmem>>, vector<1x1x8x64xf32>
    %148 = vector.shape_cast %147 : vector<1x1x8x64xf32> to vector<8x64xf32>
    %149 = vector.shape_cast %135 : vector<8x64xf32> to vector<1x1x8x64xf32>
    tpu.vector_store %arg6[%c0_155, %c1_156, %c0_157, %c0_158], %149 {strides = array<i32>} : memref<1x4x8x64xf32, #tpu.memory_space<vmem>>, vector<1x1x8x64xf32>,
    %c20_159 = arith.constant 20 : index
    %c0_160 = arith.constant 0 : index
    %150 = vector.load %arg10[%c20_159, %c0_160] : memref<40x64xf32, #tpu.memory_space<vmem>>, vector<8x64xf32>
    %c0_161 = arith.constant 0 : index
    %c0_162 = arith.constant 0 : index
    %151 = vector.load %arg5[%c0_161, %c0_162] : memref<1x64xf32, #tpu.memory_space<vmem>>, vector<1x64xf32>
    %152 = vector.broadcast %151 : vector<1x64xf32> to vector<8x64xf32>
    %153 = arith.addf %150, %152 : vector<8x64xf32>
    %c0_163 = arith.constant 0 : index
    %c0_164 = arith.constant 0 : index
    %154 = vector.load %arg7[%c0_163, %c0_164] : memref<1x64xf32, #tpu.memory_space<vmem>>, vector<1x64xf32>
    %cst_165 = arith.constant dense<0.000000e+00> : vector<64xf32>
    %155 = vector.multi_reduction <add>, %153, %cst_165 [0] : vector<8x64xf32> to vector<64xf32>
    %156 = vector.shape_cast %155 : vector<64xf32> to vector<1x64xf32>
    %157 = arith.addf %154, %156 : vector<1x64xf32>
    %c0_166 = arith.constant 0 : index
    %c0_167 = arith.constant 0 : index
    %158 = vector.load %arg7[%c0_166, %c0_167] : memref<1x64xf32, #tpu.memory_space<vmem>>, vector<1x64xf32>
    tpu.vector_store %arg7[%c0_166, %c0_167], %157 {strides = array<i32>} : memref<1x64xf32, #tpu.memory_space<vmem>>, vector<1x64xf32>,
    %c0_168 = arith.constant 0 : index
    %c0_169 = arith.constant 0 : index
    %159 = vector.load %arg8[%c0_168, %c0_169] : memref<1x64xf32, #tpu.memory_space<vmem>>, vector<1x64xf32>
    %160 = arith.mulf %153, %153 : vector<8x64xf32>
    %cst_170 = arith.constant dense<0.000000e+00> : vector<64xf32>
    %161 = vector.multi_reduction <add>, %160, %cst_170 [0] : vector<8x64xf32> to vector<64xf32>
    %162 = vector.shape_cast %161 : vector<64xf32> to vector<1x64xf32>
    %163 = arith.addf %159, %162 : vector<1x64xf32>
    %c0_171 = arith.constant 0 : index
    %c0_172 = arith.constant 0 : index
    %164 = vector.load %arg8[%c0_171, %c0_172] : memref<1x64xf32, #tpu.memory_space<vmem>>, vector<1x64xf32>
    tpu.vector_store %arg8[%c0_171, %c0_172], %163 {strides = array<i32>} : memref<1x64xf32, #tpu.memory_space<vmem>>, vector<1x64xf32>,
    %c0_173 = arith.constant 0 : index
    %c2_174 = arith.constant 2 : index
    %c0_175 = arith.constant 0 : index
    %c0_176 = arith.constant 0 : index
    %165 = vector.load %arg6[%c0_173, %c2_174, %c0_175, %c0_176] : memref<1x4x8x64xf32, #tpu.memory_space<vmem>>, vector<1x1x8x64xf32>
    %166 = vector.shape_cast %165 : vector<1x1x8x64xf32> to vector<8x64xf32>
    %167 = vector.shape_cast %153 : vector<8x64xf32> to vector<1x1x8x64xf32>
    tpu.vector_store %arg6[%c0_173, %c2_174, %c0_175, %c0_176], %167 {strides = array<i32>} : memref<1x4x8x64xf32, #tpu.memory_space<vmem>>, vector<1x1x8x64xf32>,
    %c30 = arith.constant 30 : index
    %c0_177 = arith.constant 0 : index
    %168 = vector.load %arg10[%c30, %c0_177] : memref<40x64xf32, #tpu.memory_space<vmem>>, vector<8x64xf32>
    %c0_178 = arith.constant 0 : index
    %c0_179 = arith.constant 0 : index
    %169 = vector.load %arg5[%c0_178, %c0_179] : memref<1x64xf32, #tpu.memory_space<vmem>>, vector<1x64xf32>
    %170 = vector.broadcast %169 : vector<1x64xf32> to vector<8x64xf32>
    %171 = arith.addf %168, %170 : vector<8x64xf32>
    %c0_180 = arith.constant 0 : index
    %c0_181 = arith.constant 0 : index
    %172 = vector.load %arg7[%c0_180, %c0_181] : memref<1x64xf32, #tpu.memory_space<vmem>>, vector<1x64xf32>
    %cst_182 = arith.constant dense<0.000000e+00> : vector<64xf32>
    %173 = vector.multi_reduction <add>, %171, %cst_182 [0] : vector<8x64xf32> to vector<64xf32>
    %174 = vector.shape_cast %173 : vector<64xf32> to vector<1x64xf32>
    %175 = arith.addf %172, %174 : vector<1x64xf32>
    %c0_183 = arith.constant 0 : index
    %c0_184 = arith.constant 0 : index
    %176 = vector.load %arg7[%c0_183, %c0_184] : memref<1x64xf32, #tpu.memory_space<vmem>>, vector<1x64xf32>
    tpu.vector_store %arg7[%c0_183, %c0_184], %175 {strides = array<i32>} : memref<1x64xf32, #tpu.memory_space<vmem>>, vector<1x64xf32>,
    %c0_185 = arith.constant 0 : index
    %c0_186 = arith.constant 0 : index
    %177 = vector.load %arg8[%c0_185, %c0_186] : memref<1x64xf32, #tpu.memory_space<vmem>>, vector<1x64xf32>
    %178 = arith.mulf %171, %171 : vector<8x64xf32>
    %cst_187 = arith.constant dense<0.000000e+00> : vector<64xf32>
    %179 = vector.multi_reduction <add>, %178, %cst_187 [0] : vector<8x64xf32> to vector<64xf32>
    %180 = vector.shape_cast %179 : vector<64xf32> to vector<1x64xf32>
    %181 = arith.addf %177, %180 : vector<1x64xf32>
    %c0_188 = arith.constant 0 : index
    %c0_189 = arith.constant 0 : index
    %182 = vector.load %arg8[%c0_188, %c0_189] : memref<1x64xf32, #tpu.memory_space<vmem>>, vector<1x64xf32>
    tpu.vector_store %arg8[%c0_188, %c0_189], %181 {strides = array<i32>} : memref<1x64xf32, #tpu.memory_space<vmem>>, vector<1x64xf32>,
    %c0_190 = arith.constant 0 : index
    %c3_191 = arith.constant 3 : index
    %c0_192 = arith.constant 0 : index
    %c0_193 = arith.constant 0 : index
    %183 = vector.load %arg6[%c0_190, %c3_191, %c0_192, %c0_193] : memref<1x4x8x64xf32, #tpu.memory_space<vmem>>, vector<1x1x8x64xf32>
    %184 = vector.shape_cast %183 : vector<1x1x8x64xf32> to vector<8x64xf32>
    %185 = vector.shape_cast %171 : vector<8x64xf32> to vector<1x1x8x64xf32>
    tpu.vector_store %arg6[%c0_190, %c3_191, %c0_192, %c0_193], %185 {strides = array<i32>} : memref<1x4x8x64xf32, #tpu.memory_space<vmem>>, vector<1x1x8x64xf32>,
    return
  }
  func.func @transform_0(%arg0: i32) -> (i32, i32, i32, i32) {
    %c0_i32 = arith.constant 0 : i32
    %c0_i32_0 = arith.constant 0 : i32
    %c0_i32_1 = arith.constant 0 : i32
    %c0_i32_2 = arith.constant 0 : i32
    return %arg0, %c0_i32, %c0_i32_0, %c0_i32_1 : i32, i32, i32, i32
  }
  func.func @transform_1(%arg0: i32) -> (i32, i32) {
    %c0_i32 = arith.constant 0 : i32
    %c0_i32_0 = arith.constant 0 : i32
    %c0_i32_1 = arith.constant 0 : i32
    return %c0_i32, %c0_i32_0 : i32, i32
  }
  func.func @transform_2(%arg0: i32) -> (i32, i32) {
    %c0_i32 = arith.constant 0 : i32
    %c0_i32_0 = arith.constant 0 : i32
    %c0_i32_1 = arith.constant 0 : i32
    return %c0_i32, %c0_i32_0 : i32, i32
  }
  func.func @transform_3(%arg0: i32) -> (i32, i32, i32) {
    %c0_i32 = arith.constant 0 : i32
    %c0_i32_0 = arith.constant 0 : i32
    %c0_i32_1 = arith.constant 0 : i32
    %c0_i32_2 = arith.constant 0 : i32
    return %c0_i32, %c0_i32_0, %c0_i32_1 : i32, i32, i32
  }
  func.func @transform_4(%arg0: i32) -> (i32, i32) {
    %c0_i32 = arith.constant 0 : i32
    %c0_i32_0 = arith.constant 0 : i32
    %c0_i32_1 = arith.constant 0 : i32
    return %c0_i32, %c0_i32_0 : i32, i32
  }
  func.func @transform_5(%arg0: i32) -> (i32, i32, i32, i32) {
    %c0_i32 = arith.constant 0 : i32
    %c0_i32_0 = arith.constant 0 : i32
    %c0_i32_1 = arith.constant 0 : i32
    %c0_i32_2 = arith.constant 0 : i32
    return %arg0, %c0_i32, %c0_i32_0, %c0_i32_1 : i32, i32, i32, i32
  }
  func.func @transform_6(%arg0: i32) -> (i32, i32) {
    %c0_i32 = arith.constant 0 : i32
    %c0_i32_0 = arith.constant 0 : i32
    %c0_i32_1 = arith.constant 0 : i32
    return %c0_i32, %c0_i32_0 : i32, i32
  }
  func.func @transform_7(%arg0: i32) -> (i32, i32) {
    %c0_i32 = arith.constant 0 : i32
    %c0_i32_0 = arith.constant 0 : i32
    %c0_i32_1 = arith.constant 0 : i32
    return %c0_i32, %c0_i32_0 : i32, i32
  }
}

module attributes {stable_mosaic.version = 11 : i64} {
  func.func @_fused_bn_relu_conv_kernel(%arg0: i32, %arg1: memref<1x4x8x64xf32, #tpu.memory_space<vmem>>, %arg2: memref<1x64xf32, #tpu.memory_space<vmem>>, %arg3: memref<1x64xf32, #tpu.memory_space<vmem>>, %arg4: memref<9x80x64xf32, #tpu.memory_space<vmem>>, %arg5: memref<1x64xf32, #tpu.memory_space<vmem>>, %arg6: memref<1x4x8x64xf32, #tpu.memory_space<vmem>>, %arg7: memref<1x4x8x64xf32, #tpu.memory_space<vmem>>, %arg8: memref<62x80xf32, #tpu.memory_space<vmem>>, %arg9: memref<40x64xf32, #tpu.memory_space<vmem>>) attributes {dimension_semantics = [#tpu.dimension_semantics<parallel>], iteration_bounds = array<i64: 2>, scalar_prefetch = 0 : i64, scratch_operands = 2 : i64, tpu.core_type = #tpu.core_type<tc>, window_params = [{transform_indices = @transform_0, window_bounds = array<i64: 1, 4, 8, 64>}, {pipeline_mode = #tpu.pipeline_mode<synchronous>, transform_indices = @transform_1, window_bounds = array<i64: 1, 64>}, {pipeline_mode = #tpu.pipeline_mode<synchronous>, transform_indices = @transform_2, window_bounds = array<i64: 1, 64>}, {pipeline_mode = #tpu.pipeline_mode<synchronous>, transform_indices = @transform_3, window_bounds = array<i64: 9, 80, 64>}, {pipeline_mode = #tpu.pipeline_mode<synchronous>, transform_indices = @transform_4, window_bounds = array<i64: 1, 64>}, {transform_indices = @transform_5, window_bounds = array<i64: 1, 4, 8, 64>}, {transform_indices = @transform_6, window_bounds = array<i64: 1, 4, 8, 64>}]} {
    %cst = arith.constant 0.000000e+00 : f32
    %0 = vector.broadcast %cst : f32 to vector<62x80xf32>
    %c0 = arith.constant 0 : index
    %c0_0 = arith.constant 0 : index
    %1 = vector.load %arg8[%c0, %c0_0] : memref<62x80xf32, #tpu.memory_space<vmem>>, vector<62x80xf32>
    tpu.vector_store %arg8[%c0, %c0_0], %0 {strides = array<i32>} : memref<62x80xf32, #tpu.memory_space<vmem>>, vector<62x80xf32>,
    %c0_1 = arith.constant 0 : index
    %c0_2 = arith.constant 0 : index
    %c0_3 = arith.constant 0 : index
    %c0_4 = arith.constant 0 : index
    %2 = vector.load %arg1[%c0_1, %c0_2, %c0_3, %c0_4] : memref<1x4x8x64xf32, #tpu.memory_space<vmem>>, vector<1x1x8x64xf32>
    %3 = vector.shape_cast %2 : vector<1x1x8x64xf32> to vector<8x64xf32>
    %c0_5 = arith.constant 0 : index
    %c0_6 = arith.constant 0 : index
    %4 = vector.load %arg2[%c0_5, %c0_6] : memref<1x64xf32, #tpu.memory_space<vmem>>, vector<1x64xf32>
    %5 = vector.broadcast %4 : vector<1x64xf32> to vector<8x64xf32>
    %6 = arith.mulf %3, %5 : vector<8x64xf32>
    %c0_7 = arith.constant 0 : index
    %c0_8 = arith.constant 0 : index
    %7 = vector.load %arg3[%c0_7, %c0_8] : memref<1x64xf32, #tpu.memory_space<vmem>>, vector<1x64xf32>
    %8 = vector.broadcast %7 : vector<1x64xf32> to vector<8x64xf32>
    %9 = arith.addf %6, %8 : vector<8x64xf32>
    %cst_9 = arith.constant 0.000000e+00 : f32
    %10 = vector.broadcast %cst_9 : f32 to vector<8x64xf32>
    %11 = arith.maximumf %9, %10 : vector<8x64xf32>
    %c11 = arith.constant 11 : index
    %c8 = arith.constant 8 : index
    %12 = vector.load %arg8[%c11, %c8] : memref<62x80xf32, #tpu.memory_space<vmem>>, vector<8x64xf32>
    tpu.vector_store %arg8[%c11, %c8], %11 {strides = array<i32>} : memref<62x80xf32, #tpu.memory_space<vmem>>, vector<8x64xf32>,
    %c0_10 = arith.constant 0 : index
    %c1 = arith.constant 1 : index
    %c0_11 = arith.constant 0 : index
    %c0_12 = arith.constant 0 : index
    %13 = vector.load %arg1[%c0_10, %c1, %c0_11, %c0_12] : memref<1x4x8x64xf32, #tpu.memory_space<vmem>>, vector<1x1x8x64xf32>
    %14 = vector.shape_cast %13 : vector<1x1x8x64xf32> to vector<8x64xf32>
    %c0_13 = arith.constant 0 : index
    %c0_14 = arith.constant 0 : index
    %15 = vector.load %arg2[%c0_13, %c0_14] : memref<1x64xf32, #tpu.memory_space<vmem>>, vector<1x64xf32>
    %16 = vector.broadcast %15 : vector<1x64xf32> to vector<8x64xf32>
    %17 = arith.mulf %14, %16 : vector<8x64xf32>
    %c0_15 = arith.constant 0 : index
    %c0_16 = arith.constant 0 : index
    %18 = vector.load %arg3[%c0_15, %c0_16] : memref<1x64xf32, #tpu.memory_space<vmem>>, vector<1x64xf32>
    %19 = vector.broadcast %18 : vector<1x64xf32> to vector<8x64xf32>
    %20 = arith.addf %17, %19 : vector<8x64xf32>
    %cst_17 = arith.constant 0.000000e+00 : f32
    %21 = vector.broadcast %cst_17 : f32 to vector<8x64xf32>
    %22 = arith.maximumf %20, %21 : vector<8x64xf32>
    %c21 = arith.constant 21 : index
    %c8_18 = arith.constant 8 : index
    %23 = vector.load %arg8[%c21, %c8_18] : memref<62x80xf32, #tpu.memory_space<vmem>>, vector<8x64xf32>
    tpu.vector_store %arg8[%c21, %c8_18], %22 {strides = array<i32>} : memref<62x80xf32, #tpu.memory_space<vmem>>, vector<8x64xf32>,
    %c0_19 = arith.constant 0 : index
    %c2 = arith.constant 2 : index
    %c0_20 = arith.constant 0 : index
    %c0_21 = arith.constant 0 : index
    %24 = vector.load %arg1[%c0_19, %c2, %c0_20, %c0_21] : memref<1x4x8x64xf32, #tpu.memory_space<vmem>>, vector<1x1x8x64xf32>
    %25 = vector.shape_cast %24 : vector<1x1x8x64xf32> to vector<8x64xf32>
    %c0_22 = arith.constant 0 : index
    %c0_23 = arith.constant 0 : index
    %26 = vector.load %arg2[%c0_22, %c0_23] : memref<1x64xf32, #tpu.memory_space<vmem>>, vector<1x64xf32>
    %27 = vector.broadcast %26 : vector<1x64xf32> to vector<8x64xf32>
    %28 = arith.mulf %25, %27 : vector<8x64xf32>
    %c0_24 = arith.constant 0 : index
    %c0_25 = arith.constant 0 : index
    %29 = vector.load %arg3[%c0_24, %c0_25] : memref<1x64xf32, #tpu.memory_space<vmem>>, vector<1x64xf32>
    %30 = vector.broadcast %29 : vector<1x64xf32> to vector<8x64xf32>
    %31 = arith.addf %28, %30 : vector<8x64xf32>
    %cst_26 = arith.constant 0.000000e+00 : f32
    %32 = vector.broadcast %cst_26 : f32 to vector<8x64xf32>
    %33 = arith.maximumf %31, %32 : vector<8x64xf32>
    %c31 = arith.constant 31 : index
    %c8_27 = arith.constant 8 : index
    %34 = vector.load %arg8[%c31, %c8_27] : memref<62x80xf32, #tpu.memory_space<vmem>>, vector<8x64xf32>
    tpu.vector_store %arg8[%c31, %c8_27], %33 {strides = array<i32>} : memref<62x80xf32, #tpu.memory_space<vmem>>, vector<8x64xf32>,
    %c0_28 = arith.constant 0 : index
    %c3 = arith.constant 3 : index
    %c0_29 = arith.constant 0 : index
    %c0_30 = arith.constant 0 : index
    %35 = vector.load %arg1[%c0_28, %c3, %c0_29, %c0_30] : memref<1x4x8x64xf32, #tpu.memory_space<vmem>>, vector<1x1x8x64xf32>
    %36 = vector.shape_cast %35 : vector<1x1x8x64xf32> to vector<8x64xf32>
    %c0_31 = arith.constant 0 : index
    %c0_32 = arith.constant 0 : index
    %37 = vector.load %arg2[%c0_31, %c0_32] : memref<1x64xf32, #tpu.memory_space<vmem>>, vector<1x64xf32>
    %38 = vector.broadcast %37 : vector<1x64xf32> to vector<8x64xf32>
    %39 = arith.mulf %36, %38 : vector<8x64xf32>
    %c0_33 = arith.constant 0 : index
    %c0_34 = arith.constant 0 : index
    %40 = vector.load %arg3[%c0_33, %c0_34] : memref<1x64xf32, #tpu.memory_space<vmem>>, vector<1x64xf32>
    %41 = vector.broadcast %40 : vector<1x64xf32> to vector<8x64xf32>
    %42 = arith.addf %39, %41 : vector<8x64xf32>
    %cst_35 = arith.constant 0.000000e+00 : f32
    %43 = vector.broadcast %cst_35 : f32 to vector<8x64xf32>
    %44 = arith.maximumf %42, %43 : vector<8x64xf32>
    %c41 = arith.constant 41 : index
    %c8_36 = arith.constant 8 : index
    %45 = vector.load %arg8[%c41, %c8_36] : memref<62x80xf32, #tpu.memory_space<vmem>>, vector<8x64xf32>
    tpu.vector_store %arg8[%c41, %c8_36], %44 {strides = array<i32>} : memref<62x80xf32, #tpu.memory_space<vmem>>, vector<8x64xf32>,
    %cst_37 = arith.constant 0.000000e+00 : f32
    %46 = vector.broadcast %cst_37 : f32 to vector<40x64xf32>
    %c0_38 = arith.constant 0 : index
    %c0_39 = arith.constant 0 : index
    %47 = vector.load %arg9[%c0_38, %c0_39] : memref<40x64xf32, #tpu.memory_space<vmem>>, vector<40x64xf32>
    tpu.vector_store %arg9[%c0_38, %c0_39], %46 {strides = array<i32>} : memref<40x64xf32, #tpu.memory_space<vmem>>, vector<40x64xf32>,
    %c0_40 = arith.constant 0 : index
    %c0_41 = arith.constant 0 : index
    %48 = vector.load %arg8[%c0_40, %c0_41] : memref<62x80xf32, #tpu.memory_space<vmem>>, vector<40x80xf32>
    %c0_42 = arith.constant 0 : index
    %c0_43 = arith.constant 0 : index
    %49 = vector.load %arg9[%c0_42, %c0_43] : memref<40x64xf32, #tpu.memory_space<vmem>>, vector<40x64xf32>
    %c0_44 = arith.constant 0 : index
    %c0_45 = arith.constant 0 : index
    %c0_46 = arith.constant 0 : index
    %50 = vector.load %arg4[%c0_44, %c0_45, %c0_46] : memref<9x80x64xf32, #tpu.memory_space<vmem>>, vector<1x80x64xf32>
    %51 = vector.shape_cast %50 : vector<1x80x64xf32> to vector<80x64xf32>
    %cst_47 = arith.constant dense<0.000000e+00> : vector<40x64xf32>
    %52 = tpu.matmul %48, %51, %cst_47 {dimension_numbers = #tpu.dot_dimension_numbers<[1], [0], [0], [1], [0, 0, 1, 1], [], []>} : vector<40x80xf32>, vector<80x64xf32>, vector<40x64xf32> -> vector<40x64xf32>
    %53 = arith.addf %49, %52 : vector<40x64xf32>
    %c0_48 = arith.constant 0 : index
    %c0_49 = arith.constant 0 : index
    %54 = vector.load %arg9[%c0_48, %c0_49] : memref<40x64xf32, #tpu.memory_space<vmem>>, vector<40x64xf32>
    tpu.vector_store %arg9[%c0_48, %c0_49], %53 {strides = array<i32>} : memref<40x64xf32, #tpu.memory_space<vmem>>, vector<40x64xf32>,
    %c1_50 = arith.constant 1 : index
    %c0_51 = arith.constant 0 : index
    %55 = vector.load %arg8[%c1_50, %c0_51] : memref<62x80xf32, #tpu.memory_space<vmem>>, vector<40x80xf32>
    %c0_52 = arith.constant 0 : index
    %c0_53 = arith.constant 0 : index
    %56 = vector.load %arg9[%c0_52, %c0_53] : memref<40x64xf32, #tpu.memory_space<vmem>>, vector<40x64xf32>
    %c1_54 = arith.constant 1 : index
    %c0_55 = arith.constant 0 : index
    %c0_56 = arith.constant 0 : index
    %57 = vector.load %arg4[%c1_54, %c0_55, %c0_56] : memref<9x80x64xf32, #tpu.memory_space<vmem>>, vector<1x80x64xf32>
    %58 = vector.shape_cast %57 : vector<1x80x64xf32> to vector<80x64xf32>
    %cst_57 = arith.constant dense<0.000000e+00> : vector<40x64xf32>
    %59 = tpu.matmul %55, %58, %cst_57 {dimension_numbers = #tpu.dot_dimension_numbers<[1], [0], [0], [1], [0, 0, 1, 1], [], []>} : vector<40x80xf32>, vector<80x64xf32>, vector<40x64xf32> -> vector<40x64xf32>
    %60 = arith.addf %56, %59 : vector<40x64xf32>
    %c0_58 = arith.constant 0 : index
    %c0_59 = arith.constant 0 : index
    %61 = vector.load %arg9[%c0_58, %c0_59] : memref<40x64xf32, #tpu.memory_space<vmem>>, vector<40x64xf32>
    tpu.vector_store %arg9[%c0_58, %c0_59], %60 {strides = array<i32>} : memref<40x64xf32, #tpu.memory_space<vmem>>, vector<40x64xf32>,
    %c2_60 = arith.constant 2 : index
    %c0_61 = arith.constant 0 : index
    %62 = vector.load %arg8[%c2_60, %c0_61] : memref<62x80xf32, #tpu.memory_space<vmem>>, vector<40x80xf32>
    %c0_62 = arith.constant 0 : index
    %c0_63 = arith.constant 0 : index
    %63 = vector.load %arg9[%c0_62, %c0_63] : memref<40x64xf32, #tpu.memory_space<vmem>>, vector<40x64xf32>
    %c2_64 = arith.constant 2 : index
    %c0_65 = arith.constant 0 : index
    %c0_66 = arith.constant 0 : index
    %64 = vector.load %arg4[%c2_64, %c0_65, %c0_66] : memref<9x80x64xf32, #tpu.memory_space<vmem>>, vector<1x80x64xf32>
    %65 = vector.shape_cast %64 : vector<1x80x64xf32> to vector<80x64xf32>
    %cst_67 = arith.constant dense<0.000000e+00> : vector<40x64xf32>
    %66 = tpu.matmul %62, %65, %cst_67 {dimension_numbers = #tpu.dot_dimension_numbers<[1], [0], [0], [1], [0, 0, 1, 1], [], []>} : vector<40x80xf32>, vector<80x64xf32>, vector<40x64xf32> -> vector<40x64xf32>
    %67 = arith.addf %63, %66 : vector<40x64xf32>
    %c0_68 = arith.constant 0 : index
    %c0_69 = arith.constant 0 : index
    %68 = vector.load %arg9[%c0_68, %c0_69] : memref<40x64xf32, #tpu.memory_space<vmem>>, vector<40x64xf32>
    tpu.vector_store %arg9[%c0_68, %c0_69], %67 {strides = array<i32>} : memref<40x64xf32, #tpu.memory_space<vmem>>, vector<40x64xf32>,
    %c10 = arith.constant 10 : index
    %c0_70 = arith.constant 0 : index
    %69 = vector.load %arg8[%c10, %c0_70] : memref<62x80xf32, #tpu.memory_space<vmem>>, vector<40x80xf32>
    %c0_71 = arith.constant 0 : index
    %c0_72 = arith.constant 0 : index
    %70 = vector.load %arg9[%c0_71, %c0_72] : memref<40x64xf32, #tpu.memory_space<vmem>>, vector<40x64xf32>
    %c3_73 = arith.constant 3 : index
    %c0_74 = arith.constant 0 : index
    %c0_75 = arith.constant 0 : index
    %71 = vector.load %arg4[%c3_73, %c0_74, %c0_75] : memref<9x80x64xf32, #tpu.memory_space<vmem>>, vector<1x80x64xf32>
    %72 = vector.shape_cast %71 : vector<1x80x64xf32> to vector<80x64xf32>
    %cst_76 = arith.constant dense<0.000000e+00> : vector<40x64xf32>
    %73 = tpu.matmul %69, %72, %cst_76 {dimension_numbers = #tpu.dot_dimension_numbers<[1], [0], [0], [1], [0, 0, 1, 1], [], []>} : vector<40x80xf32>, vector<80x64xf32>, vector<40x64xf32> -> vector<40x64xf32>
    %74 = arith.addf %70, %73 : vector<40x64xf32>
    %c0_77 = arith.constant 0 : index
    %c0_78 = arith.constant 0 : index
    %75 = vector.load %arg9[%c0_77, %c0_78] : memref<40x64xf32, #tpu.memory_space<vmem>>, vector<40x64xf32>
    tpu.vector_store %arg9[%c0_77, %c0_78], %74 {strides = array<i32>} : memref<40x64xf32, #tpu.memory_space<vmem>>, vector<40x64xf32>,
    %c11_79 = arith.constant 11 : index
    %c0_80 = arith.constant 0 : index
    %76 = vector.load %arg8[%c11_79, %c0_80] : memref<62x80xf32, #tpu.memory_space<vmem>>, vector<40x80xf32>
    %c0_81 = arith.constant 0 : index
    %c0_82 = arith.constant 0 : index
    %77 = vector.load %arg9[%c0_81, %c0_82] : memref<40x64xf32, #tpu.memory_space<vmem>>, vector<40x64xf32>
    %c4 = arith.constant 4 : index
    %c0_83 = arith.constant 0 : index
    %c0_84 = arith.constant 0 : index
    %78 = vector.load %arg4[%c4, %c0_83, %c0_84] : memref<9x80x64xf32, #tpu.memory_space<vmem>>, vector<1x80x64xf32>
    %79 = vector.shape_cast %78 : vector<1x80x64xf32> to vector<80x64xf32>
    %cst_85 = arith.constant dense<0.000000e+00> : vector<40x64xf32>
    %80 = tpu.matmul %76, %79, %cst_85 {dimension_numbers = #tpu.dot_dimension_numbers<[1], [0], [0], [1], [0, 0, 1, 1], [], []>} : vector<40x80xf32>, vector<80x64xf32>, vector<40x64xf32> -> vector<40x64xf32>
    %81 = arith.addf %77, %80 : vector<40x64xf32>
    %c0_86 = arith.constant 0 : index
    %c0_87 = arith.constant 0 : index
    %82 = vector.load %arg9[%c0_86, %c0_87] : memref<40x64xf32, #tpu.memory_space<vmem>>, vector<40x64xf32>
    tpu.vector_store %arg9[%c0_86, %c0_87], %81 {strides = array<i32>} : memref<40x64xf32, #tpu.memory_space<vmem>>, vector<40x64xf32>,
    %c12 = arith.constant 12 : index
    %c0_88 = arith.constant 0 : index
    %83 = vector.load %arg8[%c12, %c0_88] : memref<62x80xf32, #tpu.memory_space<vmem>>, vector<40x80xf32>
    %c0_89 = arith.constant 0 : index
    %c0_90 = arith.constant 0 : index
    %84 = vector.load %arg9[%c0_89, %c0_90] : memref<40x64xf32, #tpu.memory_space<vmem>>, vector<40x64xf32>
    %c5 = arith.constant 5 : index
    %c0_91 = arith.constant 0 : index
    %c0_92 = arith.constant 0 : index
    %85 = vector.load %arg4[%c5, %c0_91, %c0_92] : memref<9x80x64xf32, #tpu.memory_space<vmem>>, vector<1x80x64xf32>
    %86 = vector.shape_cast %85 : vector<1x80x64xf32> to vector<80x64xf32>
    %cst_93 = arith.constant dense<0.000000e+00> : vector<40x64xf32>
    %87 = tpu.matmul %83, %86, %cst_93 {dimension_numbers = #tpu.dot_dimension_numbers<[1], [0], [0], [1], [0, 0, 1, 1], [], []>} : vector<40x80xf32>, vector<80x64xf32>, vector<40x64xf32> -> vector<40x64xf32>
    %88 = arith.addf %84, %87 : vector<40x64xf32>
    %c0_94 = arith.constant 0 : index
    %c0_95 = arith.constant 0 : index
    %89 = vector.load %arg9[%c0_94, %c0_95] : memref<40x64xf32, #tpu.memory_space<vmem>>, vector<40x64xf32>
    tpu.vector_store %arg9[%c0_94, %c0_95], %88 {strides = array<i32>} : memref<40x64xf32, #tpu.memory_space<vmem>>, vector<40x64xf32>,
    %c20 = arith.constant 20 : index
    %c0_96 = arith.constant 0 : index
    %90 = vector.load %arg8[%c20, %c0_96] : memref<62x80xf32, #tpu.memory_space<vmem>>, vector<40x80xf32>
    %c0_97 = arith.constant 0 : index
    %c0_98 = arith.constant 0 : index
    %91 = vector.load %arg9[%c0_97, %c0_98] : memref<40x64xf32, #tpu.memory_space<vmem>>, vector<40x64xf32>
    %c6 = arith.constant 6 : index
    %c0_99 = arith.constant 0 : index
    %c0_100 = arith.constant 0 : index
    %92 = vector.load %arg4[%c6, %c0_99, %c0_100] : memref<9x80x64xf32, #tpu.memory_space<vmem>>, vector<1x80x64xf32>
    %93 = vector.shape_cast %92 : vector<1x80x64xf32> to vector<80x64xf32>
    %cst_101 = arith.constant dense<0.000000e+00> : vector<40x64xf32>
    %94 = tpu.matmul %90, %93, %cst_101 {dimension_numbers = #tpu.dot_dimension_numbers<[1], [0], [0], [1], [0, 0, 1, 1], [], []>} : vector<40x80xf32>, vector<80x64xf32>, vector<40x64xf32> -> vector<40x64xf32>
    %95 = arith.addf %91, %94 : vector<40x64xf32>
    %c0_102 = arith.constant 0 : index
    %c0_103 = arith.constant 0 : index
    %96 = vector.load %arg9[%c0_102, %c0_103] : memref<40x64xf32, #tpu.memory_space<vmem>>, vector<40x64xf32>
    tpu.vector_store %arg9[%c0_102, %c0_103], %95 {strides = array<i32>} : memref<40x64xf32, #tpu.memory_space<vmem>>, vector<40x64xf32>,
    %c21_104 = arith.constant 21 : index
    %c0_105 = arith.constant 0 : index
    %97 = vector.load %arg8[%c21_104, %c0_105] : memref<62x80xf32, #tpu.memory_space<vmem>>, vector<40x80xf32>
    %c0_106 = arith.constant 0 : index
    %c0_107 = arith.constant 0 : index
    %98 = vector.load %arg9[%c0_106, %c0_107] : memref<40x64xf32, #tpu.memory_space<vmem>>, vector<40x64xf32>
    %c7 = arith.constant 7 : index
    %c0_108 = arith.constant 0 : index
    %c0_109 = arith.constant 0 : index
    %99 = vector.load %arg4[%c7, %c0_108, %c0_109] : memref<9x80x64xf32, #tpu.memory_space<vmem>>, vector<1x80x64xf32>
    %100 = vector.shape_cast %99 : vector<1x80x64xf32> to vector<80x64xf32>
    %cst_110 = arith.constant dense<0.000000e+00> : vector<40x64xf32>
    %101 = tpu.matmul %97, %100, %cst_110 {dimension_numbers = #tpu.dot_dimension_numbers<[1], [0], [0], [1], [0, 0, 1, 1], [], []>} : vector<40x80xf32>, vector<80x64xf32>, vector<40x64xf32> -> vector<40x64xf32>
    %102 = arith.addf %98, %101 : vector<40x64xf32>
    %c0_111 = arith.constant 0 : index
    %c0_112 = arith.constant 0 : index
    %103 = vector.load %arg9[%c0_111, %c0_112] : memref<40x64xf32, #tpu.memory_space<vmem>>, vector<40x64xf32>
    tpu.vector_store %arg9[%c0_111, %c0_112], %102 {strides = array<i32>} : memref<40x64xf32, #tpu.memory_space<vmem>>, vector<40x64xf32>,
    %c22 = arith.constant 22 : index
    %c0_113 = arith.constant 0 : index
    %104 = vector.load %arg8[%c22, %c0_113] : memref<62x80xf32, #tpu.memory_space<vmem>>, vector<40x80xf32>
    %c0_114 = arith.constant 0 : index
    %c0_115 = arith.constant 0 : index
    %105 = vector.load %arg9[%c0_114, %c0_115] : memref<40x64xf32, #tpu.memory_space<vmem>>, vector<40x64xf32>
    %c8_116 = arith.constant 8 : index
    %c0_117 = arith.constant 0 : index
    %c0_118 = arith.constant 0 : index
    %106 = vector.load %arg4[%c8_116, %c0_117, %c0_118] : memref<9x80x64xf32, #tpu.memory_space<vmem>>, vector<1x80x64xf32>
    %107 = vector.shape_cast %106 : vector<1x80x64xf32> to vector<80x64xf32>
    %cst_119 = arith.constant dense<0.000000e+00> : vector<40x64xf32>
    %108 = tpu.matmul %104, %107, %cst_119 {dimension_numbers = #tpu.dot_dimension_numbers<[1], [0], [0], [1], [0, 0, 1, 1], [], []>} : vector<40x80xf32>, vector<80x64xf32>, vector<40x64xf32> -> vector<40x64xf32>
    %109 = arith.addf %105, %108 : vector<40x64xf32>
    %c0_120 = arith.constant 0 : index
    %c0_121 = arith.constant 0 : index
    %110 = vector.load %arg9[%c0_120, %c0_121] : memref<40x64xf32, #tpu.memory_space<vmem>>, vector<40x64xf32>
    tpu.vector_store %arg9[%c0_120, %c0_121], %109 {strides = array<i32>} : memref<40x64xf32, #tpu.memory_space<vmem>>, vector<40x64xf32>,
    %c0_122 = arith.constant 0 : index
    %c0_123 = arith.constant 0 : index
    %111 = vector.load %arg9[%c0_122, %c0_123] : memref<40x64xf32, #tpu.memory_space<vmem>>, vector<8x64xf32>
    %c0_124 = arith.constant 0 : index
    %c0_125 = arith.constant 0 : index
    %112 = vector.load %arg5[%c0_124, %c0_125] : memref<1x64xf32, #tpu.memory_space<vmem>>, vector<1x64xf32>
    %113 = vector.broadcast %112 : vector<1x64xf32> to vector<8x64xf32>
    %114 = arith.addf %111, %113 : vector<8x64xf32>
    %c0_126 = arith.constant 0 : index
    %c0_127 = arith.constant 0 : index
    %c0_128 = arith.constant 0 : index
    %c0_129 = arith.constant 0 : index
    %115 = vector.load %arg6[%c0_126, %c0_127, %c0_128, %c0_129] : memref<1x4x8x64xf32, #tpu.memory_space<vmem>>, vector<1x1x8x64xf32>
    %116 = vector.shape_cast %115 : vector<1x1x8x64xf32> to vector<8x64xf32>
    %117 = arith.addf %114, %116 : vector<8x64xf32>
    %c0_130 = arith.constant 0 : index
    %c0_131 = arith.constant 0 : index
    %c0_132 = arith.constant 0 : index
    %c0_133 = arith.constant 0 : index
    %118 = vector.load %arg7[%c0_130, %c0_131, %c0_132, %c0_133] : memref<1x4x8x64xf32, #tpu.memory_space<vmem>>, vector<1x1x8x64xf32>
    %119 = vector.shape_cast %118 : vector<1x1x8x64xf32> to vector<8x64xf32>
    %120 = vector.shape_cast %117 : vector<8x64xf32> to vector<1x1x8x64xf32>
    tpu.vector_store %arg7[%c0_130, %c0_131, %c0_132, %c0_133], %120 {strides = array<i32>} : memref<1x4x8x64xf32, #tpu.memory_space<vmem>>, vector<1x1x8x64xf32>,
    %c10_134 = arith.constant 10 : index
    %c0_135 = arith.constant 0 : index
    %121 = vector.load %arg9[%c10_134, %c0_135] : memref<40x64xf32, #tpu.memory_space<vmem>>, vector<8x64xf32>
    %c0_136 = arith.constant 0 : index
    %c0_137 = arith.constant 0 : index
    %122 = vector.load %arg5[%c0_136, %c0_137] : memref<1x64xf32, #tpu.memory_space<vmem>>, vector<1x64xf32>
    %123 = vector.broadcast %122 : vector<1x64xf32> to vector<8x64xf32>
    %124 = arith.addf %121, %123 : vector<8x64xf32>
    %c0_138 = arith.constant 0 : index
    %c1_139 = arith.constant 1 : index
    %c0_140 = arith.constant 0 : index
    %c0_141 = arith.constant 0 : index
    %125 = vector.load %arg6[%c0_138, %c1_139, %c0_140, %c0_141] : memref<1x4x8x64xf32, #tpu.memory_space<vmem>>, vector<1x1x8x64xf32>
    %126 = vector.shape_cast %125 : vector<1x1x8x64xf32> to vector<8x64xf32>
    %127 = arith.addf %124, %126 : vector<8x64xf32>
    %c0_142 = arith.constant 0 : index
    %c1_143 = arith.constant 1 : index
    %c0_144 = arith.constant 0 : index
    %c0_145 = arith.constant 0 : index
    %128 = vector.load %arg7[%c0_142, %c1_143, %c0_144, %c0_145] : memref<1x4x8x64xf32, #tpu.memory_space<vmem>>, vector<1x1x8x64xf32>
    %129 = vector.shape_cast %128 : vector<1x1x8x64xf32> to vector<8x64xf32>
    %130 = vector.shape_cast %127 : vector<8x64xf32> to vector<1x1x8x64xf32>
    tpu.vector_store %arg7[%c0_142, %c1_143, %c0_144, %c0_145], %130 {strides = array<i32>} : memref<1x4x8x64xf32, #tpu.memory_space<vmem>>, vector<1x1x8x64xf32>,
    %c20_146 = arith.constant 20 : index
    %c0_147 = arith.constant 0 : index
    %131 = vector.load %arg9[%c20_146, %c0_147] : memref<40x64xf32, #tpu.memory_space<vmem>>, vector<8x64xf32>
    %c0_148 = arith.constant 0 : index
    %c0_149 = arith.constant 0 : index
    %132 = vector.load %arg5[%c0_148, %c0_149] : memref<1x64xf32, #tpu.memory_space<vmem>>, vector<1x64xf32>
    %133 = vector.broadcast %132 : vector<1x64xf32> to vector<8x64xf32>
    %134 = arith.addf %131, %133 : vector<8x64xf32>
    %c0_150 = arith.constant 0 : index
    %c2_151 = arith.constant 2 : index
    %c0_152 = arith.constant 0 : index
    %c0_153 = arith.constant 0 : index
    %135 = vector.load %arg6[%c0_150, %c2_151, %c0_152, %c0_153] : memref<1x4x8x64xf32, #tpu.memory_space<vmem>>, vector<1x1x8x64xf32>
    %136 = vector.shape_cast %135 : vector<1x1x8x64xf32> to vector<8x64xf32>
    %137 = arith.addf %134, %136 : vector<8x64xf32>
    %c0_154 = arith.constant 0 : index
    %c2_155 = arith.constant 2 : index
    %c0_156 = arith.constant 0 : index
    %c0_157 = arith.constant 0 : index
    %138 = vector.load %arg7[%c0_154, %c2_155, %c0_156, %c0_157] : memref<1x4x8x64xf32, #tpu.memory_space<vmem>>, vector<1x1x8x64xf32>
    %139 = vector.shape_cast %138 : vector<1x1x8x64xf32> to vector<8x64xf32>
    %140 = vector.shape_cast %137 : vector<8x64xf32> to vector<1x1x8x64xf32>
    tpu.vector_store %arg7[%c0_154, %c2_155, %c0_156, %c0_157], %140 {strides = array<i32>} : memref<1x4x8x64xf32, #tpu.memory_space<vmem>>, vector<1x1x8x64xf32>,
    %c30 = arith.constant 30 : index
    %c0_158 = arith.constant 0 : index
    %141 = vector.load %arg9[%c30, %c0_158] : memref<40x64xf32, #tpu.memory_space<vmem>>, vector<8x64xf32>
    %c0_159 = arith.constant 0 : index
    %c0_160 = arith.constant 0 : index
    %142 = vector.load %arg5[%c0_159, %c0_160] : memref<1x64xf32, #tpu.memory_space<vmem>>, vector<1x64xf32>
    %143 = vector.broadcast %142 : vector<1x64xf32> to vector<8x64xf32>
    %144 = arith.addf %141, %143 : vector<8x64xf32>
    %c0_161 = arith.constant 0 : index
    %c3_162 = arith.constant 3 : index
    %c0_163 = arith.constant 0 : index
    %c0_164 = arith.constant 0 : index
    %145 = vector.load %arg6[%c0_161, %c3_162, %c0_163, %c0_164] : memref<1x4x8x64xf32, #tpu.memory_space<vmem>>, vector<1x1x8x64xf32>
    %146 = vector.shape_cast %145 : vector<1x1x8x64xf32> to vector<8x64xf32>
    %147 = arith.addf %144, %146 : vector<8x64xf32>
    %c0_165 = arith.constant 0 : index
    %c3_166 = arith.constant 3 : index
    %c0_167 = arith.constant 0 : index
    %c0_168 = arith.constant 0 : index
    %148 = vector.load %arg7[%c0_165, %c3_166, %c0_167, %c0_168] : memref<1x4x8x64xf32, #tpu.memory_space<vmem>>, vector<1x1x8x64xf32>
    %149 = vector.shape_cast %148 : vector<1x1x8x64xf32> to vector<8x64xf32>
    %150 = vector.shape_cast %147 : vector<8x64xf32> to vector<1x1x8x64xf32>
    tpu.vector_store %arg7[%c0_165, %c3_166, %c0_167, %c0_168], %150 {strides = array<i32>} : memref<1x4x8x64xf32, #tpu.memory_space<vmem>>, vector<1x1x8x64xf32>,
    return
  }
  func.func @transform_0(%arg0: i32) -> (i32, i32, i32, i32) {
    %c0_i32 = arith.constant 0 : i32
    %c0_i32_0 = arith.constant 0 : i32
    %c0_i32_1 = arith.constant 0 : i32
    %c0_i32_2 = arith.constant 0 : i32
    return %arg0, %c0_i32, %c0_i32_0, %c0_i32_1 : i32, i32, i32, i32
  }
  func.func @transform_1(%arg0: i32) -> (i32, i32) {
    %c0_i32 = arith.constant 0 : i32
    %c0_i32_0 = arith.constant 0 : i32
    %c0_i32_1 = arith.constant 0 : i32
    return %c0_i32, %c0_i32_0 : i32, i32
  }
  func.func @transform_2(%arg0: i32) -> (i32, i32) {
    %c0_i32 = arith.constant 0 : i32
    %c0_i32_0 = arith.constant 0 : i32
    %c0_i32_1 = arith.constant 0 : i32
    return %c0_i32, %c0_i32_0 : i32, i32
  }
  func.func @transform_3(%arg0: i32) -> (i32, i32, i32) {
    %c0_i32 = arith.constant 0 : i32
    %c0_i32_0 = arith.constant 0 : i32
    %c0_i32_1 = arith.constant 0 : i32
    %c0_i32_2 = arith.constant 0 : i32
    return %c0_i32, %c0_i32_0, %c0_i32_1 : i32, i32, i32
  }
  func.func @transform_4(%arg0: i32) -> (i32, i32) {
    %c0_i32 = arith.constant 0 : i32
    %c0_i32_0 = arith.constant 0 : i32
    %c0_i32_1 = arith.constant 0 : i32
    return %c0_i32, %c0_i32_0 : i32, i32
  }
  func.func @transform_5(%arg0: i32) -> (i32, i32, i32, i32) {
    %c0_i32 = arith.constant 0 : i32
    %c0_i32_0 = arith.constant 0 : i32
    %c0_i32_1 = arith.constant 0 : i32
    %c0_i32_2 = arith.constant 0 : i32
    return %arg0, %c0_i32, %c0_i32_0, %c0_i32_1 : i32, i32, i32, i32
  }
  func.func @transform_6(%arg0: i32) -> (i32, i32, i32, i32) {
    %c0_i32 = arith.constant 0 : i32
    %c0_i32_0 = arith.constant 0 : i32
    %c0_i32_1 = arith.constant 0 : i32
    %c0_i32_2 = arith.constant 0 : i32
    return %arg0, %c0_i32, %c0_i32_0, %c0_i32_1 : i32, i32, i32, i32
  }
}

</mosaic_0001>

<llo_original>
// kernel: tile.33
$region0: #{tile.33}
  #allocation0 [shape = 's32[1]{0}', space=sflag, size = 0x4, scoped, tag = 'scoped memory for tile.33']
  %s0 = inlined_call_operand.vmem [shape: f32[8], index: 0, kind: input, shape index: {}]
  %s1 = inlined_call_operand.vmem [shape: f32[8,8], index: 1, kind: output, shape index: {}]
  // Predicated region
  $region2: #{tile.33} parent=0 // pred_check
    _
  $region3: #{tile.33} parent=0 // pred_check_branch
    %3 = sbr.rel (0) target = $region5
  $region4: #{tile.33} parent=0 // pred_region
    _
  $region5: #{tile.33} parent=0 // pred_fallthru
    _
  %v4 = vld [vmem:[%s0] ss:$0 sm:$0xff]
  %5 = vst [vmem:[%s1] sm:$0xff] %v4

// kernel: tile.34
$region0: #{tile.34}
  %s0 = inlined_call_operand.vmem [shape: f32[8,8], index: 0, kind: input, shape index: {}]
  %s1 = inlined_call_operand.vmem [shape: f32[1,64], index: 1, kind: output, shape index: {}]
  $region1: #{tile.34} parent=0
    #allocation0 [shape = 'u8[4096]{0}', space=vmem, size = 0x1000, scoped, tag = 'scoped mem for output reshape']
    %v2 = vld [vmem:[%s0] sm:$0x1]
    %vm3 = vcmask 64512
    %4 = vst.msk [vmem:[#allocation0] sm:$0x1] %vm3, %v2
    %s5 = scalar_lea.vmem %s0, 7
    %v6 = vld [vmem:[%s5] sm:$0x1]
    %7 = vrot.lane.b32.xlu0 %v6, 56
    %v8 = vpop.permute.xlu0 %7
    %vm9 = vcmask 523712
    %10 = vst.msk [vmem:[#allocation0] sm:$0x1] %vm9, %v8
    %s11 = scalar_lea.vmem %s0, 6
    %v12 = vld [vmem:[%s11] sm:$0x1]
    %13 = vrot.lane.b32.xlu0 %v12, 48
    %v14 = vpop.permute.xlu0 %13
    %vm15 = vcmask 458112
    %16 = vst.msk [vmem:[#allocation0] sm:$0x1] %vm15, %v14
    %s17 = scalar_lea.vmem %s0, 5
    %v18 = vld [vmem:[%s17] sm:$0x1]
    %19 = vrot.lane.b32.xlu0 %v18, 40
    %v20 = vpop.permute.xlu0 %19
    %vm21 = vcmask 392512
    %22 = vst.msk [vmem:[#allocation0] sm:$0x1] %vm21, %v20
    %s23 = scalar_lea.vmem %s0, 4
    %v24 = vld [vmem:[%s23] sm:$0x1]
    %25 = vrot.lane.b32.xlu0 %v24, 32
    %v26 = vpop.permute.xlu0 %25
    %vm27 = vcmask 326912
    %28 = vst.msk [vmem:[#allocation0] sm:$0x1] %vm27, %v26
    %s29 = scalar_lea.vmem %s0, 3
    %v30 = vld [vmem:[%s29] sm:$0x1]
    %31 = vrot.lane.b32.xlu0 %v30, 24
    %v32 = vpop.permute.xlu0 %31
    %vm33 = vcmask 261312
    %34 = vst.msk [vmem:[#allocation0] sm:$0x1] %vm33, %v32
    %s35 = scalar_lea.vmem %s0, 2
    %v36 = vld [vmem:[%s35] sm:$0x1]
    %37 = vrot.lane.b32.xlu0 %v36, 16
    %v38 = vpop.permute.xlu0 %37
    %vm39 = vcmask 195712
    %40 = vst.msk [vmem:[#allocation0] sm:$0x1] %vm39, %v38
    %s41 = scalar_lea.vmem %s0, 1
    %v42 = vld [vmem:[%s41] sm:$0x1]
    %43 = vrot.lane.b32.xlu0 %v42, 8
    %v44 = vpop.permute.xlu0 %43
    %vm45 = vcmask 130112
    %46 = vst.msk [vmem:[#allocation0] sm:$0x1] %vm45, %v44
    %s48 = sshll.u32 1, 1
    %s49 = ssub.s32 %s48, 1
    %v51 = vld [vmem:[#allocation0] sm:%s49]
    %s52 = sshll.u32 1, 1
    %s53 = ssub.s32 %s52, 1
    %54 = vst [vmem:[%s1] sm:%s53] %v51

// kernel: res_block_3d.3
$region0: #{res_block_3d.3}
  #allocation0 [shape = 'u32[]', space=smem, size = 0x4, offset = 0x4, fixed_abs, tag = 'smem constant byte address 0x4 - core index']
  #allocation1 [shape = 'u32[144,128]{1,0:T(1,128)}', space=vmem, size = 0x12000, scoped, tag = 'internal scratch']
  %s0 = inlined_call_operand.vmem [shape: f32[32,128], index: 0, kind: input, shape index: {}]
  %s1 = inlined_call_operand.vmem [shape: f32[1,128], index: 1, kind: output, shape index: {0}]
  %s2 = inlined_call_operand.vmem [shape: f32[1,128], index: 2, kind: output, shape index: {1}]
  %3 = xla_tuple %s1, %s2
  %s4 = sld [smem:[#allocation0]]
  $region26: #{res_block_3d.3} parent=0
    _
  %s6 = ssub.s32 1, %s4
  %s7 = scalar_select 0, %s6, %s4
  // Predicated region
  $region2: #{res_block_3d.3} parent=0 // pred_check
    _
  $region3: #{res_block_3d.3} parent=0 // pred_check_branch
    %9 = sbr.rel (0) target = $region5
  $region4: #{res_block_3d.3} parent=0 // pred_region
    _
  $region5: #{res_block_3d.3} parent=0 // pred_fallthru
    _
  %p10 = scmp.eq.s32.totalorder 0, 0
  // Predicated region
  $region6: #{res_block_3d.3} parent=0 // pred_check
    %p11 = pneg %p10
  $region7: #{res_block_3d.3} parent=0 // pred_check_branch
    %13 = sbr.rel (%p11) target = $region9
  $region8: #{res_block_3d.3} parent=0 // pred_region
    %14 = vst [vmem:[%s1] sm:$0x1] 0.0
    %15 = vst [vmem:[%s2] sm:$0x1] 0.0
  $region9: #{res_block_3d.3} parent=0 // pred_fallthru
    _
  %v16 = vld [vmem:[%s0] sm:$0xff]
  %v17 = vld [vmem:[%s0 + $0x8] sm:$0xff]
  %v18 = vld [vmem:[%s0 + $0x10] sm:$0xff]
  %v19 = vld [vmem:[%s0 + $0x18] sm:$0xff]
  %v20 = vld [vmem:[%s1] sm:$0x1]
  %v21 = vadd.f32 %v16, %v17
  %v22 = vadd.f32 %v21, %v18
  %v23 = vadd.f32 %v22, %v19
  %v24 = vrot.slane %v23, 4
  %v25 = vadd.f32 %v23, %v24
  %v26 = vrot.slane %v25, 2
  %v27 = vadd.f32 %v25, %v26
  %v28 = vrot.slane %v27, 1
  %v29 = vadd.f32 %v27, %v28
  %v30 = vadd.f32 %v20, %v29
  %31 = vst [vmem:[%s1] sm:$0x1] %v30
  %v32 = vld [vmem:[%s2] sm:$0x1]
  %v33 = vmul.f32 %v16, %v16
  %v34 = vmul.f32 %v17, %v17
  %v35 = vmul.f32 %v18, %v18
  %v36 = vmul.f32 %v19, %v19
  %v37 = vadd.f32 %v33, %v34
  %v38 = vadd.f32 %v37, %v35
  %v39 = vadd.f32 %v38, %v36
  %v40 = vrot.slane %v39, 4
  %v41 = vadd.f32 %v39, %v40
  %v42 = vrot.slane %v41, 2
  %v43 = vadd.f32 %v41, %v42
  %v44 = vrot.slane %v43, 1
  %v45 = vadd.f32 %v43, %v44
  %v46 = vadd.f32 %v32, %v45
  %47 = vst [vmem:[%s2] sm:$0x1] %v46
  // Predicated region
  $region10: #{res_block_3d.3} parent=0 // pred_check
    _
  $region11: #{res_block_3d.3} parent=0 // pred_check_branch
    %49 = sbr.rel (0) target = $region13
  $region12: #{res_block_3d.3} parent=0 // pred_region
    _
  $region13: #{res_block_3d.3} parent=0 // pred_fallthru
    _
  // Predicated region
  $region14: #{res_block_3d.3} parent=0 // pred_check
    _
  $region15: #{res_block_3d.3} parent=0 // pred_check_branch
    %51 = sbr.rel (0) target = $region17
  $region16: #{res_block_3d.3} parent=0 // pred_region
    _
  $region17: #{res_block_3d.3} parent=0 // pred_fallthru
    _
  // Predicated region
  $region18: #{res_block_3d.3} parent=0 // pred_check
    _
  $region19: #{res_block_3d.3} parent=0 // pred_check_branch
    %53 = sbr.rel (0) target = $region21
  $region20: #{res_block_3d.3} parent=0 // pred_region
    _
  $region21: #{res_block_3d.3} parent=0 // pred_fallthru
    _
  // Predicated region
  $region22: #{res_block_3d.3} parent=0 // pred_check
    _
  $region23: #{res_block_3d.3} parent=0 // pred_check_branch
    %55 = sbr.rel (0) target = $region25
  $region24: #{res_block_3d.3} parent=0 // pred_region
    _
  $region25: #{res_block_3d.3} parent=0 // pred_fallthru
    _

// kernel: res_block_3d.4
$region0: #{res_block_3d.4}
  #allocation0 [shape = 'u32[]', space=smem, size = 0x4, offset = 0x4, fixed_abs, tag = 'smem constant byte address 0x4 - core index']
  #allocation1 [shape = 'u32[144,128]{1,0:T(1,128)}', space=vmem, size = 0x12000, scoped, tag = 'internal scratch']
  #allocation2 [shape = 'f32[62,80]{1,0:T(8,128)}', space=vmem, size = 0x8000, scoped, tag = 'scratch operand']
  #allocation3 [shape = 'f32[40,64]{1,0:T(8,128)}', space=vmem, size = 0x5000, scoped, tag = 'scratch operand']
  %s0 = inlined_call_operand.vmem [shape: f32[2,4,8,64], index: 0, kind: input, shape index: {}]
  %s1 = inlined_call_operand.vmem [shape: f32[1,64], index: 1, kind: input, shape index: {}]
  %s2 = inlined_call_operand.vmem [shape: f32[1,64], index: 2, kind: input, shape index: {}]
  %s3 = inlined_call_operand.vmem [shape: f32[9,80,64], index: 3, kind: input, shape index: {}]
  %s4 = inlined_call_operand.vmem [shape: f32[1,64], index: 4, kind: input, shape index: {}]
  %s5 = inlined_call_operand.vmem [shape: f32[2,4,8,64], index: 5, kind: output, shape index: {0}]
  %s6 = inlined_call_operand.vmem [shape: f32[1,64], index: 6, kind: output, shape index: {1}]
  %s7 = inlined_call_operand.vmem [shape: f32[1,64], index: 7, kind: output, shape index: {2}]
  %8 = xla_tuple %s5, %s6, %s7
  %s9 = sld [smem:[#allocation0]]
  $region73: #{res_block_3d.4} parent=0
    _
  %s11 = ssub.s32 1, %s9
  %s12 = scalar_select 0, %s11, %s9
  loop: start=0, step=1, limit=4
  $region2: #{res_block_3d.4} parent=0 // loop_pre_header
    _
  $region3: #{res_block_3d.4} parent=0 // loop_header
    %s14 = sphi 0, %s18
    %p15 = scmp.ge.s32.totalorder %s14, 4
    %s24 = sphi 0, %s26
    %s27 = sphi 0, %s24
    %s28 = sphi 0, %s27
    %s44 = sphi 0, %s28
    %s48 = sphi 0, %s48
    %s50 = sphi 0, %s48
    %s51 = sphi 0, %s50
    %s65 = sphi 0, %s51
    %s69 = sphi 0, %s69
    %s71 = sphi 0, %s69
    %s72 = sphi 0, %s71
    %s86 = sphi 0, %s72
    %s90 = sphi 0, %s90
    %s92 = sphi 0, %s90
    %s93 = sphi 0, %s92
    %s107 = sphi 0, %s93
    %s111 = sphi 0, %s111
    %s113 = sphi 0, %s111
    %s114 = sphi 0, %s113
    %s128 = sphi 0, %s114
    %s134 = sphi 0, %s136
    %s137 = sphi 0, %s134
    %s138 = sphi 0, %s137
    %s154 = sphi 0, %s138
    %s158 = sphi 0, %s158
    %s160 = sphi 0, %s158
    %s161 = sphi 0, %s160
    %s175 = sphi 0, %s161
    %s179 = sphi 0, %s179
    %s181 = sphi 0, %s179
    %s182 = sphi 0, %s181
    %s196 = sphi 0, %s182
  $region4: #{res_block_3d.4} parent=0 // loop_header_branch
    %17 = sbr.rel (%p15) target = $region8
  $region5: #{res_block_3d.4} parent=0 // loop_body
    %s19 = ssub.s32 %s14, 1
    %s20 = ssub.s32 %s14, 2
    %s21 = sadd.s32 %s14, 1
    %s22 = ssub.s32 %s14, %s21
    %p23 = scmp.eq.s32.totalorder %s22, 0
    %s25 = sadd.s32 %s24, 1
    %s26 = scalar_select %p23, %s24, %s25
    %p29 = pneg %p23
    %p30 = scmp.eq.s32.totalorder %s14, 1
    %p31 = por %p29, %p30
    %p32 = scmp.ne.s32.totalorder %s24, %s27
    %p33 = scmp.eq.s32.totalorder %s14, 0
    %p34 = por %p32, %p33
    %p35 = scmp.ne.s32.totalorder %s24, %s27
    %p36 = scmp.eq.s32.totalorder %s19, 1
    %p37 = por %p35, %p36
    %p38 = scmp.ne.s32.totalorder %s27, %s28
    %p39 = scmp.eq.s32.totalorder %s19, 0
    %p40 = por %p38, %p39
    %p41 = scmp.ne.s32.totalorder %s27, %s28
    %p42 = scmp.eq.s32.totalorder %s20, 1
    %p43 = por %p41, %p42
    %p45 = scmp.ne.s32.totalorder %s28, %s44
    %p46 = scmp.eq.s32.totalorder %s20, 0
    %p47 = por %p45, %p46
    %s49 = sadd.s32 %s48, 1
    %p52 = scmp.eq.s32.totalorder %s14, 1
    %p53 = scmp.ne.s32.totalorder %s48, %s50
    %p54 = scmp.eq.s32.totalorder %s14, 0
    %p55 = por %p53, %p54
    %p56 = scmp.ne.s32.totalorder %s48, %s50
    %p57 = scmp.eq.s32.totalorder %s19, 1
    %p58 = por %p56, %p57
    %p59 = scmp.ne.s32.totalorder %s50, %s51
    %p60 = scmp.eq.s32.totalorder %s19, 0
    %p61 = por %p59, %p60
    %p62 = scmp.ne.s32.totalorder %s50, %s51
    %p63 = scmp.eq.s32.totalorder %s20, 1
    %p64 = por %p62, %p63
    %p66 = scmp.ne.s32.totalorder %s51, %s65
    %p67 = scmp.eq.s32.totalorder %s20, 0
    %p68 = por %p66, %p67
    %s70 = sadd.s32 %s69, 1
    %p73 = scmp.eq.s32.totalorder %s14, 1
    %p74 = scmp.ne.s32.totalorder %s69, %s71
    %p75 = scmp.eq.s32.totalorder %s14, 0
    %p76 = por %p74, %p75
    %p77 = scmp.ne.s32.totalorder %s69, %s71
    %p78 = scmp.eq.s32.totalorder %s19, 1
    %p79 = por %p77, %p78
    %p80 = scmp.ne.s32.totalorder %s71, %s72
    %p81 = scmp.eq.s32.totalorder %s19, 0
    %p82 = por %p80, %p81
    %p83 = scmp.ne.s32.totalorder %s71, %s72
    %p84 = scmp.eq.s32.totalorder %s20, 1
    %p85 = por %p83, %p84
    %p87 = scmp.ne.s32.totalorder %s72, %s86
    %p88 = scmp.eq.s32.totalorder %s20, 0
    %p89 = por %p87, %p88
    %s91 = sadd.s32 %s90, 1
    %p94 = scmp.eq.s32.totalorder %s14, 1
    %p95 = scmp.ne.s32.totalorder %s90, %s92
    %p96 = scmp.eq.s32.totalorder %s14, 0
    %p97 = por %p95, %p96
    %p98 = scmp.ne.s32.totalorder %s90, %s92
    %p99 = scmp.eq.s32.totalorder %s19, 1
    %p100 = por %p98, %p99
    %p101 = scmp.ne.s32.totalorder %s92, %s93
    %p102 = scmp.eq.s32.totalorder %s19, 0
    %p103 = por %p101, %p102
    %p104 = scmp.ne.s32.totalorder %s92, %s93
    %p105 = scmp.eq.s32.totalorder %s20, 1
    %p106 = por %p104, %p105
    %p108 = scmp.ne.s32.totalorder %s93, %s107
    %p109 = scmp.eq.s32.totalorder %s20, 0
    %p110 = por %p108, %p109
    %s112 = sadd.s32 %s111, 1
    %p115 = scmp.eq.s32.totalorder %s14, 1
    %p116 = scmp.ne.s32.totalorder %s111, %s113
    %p117 = scmp.eq.s32.totalorder %s14, 0
    %p118 = por %p116, %p117
    %p119 = scmp.ne.s32.totalorder %s111, %s113
    %p120 = scmp.eq.s32.totalorder %s19, 1
    %p121 = por %p119, %p120
    %p122 = scmp.ne.s32.totalorder %s113, %s114
    %p123 = scmp.eq.s32.totalorder %s19, 0
    %p124 = por %p122, %p123
    %p125 = scmp.ne.s32.totalorder %s113, %s114
    %p126 = scmp.eq.s32.totalorder %s20, 1
    %p127 = por %p125, %p126
    %p129 = scmp.ne.s32.totalorder %s114, %s128
    %p130 = scmp.eq.s32.totalorder %s20, 0
    %p131 = por %p129, %p130
    %s132 = ssub.s32 %s14, %s21
    %p133 = scmp.eq.s32.totalorder %s132, 0
    %s135 = sadd.s32 %s134, 1
    %s136 = scalar_select %p133, %s134, %s135
    %p139 = pneg %p133
    %p140 = scmp.eq.s32.totalorder %s14, 1
    %p141 = por %p139, %p140
    %p142 = scmp.ne.s32.totalorder %s134, %s137
    %p143 = scmp.eq.s32.totalorder %s14, 0
    %p144 = por %p142, %p143
    %p145 = scmp.ne.s32.totalorder %s134, %s137
    %p146 = scmp.eq.s32.totalorder %s19, 1
    %p147 = por %p145, %p146
    %p148 = scmp.ne.s32.totalorder %s137, %s138
    %p149 = scmp.eq.s32.totalorder %s19, 0
    %p150 = por %p148, %p149
    %p151 = scmp.ne.s32.totalorder %s137, %s138
    %p152 = scmp.eq.s32.totalorder %s20, 1
    %p153 = por %p151, %p152
    %p155 = scmp.ne.s32.totalorder %s138, %s154
    %p156 = scmp.eq.s32.totalorder %s20, 0
    %p157 = por %p155, %p156
    %s159 = sadd.s32 %s158, 1
    %p162 = scmp.eq.s32.totalorder %s14, 1
    %p163 = scmp.ne.s32.totalorder %s158, %s160
    %p164 = scmp.eq.s32.totalorder %s14, 0
    %p165 = por %p163, %p164
    %p166 = scmp.ne.s32.totalorder %s158, %s160
    %p167 = scmp.eq.s32.totalorder %s19, 1
    %p168 = por %p166, %p167
    %p169 = scmp.ne.s32.totalorder %s160, %s161
    %p170 = scmp.eq.s32.totalorder %s19, 0
    %p171 = por %p169, %p170
    %p172 = scmp.ne.s32.totalorder %s160, %s161
    %p173 = scmp.eq.s32.totalorder %s20, 1
    %p174 = por %p172, %p173
    %p176 = scmp.ne.s32.totalorder %s161, %s175
    %p177 = scmp.eq.s32.totalorder %s20, 0
    %p178 = por %p176, %p177
    %s180 = sadd.s32 %s179, 1
    %p183 = scmp.eq.s32.totalorder %s14, 1
    %p184 = scmp.ne.s32.totalorder %s179, %s181
    %p185 = scmp.eq.s32.totalorder %s14, 0
    %p186 = por %p184, %p185
    %p187 = scmp.ne.s32.totalorder %s179, %s181
    %p188 = scmp.eq.s32.totalorder %s19, 1
    %p189 = por %p187, %p188
    %p190 = scmp.ne.s32.totalorder %s181, %s182
    %p191 = scmp.eq.s32.totalorder %s19, 0
    %p192 = por %p190, %p191
    %p193 = scmp.ne.s32.totalorder %s181, %s182
    %p194 = scmp.eq.s32.totalorder %s20, 1
    %p195 = por %p193, %p194
    %p197 = scmp.ne.s32.totalorder %s182, %s196
    %p198 = scmp.eq.s32.totalorder %s20, 0
    %p199 = por %p197, %p198
    %p200 = scmp.le.s32.totalorder 1, %s14
    %p201 = scmp.lt.s32.totalorder %s14, 3
    %p202 = pnand %p200, %p201
    %p203 = pneg %p202
    // Predicated region
    $region9: #{res_block_3d.4} parent=5 // pred_check
      _
    $region10: #{res_block_3d.4} parent=5 // pred_check_branch
      %205 = sbr.rel (%p202) target = $region12
    $region11: #{res_block_3d.4} parent=5 // pred_region
      %s206 = ssub.s32 %s14, 1
      // Predicated region
      $region13: #{res_block_3d.4} parent=11 // pred_check
        %p207 = pneg %p61
      $region14: #{res_block_3d.4} parent=11 // pred_check_branch
        %209 = sbr.rel (%p207) target = $region16
      $region15: #{res_block_3d.4} parent=11 // pred_region
        _
      $region16: #{res_block_3d.4} parent=11 // pred_fallthru
        _
      // Predicated region
      $region17: #{res_block_3d.4} parent=11 // pred_check
        %p210 = pneg %p82
      $region18: #{res_block_3d.4} parent=11 // pred_check_branch
        %212 = sbr.rel (%p210) target = $region20
      $region19: #{res_block_3d.4} parent=11 // pred_region
        _
      $region20: #{res_block_3d.4} parent=11 // pred_fallthru
        _
      // Predicated region
      $region21: #{res_block_3d.4} parent=11 // pred_check
        %p213 = pneg %p103
      $region22: #{res_block_3d.4} parent=11 // pred_check_branch
        %215 = sbr.rel (%p213) target = $region24
      $region23: #{res_block_3d.4} parent=11 // pred_region
        _
      $region24: #{res_block_3d.4} parent=11 // pred_fallthru
        _
      // Predicated region
      $region25: #{res_block_3d.4} parent=11 // pred_check
        %p216 = pneg %p124
      $region26: #{res_block_3d.4} parent=11 // pred_check_branch
        %218 = sbr.rel (%p216) target = $region28
      $region27: #{res_block_3d.4} parent=11 // pred_region
        _
      $region28: #{res_block_3d.4} parent=11 // pred_fallthru
        _
    $region12: #{res_block_3d.4} parent=5 // pred_fallthru
      _
    %p219 = scmp.lt.s32.totalorder %s14, 2
    // Predicated region
    $region29: #{res_block_3d.4} parent=5 // pred_check
      %p220 = pneg %p219
    $region30: #{res_block_3d.4} parent=5 // pred_check_branch
      %222 = sbr.rel (%p220) target = $region32
    $region31: #{res_block_3d.4} parent=5 // pred_region
      // Predicated region
      $region33: #{res_block_3d.4} parent=31 // pred_check
        %p223 = pneg %p34
      $region34: #{res_block_3d.4} parent=31 // pred_check_branch
        %225 = sbr.rel (%p223) target = $region36
      $region35: #{res_block_3d.4} parent=31 // pred_region
        %p226 = scmp.lt.s32.totalorder %s14, 1
        %s227 = scalar_select %p226, %s14, 1
        %s228 = smul.addr %s227, 4
        %s229 = smul.addr %s228, 8
        %s230 = scalar_lea.vmem %s0, %s229
      $region36: #{res_block_3d.4} parent=31 // pred_fallthru
        _
    $region32: #{res_block_3d.4} parent=5 // pred_fallthru
      _
    %p231 = scmp.le.s32.totalorder 1, %s14
    %p232 = scmp.lt.s32.totalorder %s14, 3
    %p233 = pnand %p231, %p232
    %p234 = pneg %p233
    // Predicated region
    $region37: #{res_block_3d.4} parent=5 // pred_check
      _
    $region38: #{res_block_3d.4} parent=5 // pred_check_branch
      %236 = sbr.rel (%p233) target = $region40
    $region39: #{res_block_3d.4} parent=5 // pred_region
      %s237 = ssub.s32 %s14, 1
      %p238 = scmp.lt.s32.totalorder %s19, 1
      %s239 = scalar_select %p238, %s19, 1
      %s240 = smul.addr %s239, 4
      %s241 = smul.addr %s240, 8
      %s242 = scalar_lea.vmem %s0, %s241
      %p243 = pneg %p40
      %p244 = pneg %p37
      %p245 = pneg %p61
      %p246 = pneg %p58
      %p247 = pneg %p82
      %p248 = pneg %p79
      %p249 = pneg %p103
      %p250 = pneg %p100
      %p251 = pneg %p124
      %p252 = pneg %p121
      %p253 = pneg %p150
      %p254 = pneg %p147
      %p255 = scmp.lt.s32.totalorder %s19, 1
      %s256 = scalar_select %p255, %s19, 1
      %s257 = smul.addr %s256, 4
      %s258 = smul.addr %s257, 8
      %s259 = scalar_lea.vmem %s5, %s258
      %p260 = pneg %p171
      %p261 = pneg %p168
      %p262 = pneg %p192
      %p263 = pneg %p189
      %p264 = scmp.lt.s32.totalorder %s19, 1
      %s265 = scalar_select %p264, %s19, 1
      %s266 = smul.addr %s265, 4
      %s267 = smul.addr %s266, 8
      %s268 = scalar_lea.vmem %s0, %s267
      %p269 = scmp.lt.s32.totalorder %s19, 1
      %s270 = scalar_select %p269, %s19, 1
      %s271 = smul.addr %s270, 4
      %s272 = smul.addr %s271, 8
      %s273 = scalar_lea.vmem %s5, %s272
      %p274 = scmp.eq.s32.totalorder %s19, 0
      // Predicated region
      $region41: #{res_block_3d.4} parent=39 // pred_check
        %p275 = pneg %p274
      $region42: #{res_block_3d.4} parent=39 // pred_check_branch
        %277 = sbr.rel (%p275) target = $region44
      $region43: #{res_block_3d.4} parent=39 // pred_region
        %vm278 = vcmask 516096
        %279 = vst.msk [vmem:[%s6] sm:$0x1] %vm278, 0.0
        %280 = vst.msk [vmem:[%s7] sm:$0x1] %vm278, 0.0
      $region44: #{res_block_3d.4} parent=39 // pred_fallthru
        _
      %vm281 = vcmask 654336
      %282 = vst.msk [vmem:[#allocation2] sm:$0xff] %vm281, 0.0
      %283 = vst.msk [vmem:[#allocation2 + $0x8] sm:$0xff] %vm281, 0.0
      %284 = vst.msk [vmem:[#allocation2 + $0x10] sm:$0xff] %vm281, 0.0
      %285 = vst.msk [vmem:[#allocation2 + $0x18] sm:$0xff] %vm281, 0.0
      %286 = vst.msk [vmem:[#allocation2 + $0x20] sm:$0xff] %vm281, 0.0
      %287 = vst.msk [vmem:[#allocation2 + $0x28] sm:$0xff] %vm281, 0.0
      %288 = vst.msk [vmem:[#allocation2 + $0x30] sm:$0xff] %vm281, 0.0
      %vm289 = vcmask 652288
      %290 = vst.msk [vmem:[#allocation2 + $0x38] sm:$0x3f] %vm289, 0.0
      %v291 = vld [vmem:[%s268] sm:$0xff]
      %v292 = vld [vmem:[%s1] sm:$0x1]
      %v294 = vlaneseq
      %v295 = vshrl.u32 %v294, 7
      %v296 = vsub.s32 0, %v295
      %v297 = vrot.slane %v292, %v296
      %v299 = vmul.f32 %v291, %v297
      %v300 = vld [vmem:[%s2] sm:$0x1]
      %v302 = vlaneseq
      %v303 = vshrl.u32 %v302, 7
      %v304 = vsub.s32 0, %v303
      %v305 = vrot.slane %v300, %v304
      %v307 = vadd.f32 %v299, %v305
      %v308 = vmax.f32 %v307, 0.0
      %310 = vrot.lane.b32.xlu0 %v308, 8
      %v311 = vpop.permute.xlu0 %310
      %vm313 = vcmask 588864
      %314 = vst.msk [vmem:[#allocation2 + $0xb] sm:$0xff] %vm313, %v311
      %s315 = scalar_lea.vmem %s268, 8
      %v316 = vld [vmem:[%s315] sm:$0xff]
      %v317 = vld [vmem:[%s1] sm:$0x1]
      %v319 = vlaneseq
      %v320 = vshrl.u32 %v319, 7
      %v321 = vsub.s32 0, %v320
      %v322 = vrot.slane %v317, %v321
      %v324 = vmul.f32 %v316, %v322
      %v325 = vld [vmem:[%s2] sm:$0x1]
      %v327 = vlaneseq
      %v328 = vshrl.u32 %v327, 7
      %v329 = vsub.s32 0, %v328
      %v330 = vrot.slane %v325, %v329
      %v332 = vadd.f32 %v324, %v330
      %v333 = vmax.f32 %v332, 0.0
      %335 = vrot.lane.b32.xlu0 %v333, 8
      %v336 = vpop.permute.xlu0 %335
      %338 = vst.msk [vmem:[#allocation2 + $0x15] sm:$0xff] %vm313, %v336
      %s339 = scalar_lea.vmem %s268, 16
      %v340 = vld [vmem:[%s339] sm:$0xff]
      %v341 = vld [vmem:[%s1] sm:$0x1]
      %v343 = vlaneseq
      %v344 = vshrl.u32 %v343, 7
      %v345 = vsub.s32 0, %v344
      %v346 = vrot.slane %v341, %v345
      %v348 = vmul.f32 %v340, %v346
      %v349 = vld [vmem:[%s2] sm:$0x1]
      %v351 = vlaneseq
      %v352 = vshrl.u32 %v351, 7
      %v353 = vsub.s32 0, %v352
      %v354 = vrot.slane %v349, %v353
      %v356 = vadd.f32 %v348, %v354
      %v357 = vmax.f32 %v356, 0.0
      %359 = vrot.lane.b32.xlu0 %v357, 8
      %v360 = vpop.permute.xlu0 %359
      %362 = vst.msk [vmem:[#allocation2 + $0x1f] sm:$0xff] %vm313, %v360
      %s363 = scalar_lea.vmem %s268, 24
      %v364 = vld [vmem:[%s363] sm:$0xff]
      %v365 = vld [vmem:[%s1] sm:$0x1]
      %v367 = vlaneseq
      %v368 = vshrl.u32 %v367, 7
      %v369 = vsub.s32 0, %v368
      %v370 = vrot.slane %v365, %v369
      %v372 = vmul.f32 %v364, %v370
      %v373 = vld [vmem:[%s2] sm:$0x1]
      %v375 = vlaneseq
      %v376 = vshrl.u32 %v375, 7
      %v377 = vsub.s32 0, %v376
      %v378 = vrot.slane %v373, %v377
      %v380 = vadd.f32 %v372, %v378
      %v381 = vmax.f32 %v380, 0.0
      %383 = vrot.lane.b32.xlu0 %v381, 8
      %v384 = vpop.permute.xlu0 %383
      %386 = vst.msk [vmem:[#allocation2 + $0x29] sm:$0xff] %vm313, %v384
      %vm387 = vcmask 523264
      %388 = vst.msk [vmem:[#allocation3] sm:$0xff] %vm387, 0.0
      %389 = vst.msk [vmem:[#allocation3 + $0x8] sm:$0xff] %vm387, 0.0
      %390 = vst.msk [vmem:[#allocation3 + $0x10] sm:$0xff] %vm387, 0.0
      %391 = vst.msk [vmem:[#allocation3 + $0x18] sm:$0xff] %vm387, 0.0
      %392 = vst.msk [vmem:[#allocation3 + $0x20] sm:$0xff] %vm387, 0.0
      %v393 = vld [vmem:[#allocation2] sm:$0xff]
      %v394 = vld [vmem:[#allocation2 + $0x8] sm:$0xff]
      %v395 = vld [vmem:[#allocation2 + $0x10] sm:$0xff]
      %v396 = vld [vmem:[#allocation2 + $0x18] sm:$0xff]
      %v397 = vld [vmem:[#allocation2 + $0x20] sm:$0xff]
      %v398 = vld [vmem:[#allocation3] sm:$0xff]
      %v399 = vld [vmem:[#allocation3 + $0x8] sm:$0xff]
      %v400 = vld [vmem:[#allocation3 + $0x10] sm:$0xff]
      %v401 = vld [vmem:[#allocation3 + $0x18] sm:$0xff]
      %v402 = vld [vmem:[#allocation3 + $0x20] sm:$0xff]
      %v403 = vld [vmem:[%s3] sm:$0xff]
      %v404 = vld [vmem:[%s3 + $0x8] sm:$0xff]
      %v405 = vld [vmem:[%s3 + $0x10] sm:$0xff]
      %v406 = vld [vmem:[%s3 + $0x18] sm:$0xff]
      %v407 = vld [vmem:[%s3 + $0x20] sm:$0xff]
      %v408 = vld [vmem:[%s3 + $0x28] sm:$0xff]
      %v409 = vld [vmem:[%s3 + $0x30] sm:$0xff]
      %v410 = vld [vmem:[%s3 + $0x38] sm:$0xff]
      %v411 = vld [vmem:[%s3 + $0x40] sm:$0xff]
      %v412 = vld [vmem:[%s3 + $0x48] sm:$0xff]
      %v414 = vsel %vm281, %v393, 0
      %v417 = vsel %vm281, %v394, 0
      %v420 = vsel %vm281, %v395, 0
      %v423 = vsel %vm281, %v396, 0
      %v426 = vsel %vm281, %v397, 0
      %428 = vmatprep.subr.mxu0 0.0
      %429 = vmatpush1.msra.mxu0 0.0
      %430 = vmatprep.subr.mxu0 0.0
      %431 = vmatpush1.msra.mxu0 0.0
      %432 = vmatprep.subr.mxu0 0.0
      %433 = vmatpush1.msra.mxu0 0.0
      %434 = vmatprep.subr.mxu0 0.0
      %435 = vmatpush1.msra.mxu0 0.0
      %436 = vmatprep.subr.mxu0 0.0
      %437 = vmatpush1.msra.mxu0 0.0
      %438 = vmatprep.subr.mxu0 0.0
      %439 = vmatpush1.msra.mxu0 0.0
      %440 = vmatprep.subr.mxu0 0.0
      %441 = vmatpush1.msra.mxu0 %v412
      %442 = vmatprep.subr.mxu0 0.0
      %443 = vmatpush1.msra.mxu0 %v411
      %444 = vmatprep.subr.mxu0 0.0
      %445 = vmatpush1.msra.mxu0 %v410
      %446 = vmatprep.subr.mxu0 0.0
      %447 = vmatpush1.msra.mxu0 %v409
      %448 = vmatprep.subr.mxu0 0.0
      %449 = vmatpush1.msra.mxu0 %v408
      %450 = vmatprep.subr.mxu0 0.0
      %451 = vmatpush1.msra.mxu0 %v407
      %452 = vmatprep.subr.mxu0 0.0
      %453 = vmatpush1.msra.mxu0 %v406
      %454 = vmatprep.subr.mxu0 0.0
      %455 = vmatpush1.msra.mxu0 %v405
      %456 = vmatprep.subr.mxu0 0.0
      %457 = vmatpush1.msra.mxu0 %v404
      %458 = vmatprep.subr.mxu0 0.0
      %459 = vmatpush1.msra.mxu0 %v403
      %460 = vmatprep.subr.mxu0 0.0
      %461 = vmatpush2.msra.mxu0 0.0
      %462 = vmatprep.subr.mxu0 0.0
      %463 = vmatpush2.msra.mxu0 0.0
      %464 = vmatprep.subr.mxu0 0.0
      %465 = vmatpush2.msra.mxu0 0.0
      %466 = vmatprep.subr.mxu0 0.0
      %467 = vmatpush2.msra.mxu0 0.0
      %468 = vmatprep.subr.mxu0 0.0
      %469 = vmatpush2.msra.mxu0 0.0
      %470 = vmatprep.subr.mxu0 0.0
      %471 = vmatpush2.msra.mxu0 0.0
      %472 = vmatprep.subr.mxu0 0.0
      %473 = vmatpush2.msra.mxu0 0.0
      %474 = vmatprep.subr.mxu0 0.0
      %475 = vmatpush2.msra.mxu0 0.0
      %476 = vmatprep.subr.mxu0 0.0
      %477 = vmatpush2.msra.mxu0 0.0
      %478 = vmatprep.subr.mxu0 0.0
      %479 = vmatpush2.msra.mxu0 0.0
      %480 = vmatprep.subr.mxu0 0.0
      %481 = vmatpush2.msra.mxu0 0.0
      %482 = vmatprep.subr.mxu0 0.0
      %483 = vmatpush2.msra.mxu0 0.0
      %484 = vmatprep.subr.mxu0 0.0
      %485 = vmatpush2.msra.mxu0 0.0
      %486 = vmatprep.subr.mxu0 0.0
      %487 = vmatpush2.msra.mxu0 0.0
      %488 = vmatprep.subr.mxu0 0.0
      %489 = vmatpush2.msra.mxu0 0.0
      %490 = vmatprep.subr.mxu0 0.0
      %491 = vmatpush2.msra.mxu0 0.0
      %492 = vmatprep.mubr.f32.mxu0 0.0
      %493 = vmatmul.mubr.f32.gmra.mxu0 %v414
      %v494 = vpop.f32.mrf.mxu0
      %v495 = vadd.f32 0.0, %v494
      %v496 = vpop.f32.mrf.mxu0
      %497 = vmatprep.mubr.f32.mxu0 0.0
      %498 = vmatmul.mubr.f32.gmra.mxu0 %v417
      %v499 = vpop.f32.mrf.mxu0
      %v500 = vadd.f32 0.0, %v499
      %v501 = vpop.f32.mrf.mxu0
      %502 = vmatprep.mubr.f32.mxu0 0.0
      %503 = vmatmul.mubr.f32.gmra.mxu0 %v420
      %v504 = vpop.f32.mrf.mxu0
      %v505 = vadd.f32 0.0, %v504
      %v506 = vpop.f32.mrf.mxu0
      %507 = vmatprep.mubr.f32.mxu0 0.0
      %508 = vmatmul.mubr.f32.gmra.mxu0 %v423
      %v509 = vpop.f32.mrf.mxu0
      %v510 = vadd.f32 0.0, %v509
      %v511 = vpop.f32.mrf.mxu0
      %512 = vmatprep.mubr.f32.mxu0 0.0
      %513 = vmatmul.mubr.f32.gmra.mxu0 %v426
      %v514 = vpop.f32.mrf.mxu0
      %v515 = vadd.f32 0.0, %v514
      %v516 = vpop.f32.mrf.mxu0
      %517 = vdwg.mxu0
      %v518 = vadd.f32 %v398, %v495
      %v519 = vadd.f32 %v399, %v500
      %v520 = vadd.f32 %v400, %v505
      %v521 = vadd.f32 %v401, %v510
      %v522 = vadd.f32 %v402, %v515
      %523 = vst.msk [vmem:[#allocation3] sm:$0xff] %vm387, %v518
      %524 = vst.msk [vmem:[#allocation3 + $0x8] sm:$0xff] %vm387, %v519
      %525 = vst.msk [vmem:[#allocation3 + $0x10] sm:$0xff] %vm387, %v520
      %526 = vst.msk [vmem:[#allocation3 + $0x18] sm:$0xff] %vm387, %v521
      %527 = vst.msk [vmem:[#allocation3 + $0x20] sm:$0xff] %vm387, %v522
      %v528 = vld [vmem:[#allocation2 + $0x1] sm:$0xff]
      %v529 = vld [vmem:[#allocation2 + $0x9] sm:$0xff]
      %v530 = vld [vmem:[#allocation2 + $0x11] sm:$0xff]
      %v531 = vld [vmem:[#allocation2 + $0x19] sm:$0xff]
      %v532 = vld [vmem:[#allocation2 + $0x21] sm:$0xff]
      %v533 = vld [vmem:[#allocation3] sm:$0xff]
      %v534 = vld [vmem:[#allocation3 + $0x8] sm:$0xff]
      %v535 = vld [vmem:[#allocation3 + $0x10] sm:$0xff]
      %v536 = vld [vmem:[#allocation3 + $0x18] sm:$0xff]
      %v537 = vld [vmem:[#allocation3 + $0x20] sm:$0xff]
      %s538 = scalar_lea.vmem %s3, 80
      %v539 = vld [vmem:[%s538] sm:$0xff]
      %v540 = vld [vmem:[%s538 + $0x8] sm:$0xff]
      %v541 = vld [vmem:[%s538 + $0x10] sm:$0xff]
      %v542 = vld [vmem:[%s538 + $0x18] sm:$0xff]
      %v543 = vld [vmem:[%s538 + $0x20] sm:$0xff]
      %v544 = vld [vmem:[%s538 + $0x28] sm:$0xff]
      %v545 = vld [vmem:[%s538 + $0x30] sm:$0xff]
      %v546 = vld [vmem:[%s538 + $0x38] sm:$0xff]
      %v547 = vld [vmem:[%s538 + $0x40] sm:$0xff]
      %v548 = vld [vmem:[%s538 + $0x48] sm:$0xff]
      %v550 = vsel %vm281, %v528, 0
      %v553 = vsel %vm281, %v529, 0
      %v556 = vsel %vm281, %v530, 0
      %v559 = vsel %vm281, %v531, 0
      %v562 = vsel %vm281, %v532, 0
      %564 = vmatprep.subr.mxu0 0.0
      %565 = vmatpush1.msra.mxu0 0.0
      %566 = vmatprep.subr.mxu0 0.0
      %567 = vmatpush1.msra.mxu0 0.0
      %568 = vmatprep.subr.mxu0 0.0
      %569 = vmatpush1.msra.mxu0 0.0
      %570 = vmatprep.subr.mxu0 0.0
      %571 = vmatpush1.msra.mxu0 0.0
      %572 = vmatprep.subr.mxu0 0.0
      %573 = vmatpush1.msra.mxu0 0.0
      %574 = vmatprep.subr.mxu0 0.0
      %575 = vmatpush1.msra.mxu0 0.0
      %576 = vmatprep.subr.mxu0 0.0
      %577 = vmatpush1.msra.mxu0 %v548
      %578 = vmatprep.subr.mxu0 0.0
      %579 = vmatpush1.msra.mxu0 %v547
      %580 = vmatprep.subr.mxu0 0.0
      %581 = vmatpush1.msra.mxu0 %v546
      %582 = vmatprep.subr.mxu0 0.0
      %583 = vmatpush1.msra.mxu0 %v545
      %584 = vmatprep.subr.mxu0 0.0
      %585 = vmatpush1.msra.mxu0 %v544
      %586 = vmatprep.subr.mxu0 0.0
      %587 = vmatpush1.msra.mxu0 %v543
      %588 = vmatprep.subr.mxu0 0.0
      %589 = vmatpush1.msra.mxu0 %v542
      %590 = vmatprep.subr.mxu0 0.0
      %591 = vmatpush1.msra.mxu0 %v541
      %592 = vmatprep.subr.mxu0 0.0
      %593 = vmatpush1.msra.mxu0 %v540
      %594 = vmatprep.subr.mxu0 0.0
      %595 = vmatpush1.msra.mxu0 %v539
      %596 = vmatprep.subr.mxu0 0.0
      %597 = vmatpush2.msra.mxu0 0.0
      %598 = vmatprep.subr.mxu0 0.0
      %599 = vmatpush2.msra.mxu0 0.0
      %600 = vmatprep.subr.mxu0 0.0
      %601 = vmatpush2.msra.mxu0 0.0
      %602 = vmatprep.subr.mxu0 0.0
      %603 = vmatpush2.msra.mxu0 0.0
      %604 = vmatprep.subr.mxu0 0.0
      %605 = vmatpush2.msra.mxu0 0.0
      %606 = vmatprep.subr.mxu0 0.0
      %607 = vmatpush2.msra.mxu0 0.0
      %608 = vmatprep.subr.mxu0 0.0
      %609 = vmatpush2.msra.mxu0 0.0
      %610 = vmatprep.subr.mxu0 0.0
      %611 = vmatpush2.msra.mxu0 0.0
      %612 = vmatprep.subr.mxu0 0.0
      %613 = vmatpush2.msra.mxu0 0.0
      %614 = vmatprep.subr.mxu0 0.0
      %615 = vmatpush2.msra.mxu0 0.0
      %616 = vmatprep.subr.mxu0 0.0
      %617 = vmatpush2.msra.mxu0 0.0
      %618 = vmatprep.subr.mxu0 0.0
      %619 = vmatpush2.msra.mxu0 0.0
      %620 = vmatprep.subr.mxu0 0.0
      %621 = vmatpush2.msra.mxu0 0.0
      %622 = vmatprep.subr.mxu0 0.0
      %623 = vmatpush2.msra.mxu0 0.0
      %624 = vmatprep.subr.mxu0 0.0
      %625 = vmatpush2.msra.mxu0 0.0
      %626 = vmatprep.subr.mxu0 0.0
      %627 = vmatpush2.msra.mxu0 0.0
      %628 = vmatprep.mubr.f32.mxu0 0.0
      %629 = vmatmul.mubr.f32.gmra.mxu0 %v550
      %v630 = vpop.f32.mrf.mxu0
      %v631 = vadd.f32 0.0, %v630
      %v632 = vpop.f32.mrf.mxu0
      %633 = vmatprep.mubr.f32.mxu0 0.0
      %634 = vmatmul.mubr.f32.gmra.mxu0 %v553
      %v635 = vpop.f32.mrf.mxu0
      %v636 = vadd.f32 0.0, %v635
      %v637 = vpop.f32.mrf.mxu0
      %638 = vmatprep.mubr.f32.mxu0 0.0
      %639 = vmatmul.mubr.f32.gmra.mxu0 %v556
      %v640 = vpop.f32.mrf.mxu0
      %v641 = vadd.f32 0.0, %v640
      %v642 = vpop.f32.mrf.mxu0
      %643 = vmatprep.mubr.f32.mxu0 0.0
      %644 = vmatmul.mubr.f32.gmra.mxu0 %v559
      %v645 = vpop.f32.mrf.mxu0
      %v646 = vadd.f32 0.0, %v645
      %v647 = vpop.f32.mrf.mxu0
      %648 = vmatprep.mubr.f32.mxu0 0.0
      %649 = vmatmul.mubr.f32.gmra.mxu0 %v562
      %v650 = vpop.f32.mrf.mxu0
      %v651 = vadd.f32 0.0, %v650
      %v652 = vpop.f32.mrf.mxu0
      %653 = vdwg.mxu0
      %v654 = vadd.f32 %v533, %v631
      %v655 = vadd.f32 %v534, %v636
      %v656 = vadd.f32 %v535, %v641
      %v657 = vadd.f32 %v536, %v646
      %v658 = vadd.f32 %v537, %v651
      %659 = vst.msk [vmem:[#allocation3] sm:$0xff] %vm387, %v654
      %660 = vst.msk [vmem:[#allocation3 + $0x8] sm:$0xff] %vm387, %v655
      %661 = vst.msk [vmem:[#allocation3 + $0x10] sm:$0xff] %vm387, %v656
      %662 = vst.msk [vmem:[#allocation3 + $0x18] sm:$0xff] %vm387, %v657
      %663 = vst.msk [vmem:[#allocation3 + $0x20] sm:$0xff] %vm387, %v658
      %v664 = vld [vmem:[#allocation2 + $0x2] sm:$0xff]
      %v665 = vld [vmem:[#allocation2 + $0xa] sm:$0xff]
      %v666 = vld [vmem:[#allocation2 + $0x12] sm:$0xff]
      %v667 = vld [vmem:[#allocation2 + $0x1a] sm:$0xff]
      %v668 = vld [vmem:[#allocation2 + $0x22] sm:$0xff]
      %v669 = vld [vmem:[#allocation3] sm:$0xff]
      %v670 = vld [vmem:[#allocation3 + $0x8] sm:$0xff]
      %v671 = vld [vmem:[#allocation3 + $0x10] sm:$0xff]
      %v672 = vld [vmem:[#allocation3 + $0x18] sm:$0xff]
      %v673 = vld [vmem:[#allocation3 + $0x20] sm:$0xff]
      %s674 = scalar_lea.vmem %s3, 160
      %v675 = vld [vmem:[%s674] sm:$0xff]
      %v676 = vld [vmem:[%s674 + $0x8] sm:$0xff]
      %v677 = vld [vmem:[%s674 + $0x10] sm:$0xff]
      %v678 = vld [vmem:[%s674 + $0x18] sm:$0xff]
      %v679 = vld [vmem:[%s674 + $0x20] sm:$0xff]
      %v680 = vld [vmem:[%s674 + $0x28] sm:$0xff]
      %v681 = vld [vmem:[%s674 + $0x30] sm:$0xff]
      %v682 = vld [vmem:[%s674 + $0x38] sm:$0xff]
      %v683 = vld [vmem:[%s674 + $0x40] sm:$0xff]
      %v684 = vld [vmem:[%s674 + $0x48] sm:$0xff]
      %v686 = vsel %vm281, %v664, 0
      %v689 = vsel %vm281, %v665, 0
      %v692 = vsel %vm281, %v666, 0
      %v695 = vsel %vm281, %v667, 0
      %v698 = vsel %vm281, %v668, 0
      %700 = vmatprep.subr.mxu0 0.0
      %701 = vmatpush1.msra.mxu0 0.0
      %702 = vmatprep.subr.mxu0 0.0
      %703 = vmatpush1.msra.mxu0 0.0
      %704 = vmatprep.subr.mxu0 0.0
      %705 = vmatpush1.msra.mxu0 0.0
      %706 = vmatprep.subr.mxu0 0.0
      %707 = vmatpush1.msra.mxu0 0.0
      %708 = vmatprep.subr.mxu0 0.0
      %709 = vmatpush1.msra.mxu0 0.0
      %710 = vmatprep.subr.mxu0 0.0
      %711 = vmatpush1.msra.mxu0 0.0
      %712 = vmatprep.subr.mxu0 0.0
      %713 = vmatpush1.msra.mxu0 %v684
      %714 = vmatprep.subr.mxu0 0.0
      %715 = vmatpush1.msra.mxu0 %v683
      %716 = vmatprep.subr.mxu0 0.0
      %717 = vmatpush1.msra.mxu0 %v682
      %718 = vmatprep.subr.mxu0 0.0
      %719 = vmatpush1.msra.mxu0 %v681
      %720 = vmatprep.subr.mxu0 0.0
      %721 = vmatpush1.msra.mxu0 %v680
      %722 = vmatprep.subr.mxu0 0.0
      %723 = vmatpush1.msra.mxu0 %v679
      %724 = vmatprep.subr.mxu0 0.0
      %725 = vmatpush1.msra.mxu0 %v678
      %726 = vmatprep.subr.mxu0 0.0
      %727 = vmatpush1.msra.mxu0 %v677
      %728 = vmatprep.subr.mxu0 0.0
      %729 = vmatpush1.msra.mxu0 %v676
      %730 = vmatprep.subr.mxu0 0.0
      %731 = vmatpush1.msra.mxu0 %v675
      %732 = vmatprep.subr.mxu0 0.0
      %733 = vmatpush2.msra.mxu0 0.0
      %734 = vmatprep.subr.mxu0 0.0
      %735 = vmatpush2.msra.mxu0 0.0
      %736 = vmatprep.subr.mxu0 0.0
      %737 = vmatpush2.msra.mxu0 0.0
      %738 = vmatprep.subr.mxu0 0.0
      %739 = vmatpush2.msra.mxu0 0.0
      %740 = vmatprep.subr.mxu0 0.0
      %741 = vmatpush2.msra.mxu0 0.0
      %742 = vmatprep.subr.mxu0 0.0
      %743 = vmatpush2.msra.mxu0 0.0
      %744 = vmatprep.subr.mxu0 0.0
      %745 = vmatpush2.msra.mxu0 0.0
      %746 = vmatprep.subr.mxu0 0.0
      %747 = vmatpush2.msra.mxu0 0.0
      %748 = vmatprep.subr.mxu0 0.0
      %749 = vmatpush2.msra.mxu0 0.0
      %750 = vmatprep.subr.mxu0 0.0
      %751 = vmatpush2.msra.mxu0 0.0
      %752 = vmatprep.subr.mxu0 0.0
      %753 = vmatpush2.msra.mxu0 0.0
      %754 = vmatprep.subr.mxu0 0.0
      %755 = vmatpush2.msra.mxu0 0.0
      %756 = vmatprep.subr.mxu0 0.0
      %757 = vmatpush2.msra.mxu0 0.0
      %758 = vmatprep.subr.mxu0 0.0
      %759 = vmatpush2.msra.mxu0 0.0
      %760 = vmatprep.subr.mxu0 0.0
      %761 = vmatpush2.msra.mxu0 0.0
      %762 = vmatprep.subr.mxu0 0.0
      %763 = vmatpush2.msra.mxu0 0.0
      %764 = vmatprep.mubr.f32.mxu0 0.0
      %765 = vmatmul.mubr.f32.gmra.mxu0 %v686
      %v766 = vpop.f32.mrf.mxu0
      %v767 = vadd.f32 0.0, %v766
      %v768 = vpop.f32.mrf.mxu0
      %769 = vmatprep.mubr.f32.mxu0 0.0
      %770 = vmatmul.mubr.f32.gmra.mxu0 %v689
      %v771 = vpop.f32.mrf.mxu0
      %v772 = vadd.f32 0.0, %v771
      %v773 = vpop.f32.mrf.mxu0
      %774 = vmatprep.mubr.f32.mxu0 0.0
      %775 = vmatmul.mubr.f32.gmra.mxu0 %v692
      %v776 = vpop.f32.mrf.mxu0
      %v777 = vadd.f32 0.0, %v776
      %v778 = vpop.f32.mrf.mxu0
      %779 = vmatprep.mubr.f32.mxu0 0.0
      %780 = vmatmul.mubr.f32.gmra.mxu0 %v695
      %v781 = vpop.f32.mrf.mxu0
      %v782 = vadd.f32 0.0, %v781
      %v783 = vpop.f32.mrf.mxu0
      %784 = vmatprep.mubr.f32.mxu0 0.0
      %785 = vmatmul.mubr.f32.gmra.mxu0 %v698
      %v786 = vpop.f32.mrf.mxu0
      %v787 = vadd.f32 0.0, %v786
      %v788 = vpop.f32.mrf.mxu0
      %789 = vdwg.mxu0
      %v790 = vadd.f32 %v669, %v767
      %v791 = vadd.f32 %v670, %v772
      %v792 = vadd.f32 %v671, %v777
      %v793 = vadd.f32 %v672, %v782
      %v794 = vadd.f32 %v673, %v787
      %795 = vst.msk [vmem:[#allocation3] sm:$0xff] %vm387, %v790
      %796 = vst.msk [vmem:[#allocation3 + $0x8] sm:$0xff] %vm387, %v791
      %797 = vst.msk [vmem:[#allocation3 + $0x10] sm:$0xff] %vm387, %v792
      %798 = vst.msk [vmem:[#allocation3 + $0x18] sm:$0xff] %vm387, %v793
      %799 = vst.msk [vmem:[#allocation3 + $0x20] sm:$0xff] %vm387, %v794
      %v800 = vld [vmem:[#allocation2 + $0xa] sm:$0xff]
      %v801 = vld [vmem:[#allocation2 + $0x12] sm:$0xff]
      %v802 = vld [vmem:[#allocation2 + $0x1a] sm:$0xff]
      %v803 = vld [vmem:[#allocation2 + $0x22] sm:$0xff]
      %v804 = vld [vmem:[#allocation2 + $0x2a] sm:$0xff]
      %v805 = vld [vmem:[#allocation3] sm:$0xff]
      %v806 = vld [vmem:[#allocation3 + $0x8] sm:$0xff]
      %v807 = vld [vmem:[#allocation3 + $0x10] sm:$0xff]
      %v808 = vld [vmem:[#allocation3 + $0x18] sm:$0xff]
      %v809 = vld [vmem:[#allocation3 + $0x20] sm:$0xff]
      %s810 = scalar_lea.vmem %s3, 240
      %v811 = vld [vmem:[%s810] sm:$0xff]
      %v812 = vld [vmem:[%s810 + $0x8] sm:$0xff]
      %v813 = vld [vmem:[%s810 + $0x10] sm:$0xff]
      %v814 = vld [vmem:[%s810 + $0x18] sm:$0xff]
      %v815 = vld [vmem:[%s810 + $0x20] sm:$0xff]
      %v816 = vld [vmem:[%s810 + $0x28] sm:$0xff]
      %v817 = vld [vmem:[%s810 + $0x30] sm:$0xff]
      %v818 = vld [vmem:[%s810 + $0x38] sm:$0xff]
      %v819 = vld [vmem:[%s810 + $0x40] sm:$0xff]
      %v820 = vld [vmem:[%s810 + $0x48] sm:$0xff]
      %v822 = vsel %vm281, %v800, 0
      %v825 = vsel %vm281, %v801, 0
      %v828 = vsel %vm281, %v802, 0
      %v831 = vsel %vm281, %v803, 0
      %v834 = vsel %vm281, %v804, 0
      %836 = vmatprep.subr.mxu0 0.0
      %837 = vmatpush1.msra.mxu0 0.0
      %838 = vmatprep.subr.mxu0 0.0
      %839 = vmatpush1.msra.mxu0 0.0
      %840 = vmatprep.subr.mxu0 0.0
      %841 = vmatpush1.msra.mxu0 0.0
      %842 = vmatprep.subr.mxu0 0.0
      %843 = vmatpush1.msra.mxu0 0.0
      %844 = vmatprep.subr.mxu0 0.0
      %845 = vmatpush1.msra.mxu0 0.0
      %846 = vmatprep.subr.mxu0 0.0
      %847 = vmatpush1.msra.mxu0 0.0
      %848 = vmatprep.subr.mxu0 0.0
      %849 = vmatpush1.msra.mxu0 %v820
      %850 = vmatprep.subr.mxu0 0.0
      %851 = vmatpush1.msra.mxu0 %v819
      %852 = vmatprep.subr.mxu0 0.0
      %853 = vmatpush1.msra.mxu0 %v818
      %854 = vmatprep.subr.mxu0 0.0
      %855 = vmatpush1.msra.mxu0 %v817
      %856 = vmatprep.subr.mxu0 0.0
      %857 = vmatpush1.msra.mxu0 %v816
      %858 = vmatprep.subr.mxu0 0.0
      %859 = vmatpush1.msra.mxu0 %v815
      %860 = vmatprep.subr.mxu0 0.0
      %861 = vmatpush1.msra.mxu0 %v814
      %862 = vmatprep.subr.mxu0 0.0
      %863 = vmatpush1.msra.mxu0 %v813
      %864 = vmatprep.subr.mxu0 0.0
      %865 = vmatpush1.msra.mxu0 %v812
      %866 = vmatprep.subr.mxu0 0.0
      %867 = vmatpush1.msra.mxu0 %v811
      %868 = vmatprep.subr.mxu0 0.0
      %869 = vmatpush2.msra.mxu0 0.0
      %870 = vmatprep.subr.mxu0 0.0
      %871 = vmatpush2.msra.mxu0 0.0
      %872 = vmatprep.subr.mxu0 0.0
      %873 = vmatpush2.msra.mxu0 0.0
      %874 = vmatprep.subr.mxu0 0.0
      %875 = vmatpush2.msra.mxu0 0.0
      %876 = vmatprep.subr.mxu0 0.0
      %877 = vmatpush2.msra.mxu0 0.0
      %878 = vmatprep.subr.mxu0 0.0
      %879 = vmatpush2.msra.mxu0 0.0
      %880 = vmatprep.subr.mxu0 0.0
      %881 = vmatpush2.msra.mxu0 0.0
      %882 = vmatprep.subr.mxu0 0.0
      %883 = vmatpush2.msra.mxu0 0.0
      %884 = vmatprep.subr.mxu0 0.0
      %885 = vmatpush2.msra.mxu0 0.0
      %886 = vmatprep.subr.mxu0 0.0
      %887 = vmatpush2.msra.mxu0 0.0
      %888 = vmatprep.subr.mxu0 0.0
      %889 = vmatpush2.msra.mxu0 0.0
      %890 = vmatprep.subr.mxu0 0.0
      %891 = vmatpush2.msra.mxu0 0.0
      %892 = vmatprep.subr.mxu0 0.0
      %893 = vmatpush2.msra.mxu0 0.0
      %894 = vmatprep.subr.mxu0 0.0
      %895 = vmatpush2.msra.mxu0 0.0
      %896 = vmatprep.subr.mxu0 0.0
      %897 = vmatpush2.msra.mxu0 0.0
      %898 = vmatprep.subr.mxu0 0.0
      %899 = vmatpush2.msra.mxu0 0.0
      %900 = vmatprep.mubr.f32.mxu0 0.0
      %901 = vmatmul.mubr.f32.gmra.mxu0 %v822
      %v902 = vpop.f32.mrf.mxu0
      %v903 = vadd.f32 0.0, %v902
      %v904 = vpop.f32.mrf.mxu0
      %905 = vmatprep.mubr.f32.mxu0 0.0
      %906 = vmatmul.mubr.f32.gmra.mxu0 %v825
      %v907 = vpop.f32.mrf.mxu0
      %v908 = vadd.f32 0.0, %v907
      %v909 = vpop.f32.mrf.mxu0
      %910 = vmatprep.mubr.f32.mxu0 0.0
      %911 = vmatmul.mubr.f32.gmra.mxu0 %v828
      %v912 = vpop.f32.mrf.mxu0
      %v913 = vadd.f32 0.0, %v912
      %v914 = vpop.f32.mrf.mxu0
      %915 = vmatprep.mubr.f32.mxu0 0.0
      %916 = vmatmul.mubr.f32.gmra.mxu0 %v831
      %v917 = vpop.f32.mrf.mxu0
      %v918 = vadd.f32 0.0, %v917
      %v919 = vpop.f32.mrf.mxu0
      %920 = vmatprep.mubr.f32.mxu0 0.0
      %921 = vmatmul.mubr.f32.gmra.mxu0 %v834
      %v922 = vpop.f32.mrf.mxu0
      %v923 = vadd.f32 0.0, %v922
      %v924 = vpop.f32.mrf.mxu0
      %925 = vdwg.mxu0
      %v926 = vadd.f32 %v805, %v903
      %v927 = vadd.f32 %v806, %v908
      %v928 = vadd.f32 %v807, %v913
      %v929 = vadd.f32 %v808, %v918
      %v930 = vadd.f32 %v809, %v923
      %931 = vst.msk [vmem:[#allocation3] sm:$0xff] %vm387, %v926
      %932 = vst.msk [vmem:[#allocation3 + $0x8] sm:$0xff] %vm387, %v927
      %933 = vst.msk [vmem:[#allocation3 + $0x10] sm:$0xff] %vm387, %v928
      %934 = vst.msk [vmem:[#allocation3 + $0x18] sm:$0xff] %vm387, %v929
      %935 = vst.msk [vmem:[#allocation3 + $0x20] sm:$0xff] %vm387, %v930
      %v936 = vld [vmem:[#allocation2 + $0xb] sm:$0xff]
      %v937 = vld [vmem:[#allocation2 + $0x13] sm:$0xff]
      %v938 = vld [vmem:[#allocation2 + $0x1b] sm:$0xff]
      %v939 = vld [vmem:[#allocation2 + $0x23] sm:$0xff]
      %v940 = vld [vmem:[#allocation2 + $0x2b] sm:$0xff]
      %v941 = vld [vmem:[#allocation3] sm:$0xff]
      %v942 = vld [vmem:[#allocation3 + $0x8] sm:$0xff]
      %v943 = vld [vmem:[#allocation3 + $0x10] sm:$0xff]
      %v944 = vld [vmem:[#allocation3 + $0x18] sm:$0xff]
      %v945 = vld [vmem:[#allocation3 + $0x20] sm:$0xff]
      %s946 = scalar_lea.vmem %s3, 320
      %v947 = vld [vmem:[%s946] sm:$0xff]
      %v948 = vld [vmem:[%s946 + $0x8] sm:$0xff]
      %v949 = vld [vmem:[%s946 + $0x10] sm:$0xff]
      %v950 = vld [vmem:[%s946 + $0x18] sm:$0xff]
      %v951 = vld [vmem:[%s946 + $0x20] sm:$0xff]
      %v952 = vld [vmem:[%s946 + $0x28] sm:$0xff]
      %v953 = vld [vmem:[%s946 + $0x30] sm:$0xff]
      %v954 = vld [vmem:[%s946 + $0x38] sm:$0xff]
      %v955 = vld [vmem:[%s946 + $0x40] sm:$0xff]
      %v956 = vld [vmem:[%s946 + $0x48] sm:$0xff]
      %v958 = vsel %vm281, %v936, 0
      %v961 = vsel %vm281, %v937, 0
      %v964 = vsel %vm281, %v938, 0
      %v967 = vsel %vm281, %v939, 0
      %v970 = vsel %vm281, %v940, 0
      %972 = vmatprep.subr.mxu0 0.0
      %973 = vmatpush1.msra.mxu0 0.0
      %974 = vmatprep.subr.mxu0 0.0
      %975 = vmatpush1.msra.mxu0 0.0
      %976 = vmatprep.subr.mxu0 0.0
      %977 = vmatpush1.msra.mxu0 0.0
      %978 = vmatprep.subr.mxu0 0.0
      %979 = vmatpush1.msra.mxu0 0.0
      %980 = vmatprep.subr.mxu0 0.0
      %981 = vmatpush1.msra.mxu0 0.0
      %982 = vmatprep.subr.mxu0 0.0
      %983 = vmatpush1.msra.mxu0 0.0
      %984 = vmatprep.subr.mxu0 0.0
      %985 = vmatpush1.msra.mxu0 %v956
      %986 = vmatprep.subr.mxu0 0.0
      %987 = vmatpush1.msra.mxu0 %v955
      %988 = vmatprep.subr.mxu0 0.0
      %989 = vmatpush1.msra.mxu0 %v954
      %990 = vmatprep.subr.mxu0 0.0
      %991 = vmatpush1.msra.mxu0 %v953
      %992 = vmatprep.subr.mxu0 0.0
      %993 = vmatpush1.msra.mxu0 %v952
      %994 = vmatprep.subr.mxu0 0.0
      %995 = vmatpush1.msra.mxu0 %v951
      %996 = vmatprep.subr.mxu0 0.0
      %997 = vmatpush1.msra.mxu0 %v950
      %998 = vmatprep.subr.mxu0 0.0
      %999 = vmatpush1.msra.mxu0 %v949
      %1000 = vmatprep.subr.mxu0 0.0
      %1001 = vmatpush1.msra.mxu0 %v948
      %1002 = vmatprep.subr.mxu0 0.0
      %1003 = vmatpush1.msra.mxu0 %v947
      %1004 = vmatprep.subr.mxu0 0.0
      %1005 = vmatpush2.msra.mxu0 0.0
      %1006 = vmatprep.subr.mxu0 0.0
      %1007 = vmatpush2.msra.mxu0 0.0
      %1008 = vmatprep.subr.mxu0 0.0
      %1009 = vmatpush2.msra.mxu0 0.0
      %1010 = vmatprep.subr.mxu0 0.0
      %1011 = vmatpush2.msra.mxu0 0.0
      %1012 = vmatprep.subr.mxu0 0.0
      %1013 = vmatpush2.msra.mxu0 0.0
      %1014 = vmatprep.subr.mxu0 0.0
      %1015 = vmatpush2.msra.mxu0 0.0
      %1016 = vmatprep.subr.mxu0 0.0
      %1017 = vmatpush2.msra.mxu0 0.0
      %1018 = vmatprep.subr.mxu0 0.0
      %1019 = vmatpush2.msra.mxu0 0.0
      %1020 = vmatprep.subr.mxu0 0.0
      %1021 = vmatpush2.msra.mxu0 0.0
      %1022 = vmatprep.subr.mxu0 0.0
      %1023 = vmatpush2.msra.mxu0 0.0
      %1024 = vmatprep.subr.mxu0 0.0
      %1025 = vmatpush2.msra.mxu0 0.0
      %1026 = vmatprep.subr.mxu0 0.0
      %1027 = vmatpush2.msra.mxu0 0.0
      %1028 = vmatprep.subr.mxu0 0.0
      %1029 = vmatpush2.msra.mxu0 0.0
      %1030 = vmatprep.subr.mxu0 0.0
      %1031 = vmatpush2.msra.mxu0 0.0
      %1032 = vmatprep.subr.mxu0 0.0
      %1033 = vmatpush2.msra.mxu0 0.0
      %1034 = vmatprep.subr.mxu0 0.0
      %1035 = vmatpush2.msra.mxu0 0.0
      %1036 = vmatprep.mubr.f32.mxu0 0.0
      %1037 = vmatmul.mubr.f32.gmra.mxu0 %v958
      %v1038 = vpop.f32.mrf.mxu0
      %v1039 = vadd.f32 0.0, %v1038
      %v1040 = vpop.f32.mrf.mxu0
      %1041 = vmatprep.mubr.f32.mxu0 0.0
      %1042 = vmatmul.mubr.f32.gmra.mxu0 %v961
      %v1043 = vpop.f32.mrf.mxu0
      %v1044 = vadd.f32 0.0, %v1043
      %v1045 = vpop.f32.mrf.mxu0
      %1046 = vmatprep.mubr.f32.mxu0 0.0
      %1047 = vmatmul.mubr.f32.gmra.mxu0 %v964
      %v1048 = vpop.f32.mrf.mxu0
      %v1049 = vadd.f32 0.0, %v1048
      %v1050 = vpop.f32.mrf.mxu0
      %1051 = vmatprep.mubr.f32.mxu0 0.0
      %1052 = vmatmul.mubr.f32.gmra.mxu0 %v967
      %v1053 = vpop.f32.mrf.mxu0
      %v1054 = vadd.f32 0.0, %v1053
      %v1055 = vpop.f32.mrf.mxu0
      %1056 = vmatprep.mubr.f32.mxu0 0.0
      %1057 = vmatmul.mubr.f32.gmra.mxu0 %v970
      %v1058 = vpop.f32.mrf.mxu0
      %v1059 = vadd.f32 0.0, %v1058
      %v1060 = vpop.f32.mrf.mxu0
      %1061 = vdwg.mxu0
      %v1062 = vadd.f32 %v941, %v1039
      %v1063 = vadd.f32 %v942, %v1044
      %v1064 = vadd.f32 %v943, %v1049
      %v1065 = vadd.f32 %v944, %v1054
      %v1066 = vadd.f32 %v945, %v1059
      %1067 = vst.msk [vmem:[#allocation3] sm:$0xff] %vm387, %v1062
      %1068 = vst.msk [vmem:[#allocation3 + $0x8] sm:$0xff] %vm387, %v1063
      %1069 = vst.msk [vmem:[#allocation3 + $0x10] sm:$0xff] %vm387, %v1064
      %1070 = vst.msk [vmem:[#allocation3 + $0x18] sm:$0xff] %vm387, %v1065
      %1071 = vst.msk [vmem:[#allocation3 + $0x20] sm:$0xff] %vm387, %v1066
      %v1072 = vld [vmem:[#allocation2 + $0xc] sm:$0xff]
      %v1073 = vld [vmem:[#allocation2 + $0x14] sm:$0xff]
      %v1074 = vld [vmem:[#allocation2 + $0x1c] sm:$0xff]
      %v1075 = vld [vmem:[#allocation2 + $0x24] sm:$0xff]
      %v1076 = vld [vmem:[#allocation2 + $0x2c] sm:$0xff]
      %v1077 = vld [vmem:[#allocation3] sm:$0xff]
      %v1078 = vld [vmem:[#allocation3 + $0x8] sm:$0xff]
      %v1079 = vld [vmem:[#allocation3 + $0x10] sm:$0xff]
      %v1080 = vld [vmem:[#allocation3 + $0x18] sm:$0xff]
      %v1081 = vld [vmem:[#allocation3 + $0x20] sm:$0xff]
      %s1082 = scalar_lea.vmem %s3, 400
      %v1083 = vld [vmem:[%s1082] sm:$0xff]
      %v1084 = vld [vmem:[%s1082 + $0x8] sm:$0xff]
      %v1085 = vld [vmem:[%s1082 + $0x10] sm:$0xff]
      %v1086 = vld [vmem:[%s1082 + $0x18] sm:$0xff]
      %v1087 = vld [vmem:[%s1082 + $0x20] sm:$0xff]
      %v1088 = vld [vmem:[%s1082 + $0x28] sm:$0xff]
      %v1089 = vld [vmem:[%s1082 + $0x30] sm:$0xff]
      %v1090 = vld [vmem:[%s1082 + $0x38] sm:$0xff]
      %v1091 = vld [vmem:[%s1082 + $0x40] sm:$0xff]
      %v1092 = vld [vmem:[%s1082 + $0x48] sm:$0xff]
      %v1094 = vsel %vm281, %v1072, 0
      %v1097 = vsel %vm281, %v1073, 0
      %v1100 = vsel %vm281, %v1074, 0
      %v1103 = vsel %vm281, %v1075, 0
      %v1106 = vsel %vm281, %v1076, 0
      %1108 = vmatprep.subr.mxu0 0.0
      %1109 = vmatpush1.msra.mxu0 0.0
      %1110 = vmatprep.subr.mxu0 0.0
      %1111 = vmatpush1.msra.mxu0 0.0
      %1112 = vmatprep.subr.mxu0 0.0
      %1113 = vmatpush1.msra.mxu0 0.0
      %1114 = vmatprep.subr.mxu0 0.0
      %1115 = vmatpush1.msra.mxu0 0.0
      %1116 = vmatprep.subr.mxu0 0.0
      %1117 = vmatpush1.msra.mxu0 0.0
      %1118 = vmatprep.subr.mxu0 0.0
      %1119 = vmatpush1.msra.mxu0 0.0
      %1120 = vmatprep.subr.mxu0 0.0
      %1121 = vmatpush1.msra.mxu0 %v1092
      %1122 = vmatprep.subr.mxu0 0.0
      %1123 = vmatpush1.msra.mxu0 %v1091
      %1124 = vmatprep.subr.mxu0 0.0
      %1125 = vmatpush1.msra.mxu0 %v1090
      %1126 = vmatprep.subr.mxu0 0.0
      %1127 = vmatpush1.msra.mxu0 %v1089
      %1128 = vmatprep.subr.mxu0 0.0
      %1129 = vmatpush1.msra.mxu0 %v1088
      %1130 = vmatprep.subr.mxu0 0.0
      %1131 = vmatpush1.msra.mxu0 %v1087
      %1132 = vmatprep.subr.mxu0 0.0
      %1133 = vmatpush1.msra.mxu0 %v1086
      %1134 = vmatprep.subr.mxu0 0.0
      %1135 = vmatpush1.msra.mxu0 %v1085
      %1136 = vmatprep.subr.mxu0 0.0
      %1137 = vmatpush1.msra.mxu0 %v1084
      %1138 = vmatprep.subr.mxu0 0.0
      %1139 = vmatpush1.msra.mxu0 %v1083
      %1140 = vmatprep.subr.mxu0 0.0
      %1141 = vmatpush2.msra.mxu0 0.0
      %1142 = vmatprep.subr.mxu0 0.0
      %1143 = vmatpush2.msra.mxu0 0.0
      %1144 = vmatprep.subr.mxu0 0.0
      %1145 = vmatpush2.msra.mxu0 0.0
      %1146 = vmatprep.subr.mxu0 0.0
      %1147 = vmatpush2.msra.mxu0 0.0
      %1148 = vmatprep.subr.mxu0 0.0
      %1149 = vmatpush2.msra.mxu0 0.0
      %1150 = vmatprep.subr.mxu0 0.0
      %1151 = vmatpush2.msra.mxu0 0.0
      %1152 = vmatprep.subr.mxu0 0.0
      %1153 = vmatpush2.msra.mxu0 0.0
      %1154 = vmatprep.subr.mxu0 0.0
      %1155 = vmatpush2.msra.mxu0 0.0
      %1156 = vmatprep.subr.mxu0 0.0
      %1157 = vmatpush2.msra.mxu0 0.0
      %1158 = vmatprep.subr.mxu0 0.0
      %1159 = vmatpush2.msra.mxu0 0.0
      %1160 = vmatprep.subr.mxu0 0.0
      %1161 = vmatpush2.msra.mxu0 0.0
      %1162 = vmatprep.subr.mxu0 0.0
      %1163 = vmatpush2.msra.mxu0 0.0
      %1164 = vmatprep.subr.mxu0 0.0
      %1165 = vmatpush2.msra.mxu0 0.0
      %1166 = vmatprep.subr.mxu0 0.0
      %1167 = vmatpush2.msra.mxu0 0.0
      %1168 = vmatprep.subr.mxu0 0.0
      %1169 = vmatpush2.msra.mxu0 0.0
      %1170 = vmatprep.subr.mxu0 0.0
      %1171 = vmatpush2.msra.mxu0 0.0
      %1172 = vmatprep.mubr.f32.mxu0 0.0
      %1173 = vmatmul.mubr.f32.gmra.mxu0 %v1094
      %v1174 = vpop.f32.mrf.mxu0
      %v1175 = vadd.f32 0.0, %v1174
      %v1176 = vpop.f32.mrf.mxu0
      %1177 = vmatprep.mubr.f32.mxu0 0.0
      %1178 = vmatmul.mubr.f32.gmra.mxu0 %v1097
      %v1179 = vpop.f32.mrf.mxu0
      %v1180 = vadd.f32 0.0, %v1179
      %v1181 = vpop.f32.mrf.mxu0
      %1182 = vmatprep.mubr.f32.mxu0 0.0
      %1183 = vmatmul.mubr.f32.gmra.mxu0 %v1100
      %v1184 = vpop.f32.mrf.mxu0
      %v1185 = vadd.f32 0.0, %v1184
      %v1186 = vpop.f32.mrf.mxu0
      %1187 = vmatprep.mubr.f32.mxu0 0.0
      %1188 = vmatmul.mubr.f32.gmra.mxu0 %v1103
      %v1189 = vpop.f32.mrf.mxu0
      %v1190 = vadd.f32 0.0, %v1189
      %v1191 = vpop.f32.mrf.mxu0
      %1192 = vmatprep.mubr.f32.mxu0 0.0
      %1193 = vmatmul.mubr.f32.gmra.mxu0 %v1106
      %v1194 = vpop.f32.mrf.mxu0
      %v1195 = vadd.f32 0.0, %v1194
      %v1196 = vpop.f32.mrf.mxu0
      %1197 = vdwg.mxu0
      %v1198 = vadd.f32 %v1077, %v1175
      %v1199 = vadd.f32 %v1078, %v1180
      %v1200 = vadd.f32 %v1079, %v1185
      %v1201 = vadd.f32 %v1080, %v1190
      %v1202 = vadd.f32 %v1081, %v1195
      %1203 = vst.msk [vmem:[#allocation3] sm:$0xff] %vm387, %v1198
      %1204 = vst.msk [vmem:[#allocation3 + $0x8] sm:$0xff] %vm387, %v1199
      %1205 = vst.msk [vmem:[#allocation3 + $0x10] sm:$0xff] %vm387, %v1200
      %1206 = vst.msk [vmem:[#allocation3 + $0x18] sm:$0xff] %vm387, %v1201
      %1207 = vst.msk [vmem:[#allocation3 + $0x20] sm:$0xff] %vm387, %v1202
      %v1208 = vld [vmem:[#allocation2 + $0x14] sm:$0xff]
      %v1209 = vld [vmem:[#allocation2 + $0x1c] sm:$0xff]
      %v1210 = vld [vmem:[#allocation2 + $0x24] sm:$0xff]
      %v1211 = vld [vmem:[#allocation2 + $0x2c] sm:$0xff]
      %v1212 = vld [vmem:[#allocation2 + $0x34] sm:$0xff]
      %v1213 = vld [vmem:[#allocation3] sm:$0xff]
      %v1214 = vld [vmem:[#allocation3 + $0x8] sm:$0xff]
      %v1215 = vld [vmem:[#allocation3 + $0x10] sm:$0xff]
      %v1216 = vld [vmem:[#allocation3 + $0x18] sm:$0xff]
      %v1217 = vld [vmem:[#allocation3 + $0x20] sm:$0xff]
      %s1218 = scalar_lea.vmem %s3, 480
      %v1219 = vld [vmem:[%s1218] sm:$0xff]
      %v1220 = vld [vmem:[%s1218 + $0x8] sm:$0xff]
      %v1221 = vld [vmem:[%s1218 + $0x10] sm:$0xff]
      %v1222 = vld [vmem:[%s1218 + $0x18] sm:$0xff]
      %v1223 = vld [vmem:[%s1218 + $0x20] sm:$0xff]
      %v1224 = vld [vmem:[%s1218 + $0x28] sm:$0xff]
      %v1225 = vld [vmem:[%s1218 + $0x30] sm:$0xff]
      %v1226 = vld [vmem:[%s1218 + $0x38] sm:$0xff]
      %v1227 = vld [vmem:[%s1218 + $0x40] sm:$0xff]
      %v1228 = vld [vmem:[%s1218 + $0x48] sm:$0xff]
      %v1230 = vsel %vm281, %v1208, 0
      %v1233 = vsel %vm281, %v1209, 0
      %v1236 = vsel %vm281, %v1210, 0
      %v1239 = vsel %vm281, %v1211, 0
      %v1242 = vsel %vm281, %v1212, 0
      %1244 = vmatprep.subr.mxu0 0.0
      %1245 = vmatpush1.msra.mxu0 0.0
      %1246 = vmatprep.subr.mxu0 0.0
      %1247 = vmatpush1.msra.mxu0 0.0
      %1248 = vmatprep.subr.mxu0 0.0
      %1249 = vmatpush1.msra.mxu0 0.0
      %1250 = vmatprep.subr.mxu0 0.0
      %1251 = vmatpush1.msra.mxu0 0.0
      %1252 = vmatprep.subr.mxu0 0.0
      %1253 = vmatpush1.msra.mxu0 0.0
      %1254 = vmatprep.subr.mxu0 0.0
      %1255 = vmatpush1.msra.mxu0 0.0
      %1256 = vmatprep.subr.mxu0 0.0
      %1257 = vmatpush1.msra.mxu0 %v1228
      %1258 = vmatprep.subr.mxu0 0.0
      %1259 = vmatpush1.msra.mxu0 %v1227
      %1260 = vmatprep.subr.mxu0 0.0
      %1261 = vmatpush1.msra.mxu0 %v1226
      %1262 = vmatprep.subr.mxu0 0.0
      %1263 = vmatpush1.msra.mxu0 %v1225
      %1264 = vmatprep.subr.mxu0 0.0
      %1265 = vmatpush1.msra.mxu0 %v1224
      %1266 = vmatprep.subr.mxu0 0.0
      %1267 = vmatpush1.msra.mxu0 %v1223
      %1268 = vmatprep.subr.mxu0 0.0
      %1269 = vmatpush1.msra.mxu0 %v1222
      %1270 = vmatprep.subr.mxu0 0.0
      %1271 = vmatpush1.msra.mxu0 %v1221
      %1272 = vmatprep.subr.mxu0 0.0
      %1273 = vmatpush1.msra.mxu0 %v1220
      %1274 = vmatprep.subr.mxu0 0.0
      %1275 = vmatpush1.msra.mxu0 %v1219
      %1276 = vmatprep.subr.mxu0 0.0
      %1277 = vmatpush2.msra.mxu0 0.0
      %1278 = vmatprep.subr.mxu0 0.0
      %1279 = vmatpush2.msra.mxu0 0.0
      %1280 = vmatprep.subr.mxu0 0.0
      %1281 = vmatpush2.msra.mxu0 0.0
      %1282 = vmatprep.subr.mxu0 0.0
      %1283 = vmatpush2.msra.mxu0 0.0
      %1284 = vmatprep.subr.mxu0 0.0
      %1285 = vmatpush2.msra.mxu0 0.0
      %1286 = vmatprep.subr.mxu0 0.0
      %1287 = vmatpush2.msra.mxu0 0.0
      %1288 = vmatprep.subr.mxu0 0.0
      %1289 = vmatpush2.msra.mxu0 0.0
      %1290 = vmatprep.subr.mxu0 0.0
      %1291 = vmatpush2.msra.mxu0 0.0
      %1292 = vmatprep.subr.mxu0 0.0
      %1293 = vmatpush2.msra.mxu0 0.0
      %1294 = vmatprep.subr.mxu0 0.0
      %1295 = vmatpush2.msra.mxu0 0.0
      %1296 = vmatprep.subr.mxu0 0.0
      %1297 = vmatpush2.msra.mxu0 0.0
      %1298 = vmatprep.subr.mxu0 0.0
      %1299 = vmatpush2.msra.mxu0 0.0
      %1300 = vmatprep.subr.mxu0 0.0
      %1301 = vmatpush2.msra.mxu0 0.0
      %1302 = vmatprep.subr.mxu0 0.0
      %1303 = vmatpush2.msra.mxu0 0.0
      %1304 = vmatprep.subr.mxu0 0.0
      %1305 = vmatpush2.msra.mxu0 0.0
      %1306 = vmatprep.subr.mxu0 0.0
      %1307 = vmatpush2.msra.mxu0 0.0
      %1308 = vmatprep.mubr.f32.mxu0 0.0
      %1309 = vmatmul.mubr.f32.gmra.mxu0 %v1230
      %v1310 = vpop.f32.mrf.mxu0
      %v1311 = vadd.f32 0.0, %v1310
      %v1312 = vpop.f32.mrf.mxu0
      %1313 = vmatprep.mubr.f32.mxu0 0.0
      %1314 = vmatmul.mubr.f32.gmra.mxu0 %v1233
      %v1315 = vpop.f32.mrf.mxu0
      %v1316 = vadd.f32 0.0, %v1315
      %v1317 = vpop.f32.mrf.mxu0
      %1318 = vmatprep.mubr.f32.mxu0 0.0
      %1319 = vmatmul.mubr.f32.gmra.mxu0 %v1236
      %v1320 = vpop.f32.mrf.mxu0
      %v1321 = vadd.f32 0.0, %v1320
      %v1322 = vpop.f32.mrf.mxu0
      %1323 = vmatprep.mubr.f32.mxu0 0.0
      %1324 = vmatmul.mubr.f32.gmra.mxu0 %v1239
      %v1325 = vpop.f32.mrf.mxu0
      %v1326 = vadd.f32 0.0, %v1325
      %v1327 = vpop.f32.mrf.mxu0
      %1328 = vmatprep.mubr.f32.mxu0 0.0
      %1329 = vmatmul.mubr.f32.gmra.mxu0 %v1242
      %v1330 = vpop.f32.mrf.mxu0
      %v1331 = vadd.f32 0.0, %v1330
      %v1332 = vpop.f32.mrf.mxu0
      %1333 = vdwg.mxu0
      %v1334 = vadd.f32 %v1213, %v1311
      %v1335 = vadd.f32 %v1214, %v1316
      %v1336 = vadd.f32 %v1215, %v1321
      %v1337 = vadd.f32 %v1216, %v1326
      %v1338 = vadd.f32 %v1217, %v1331
      %1339 = vst.msk [vmem:[#allocation3] sm:$0xff] %vm387, %v1334
      %1340 = vst.msk [vmem:[#allocation3 + $0x8] sm:$0xff] %vm387, %v1335
      %1341 = vst.msk [vmem:[#allocation3 + $0x10] sm:$0xff] %vm387, %v1336
      %1342 = vst.msk [vmem:[#allocation3 + $0x18] sm:$0xff] %vm387, %v1337
      %1343 = vst.msk [vmem:[#allocation3 + $0x20] sm:$0xff] %vm387, %v1338
      %v1344 = vld [vmem:[#allocation2 + $0x15] sm:$0xff]
      %v1345 = vld [vmem:[#allocation2 + $0x1d] sm:$0xff]
      %v1346 = vld [vmem:[#allocation2 + $0x25] sm:$0xff]
      %v1347 = vld [vmem:[#allocation2 + $0x2d] sm:$0xff]
      %v1348 = vld [vmem:[#allocation2 + $0x35] sm:$0xff]
      %v1349 = vld [vmem:[#allocation3] sm:$0xff]
      %v1350 = vld [vmem:[#allocation3 + $0x8] sm:$0xff]
      %v1351 = vld [vmem:[#allocation3 + $0x10] sm:$0xff]
      %v1352 = vld [vmem:[#allocation3 + $0x18] sm:$0xff]
      %v1353 = vld [vmem:[#allocation3 + $0x20] sm:$0xff]
      %s1354 = scalar_lea.vmem %s3, 560
      %v1355 = vld [vmem:[%s1354] sm:$0xff]
      %v1356 = vld [vmem:[%s1354 + $0x8] sm:$0xff]
      %v1357 = vld [vmem:[%s1354 + $0x10] sm:$0xff]
      %v1358 = vld [vmem:[%s1354 + $0x18] sm:$0xff]
      %v1359 = vld [vmem:[%s1354 + $0x20] sm:$0xff]
      %v1360 = vld [vmem:[%s1354 + $0x28] sm:$0xff]
      %v1361 = vld [vmem:[%s1354 + $0x30] sm:$0xff]
      %v1362 = vld [vmem:[%s1354 + $0x38] sm:$0xff]
      %v1363 = vld [vmem:[%s1354 + $0x40] sm:$0xff]
      %v1364 = vld [vmem:[%s1354 + $0x48] sm:$0xff]
      %v1366 = vsel %vm281, %v1344, 0
      %v1369 = vsel %vm281, %v1345, 0
      %v1372 = vsel %vm281, %v1346, 0
      %v1375 = vsel %vm281, %v1347, 0
      %v1378 = vsel %vm281, %v1348, 0
      %1380 = vmatprep.subr.mxu0 0.0
      %1381 = vmatpush1.msra.mxu0 0.0
      %1382 = vmatprep.subr.mxu0 0.0
      %1383 = vmatpush1.msra.mxu0 0.0
      %1384 = vmatprep.subr.mxu0 0.0
      %1385 = vmatpush1.msra.mxu0 0.0
      %1386 = vmatprep.subr.mxu0 0.0
      %1387 = vmatpush1.msra.mxu0 0.0
      %1388 = vmatprep.subr.mxu0 0.0
      %1389 = vmatpush1.msra.mxu0 0.0
      %1390 = vmatprep.subr.mxu0 0.0
      %1391 = vmatpush1.msra.mxu0 0.0
      %1392 = vmatprep.subr.mxu0 0.0
      %1393 = vmatpush1.msra.mxu0 %v1364
      %1394 = vmatprep.subr.mxu0 0.0
      %1395 = vmatpush1.msra.mxu0 %v1363
      %1396 = vmatprep.subr.mxu0 0.0
      %1397 = vmatpush1.msra.mxu0 %v1362
      %1398 = vmatprep.subr.mxu0 0.0
      %1399 = vmatpush1.msra.mxu0 %v1361
      %1400 = vmatprep.subr.mxu0 0.0
      %1401 = vmatpush1.msra.mxu0 %v1360
      %1402 = vmatprep.subr.mxu0 0.0
      %1403 = vmatpush1.msra.mxu0 %v1359
      %1404 = vmatprep.subr.mxu0 0.0
      %1405 = vmatpush1.msra.mxu0 %v1358
      %1406 = vmatprep.subr.mxu0 0.0
      %1407 = vmatpush1.msra.mxu0 %v1357
      %1408 = vmatprep.subr.mxu0 0.0
      %1409 = vmatpush1.msra.mxu0 %v1356
      %1410 = vmatprep.subr.mxu0 0.0
      %1411 = vmatpush1.msra.mxu0 %v1355
      %1412 = vmatprep.subr.mxu0 0.0
      %1413 = vmatpush2.msra.mxu0 0.0
      %1414 = vmatprep.subr.mxu0 0.0
      %1415 = vmatpush2.msra.mxu0 0.0
      %1416 = vmatprep.subr.mxu0 0.0
      %1417 = vmatpush2.msra.mxu0 0.0
      %1418 = vmatprep.subr.mxu0 0.0
      %1419 = vmatpush2.msra.mxu0 0.0
      %1420 = vmatprep.subr.mxu0 0.0
      %1421 = vmatpush2.msra.mxu0 0.0
      %1422 = vmatprep.subr.mxu0 0.0
      %1423 = vmatpush2.msra.mxu0 0.0
      %1424 = vmatprep.subr.mxu0 0.0
      %1425 = vmatpush2.msra.mxu0 0.0
      %1426 = vmatprep.subr.mxu0 0.0
      %1427 = vmatpush2.msra.mxu0 0.0
      %1428 = vmatprep.subr.mxu0 0.0
      %1429 = vmatpush2.msra.mxu0 0.0
      %1430 = vmatprep.subr.mxu0 0.0
      %1431 = vmatpush2.msra.mxu0 0.0
      %1432 = vmatprep.subr.mxu0 0.0
      %1433 = vmatpush2.msra.mxu0 0.0
      %1434 = vmatprep.subr.mxu0 0.0
      %1435 = vmatpush2.msra.mxu0 0.0
      %1436 = vmatprep.subr.mxu0 0.0
      %1437 = vmatpush2.msra.mxu0 0.0
      %1438 = vmatprep.subr.mxu0 0.0
      %1439 = vmatpush2.msra.mxu0 0.0
      %1440 = vmatprep.subr.mxu0 0.0
      %1441 = vmatpush2.msra.mxu0 0.0
      %1442 = vmatprep.subr.mxu0 0.0
      %1443 = vmatpush2.msra.mxu0 0.0
      %1444 = vmatprep.mubr.f32.mxu0 0.0
      %1445 = vmatmul.mubr.f32.gmra.mxu0 %v1366
      %v1446 = vpop.f32.mrf.mxu0
      %v1447 = vadd.f32 0.0, %v1446
      %v1448 = vpop.f32.mrf.mxu0
      %1449 = vmatprep.mubr.f32.mxu0 0.0
      %1450 = vmatmul.mubr.f32.gmra.mxu0 %v1369
      %v1451 = vpop.f32.mrf.mxu0
      %v1452 = vadd.f32 0.0, %v1451
      %v1453 = vpop.f32.mrf.mxu0
      %1454 = vmatprep.mubr.f32.mxu0 0.0
      %1455 = vmatmul.mubr.f32.gmra.mxu0 %v1372
      %v1456 = vpop.f32.mrf.mxu0
      %v1457 = vadd.f32 0.0, %v1456
      %v1458 = vpop.f32.mrf.mxu0
      %1459 = vmatprep.mubr.f32.mxu0 0.0
      %1460 = vmatmul.mubr.f32.gmra.mxu0 %v1375
      %v1461 = vpop.f32.mrf.mxu0
      %v1462 = vadd.f32 0.0, %v1461
      %v1463 = vpop.f32.mrf.mxu0
      %1464 = vmatprep.mubr.f32.mxu0 0.0
      %1465 = vmatmul.mubr.f32.gmra.mxu0 %v1378
      %v1466 = vpop.f32.mrf.mxu0
      %v1467 = vadd.f32 0.0, %v1466
      %v1468 = vpop.f32.mrf.mxu0
      %1469 = vdwg.mxu0
      %v1470 = vadd.f32 %v1349, %v1447
      %v1471 = vadd.f32 %v1350, %v1452
      %v1472 = vadd.f32 %v1351, %v1457
      %v1473 = vadd.f32 %v1352, %v1462
      %v1474 = vadd.f32 %v1353, %v1467
      %1475 = vst.msk [vmem:[#allocation3] sm:$0xff] %vm387, %v1470
      %1476 = vst.msk [vmem:[#allocation3 + $0x8] sm:$0xff] %vm387, %v1471
      %1477 = vst.msk [vmem:[#allocation3 + $0x10] sm:$0xff] %vm387, %v1472
      %1478 = vst.msk [vmem:[#allocation3 + $0x18] sm:$0xff] %vm387, %v1473
      %1479 = vst.msk [vmem:[#allocation3 + $0x20] sm:$0xff] %vm387, %v1474
      %v1480 = vld [vmem:[#allocation2 + $0x16] sm:$0xff]
      %v1481 = vld [vmem:[#allocation2 + $0x1e] sm:$0xff]
      %v1482 = vld [vmem:[#allocation2 + $0x26] sm:$0xff]
      %v1483 = vld [vmem:[#allocation2 + $0x2e] sm:$0xff]
      %v1484 = vld [vmem:[#allocation2 + $0x36] sm:$0xff]
      %v1485 = vld [vmem:[#allocation3] sm:$0xff]
      %v1486 = vld [vmem:[#allocation3 + $0x8] sm:$0xff]
      %v1487 = vld [vmem:[#allocation3 + $0x10] sm:$0xff]
      %v1488 = vld [vmem:[#allocation3 + $0x18] sm:$0xff]
      %v1489 = vld [vmem:[#allocation3 + $0x20] sm:$0xff]
      %s1490 = scalar_lea.vmem %s3, 640
      %v1491 = vld [vmem:[%s1490] sm:$0xff]
      %v1492 = vld [vmem:[%s1490 + $0x8] sm:$0xff]
      %v1493 = vld [vmem:[%s1490 + $0x10] sm:$0xff]
      %v1494 = vld [vmem:[%s1490 + $0x18] sm:$0xff]
      %v1495 = vld [vmem:[%s1490 + $0x20] sm:$0xff]
      %v1496 = vld [vmem:[%s1490 + $0x28] sm:$0xff]
      %v1497 = vld [vmem:[%s1490 + $0x30] sm:$0xff]
      %v1498 = vld [vmem:[%s1490 + $0x38] sm:$0xff]
      %v1499 = vld [vmem:[%s1490 + $0x40] sm:$0xff]
      %v1500 = vld [vmem:[%s1490 + $0x48] sm:$0xff]
      %v1502 = vsel %vm281, %v1480, 0
      %v1505 = vsel %vm281, %v1481, 0
      %v1508 = vsel %vm281, %v1482, 0
      %v1511 = vsel %vm281, %v1483, 0
      %v1514 = vsel %vm281, %v1484, 0
      %1516 = vmatprep.subr.mxu0 0.0
      %1517 = vmatpush1.msra.mxu0 0.0
      %1518 = vmatprep.subr.mxu0 0.0
      %1519 = vmatpush1.msra.mxu0 0.0
      %1520 = vmatprep.subr.mxu0 0.0
      %1521 = vmatpush1.msra.mxu0 0.0
      %1522 = vmatprep.subr.mxu0 0.0
      %1523 = vmatpush1.msra.mxu0 0.0
      %1524 = vmatprep.subr.mxu0 0.0
      %1525 = vmatpush1.msra.mxu0 0.0
      %1526 = vmatprep.subr.mxu0 0.0
      %1527 = vmatpush1.msra.mxu0 0.0
      %1528 = vmatprep.subr.mxu0 0.0
      %1529 = vmatpush1.msra.mxu0 %v1500
      %1530 = vmatprep.subr.mxu0 0.0
      %1531 = vmatpush1.msra.mxu0 %v1499
      %1532 = vmatprep.subr.mxu0 0.0
      %1533 = vmatpush1.msra.mxu0 %v1498
      %1534 = vmatprep.subr.mxu0 0.0
      %1535 = vmatpush1.msra.mxu0 %v1497
      %1536 = vmatprep.subr.mxu0 0.0
      %1537 = vmatpush1.msra.mxu0 %v1496
      %1538 = vmatprep.subr.mxu0 0.0
      %1539 = vmatpush1.msra.mxu0 %v1495
      %1540 = vmatprep.subr.mxu0 0.0
      %1541 = vmatpush1.msra.mxu0 %v1494
      %1542 = vmatprep.subr.mxu0 0.0
      %1543 = vmatpush1.msra.mxu0 %v1493
      %1544 = vmatprep.subr.mxu0 0.0
      %1545 = vmatpush1.msra.mxu0 %v1492
      %1546 = vmatprep.subr.mxu0 0.0
      %1547 = vmatpush1.msra.mxu0 %v1491
      %1548 = vmatprep.subr.mxu0 0.0
      %1549 = vmatpush2.msra.mxu0 0.0
      %1550 = vmatprep.subr.mxu0 0.0
      %1551 = vmatpush2.msra.mxu0 0.0
      %1552 = vmatprep.subr.mxu0 0.0
      %1553 = vmatpush2.msra.mxu0 0.0
      %1554 = vmatprep.subr.mxu0 0.0
      %1555 = vmatpush2.msra.mxu0 0.0
      %1556 = vmatprep.subr.mxu0 0.0
      %1557 = vmatpush2.msra.mxu0 0.0
      %1558 = vmatprep.subr.mxu0 0.0
      %1559 = vmatpush2.msra.mxu0 0.0
      %1560 = vmatprep.subr.mxu0 0.0
      %1561 = vmatpush2.msra.mxu0 0.0
      %1562 = vmatprep.subr.mxu0 0.0
      %1563 = vmatpush2.msra.mxu0 0.0
      %1564 = vmatprep.subr.mxu0 0.0
      %1565 = vmatpush2.msra.mxu0 0.0
      %1566 = vmatprep.subr.mxu0 0.0
      %1567 = vmatpush2.msra.mxu0 0.0
      %1568 = vmatprep.subr.mxu0 0.0
      %1569 = vmatpush2.msra.mxu0 0.0
      %1570 = vmatprep.subr.mxu0 0.0
      %1571 = vmatpush2.msra.mxu0 0.0
      %1572 = vmatprep.subr.mxu0 0.0
      %1573 = vmatpush2.msra.mxu0 0.0
      %1574 = vmatprep.subr.mxu0 0.0
      %1575 = vmatpush2.msra.mxu0 0.0
      %1576 = vmatprep.subr.mxu0 0.0
      %1577 = vmatpush2.msra.mxu0 0.0
      %1578 = vmatprep.subr.mxu0 0.0
      %1579 = vmatpush2.msra.mxu0 0.0
      %1580 = vmatprep.mubr.f32.mxu0 0.0
      %1581 = vmatmul.mubr.f32.gmra.mxu0 %v1502
      %v1582 = vpop.f32.mrf.mxu0
      %v1583 = vadd.f32 0.0, %v1582
      %v1584 = vpop.f32.mrf.mxu0
      %1585 = vmatprep.mubr.f32.mxu0 0.0
      %1586 = vmatmul.mubr.f32.gmra.mxu0 %v1505
      %v1587 = vpop.f32.mrf.mxu0
      %v1588 = vadd.f32 0.0, %v1587
      %v1589 = vpop.f32.mrf.mxu0
      %1590 = vmatprep.mubr.f32.mxu0 0.0
      %1591 = vmatmul.mubr.f32.gmra.mxu0 %v1508
      %v1592 = vpop.f32.mrf.mxu0
      %v1593 = vadd.f32 0.0, %v1592
      %v1594 = vpop.f32.mrf.mxu0
      %1595 = vmatprep.mubr.f32.mxu0 0.0
      %1596 = vmatmul.mubr.f32.gmra.mxu0 %v1511
      %v1597 = vpop.f32.mrf.mxu0
      %v1598 = vadd.f32 0.0, %v1597
      %v1599 = vpop.f32.mrf.mxu0
      %1600 = vmatprep.mubr.f32.mxu0 0.0
      %1601 = vmatmul.mubr.f32.gmra.mxu0 %v1514
      %v1602 = vpop.f32.mrf.mxu0
      %v1603 = vadd.f32 0.0, %v1602
      %v1604 = vpop.f32.mrf.mxu0
      %1605 = vdwg.mxu0
      %v1606 = vadd.f32 %v1485, %v1583
      %v1607 = vadd.f32 %v1486, %v1588
      %v1608 = vadd.f32 %v1487, %v1593
      %v1609 = vadd.f32 %v1488, %v1598
      %v1610 = vadd.f32 %v1489, %v1603
      %1611 = vst.msk [vmem:[#allocation3] sm:$0xff] %vm387, %v1606
      %1612 = vst.msk [vmem:[#allocation3 + $0x8] sm:$0xff] %vm387, %v1607
      %1613 = vst.msk [vmem:[#allocation3 + $0x10] sm:$0xff] %vm387, %v1608
      %1614 = vst.msk [vmem:[#allocation3 + $0x18] sm:$0xff] %vm387, %v1609
      %1615 = vst.msk [vmem:[#allocation3 + $0x20] sm:$0xff] %vm387, %v1610
      %v1616 = vld [vmem:[#allocation3] sm:$0xff]
      %v1617 = vld [vmem:[%s4] sm:$0x1]
      %v1619 = vlaneseq
      %v1620 = vshrl.u32 %v1619, 7
      %v1621 = vsub.s32 0, %v1620
      %v1622 = vrot.slane %v1617, %v1621
      %v1624 = vadd.f32 %v1616, %v1622
      %v1625 = vld [vmem:[%s6] sm:$0x1]
      %v1626 = vsel %vm387, %v1624, 0.0
      %v1627 = vrot.slane %v1626, 4
      %v1628 = vadd.f32 %v1626, %v1627
      %v1629 = vrot.slane %v1628, 2
      %v1630 = vadd.f32 %v1628, %v1629
      %v1631 = vrot.slane %v1630, 1
      %v1632 = vadd.f32 %v1630, %v1631
      %v1633 = vadd.f32 %v1625, %v1632
      %vm1634 = vcmask 516096
      %1635 = vst.msk [vmem:[%s6] sm:$0x1] %vm1634, %v1633
      %v1636 = vld [vmem:[%s7] sm:$0x1]
      %v1637 = vmul.f32 %v1624, %v1624
      %v1638 = vsel %vm387, %v1637, 0.0
      %v1639 = vrot.slane %v1638, 4
      %v1640 = vadd.f32 %v1638, %v1639
      %v1641 = vrot.slane %v1640, 2
      %v1642 = vadd.f32 %v1640, %v1641
      %v1643 = vrot.slane %v1642, 1
      %v1644 = vadd.f32 %v1642, %v1643
      %v1645 = vadd.f32 %v1636, %v1644
      %1646 = vst.msk [vmem:[%s7] sm:$0x1] %vm1634, %v1645
      %1647 = vst.msk [vmem:[%s273] sm:$0xff] %vm387, %v1624
      %v1648 = vld [vmem:[#allocation3 + $0xa] sm:$0xff]
      %v1649 = vld [vmem:[%s4] sm:$0x1]
      %v1651 = vlaneseq
      %v1652 = vshrl.u32 %v1651, 7
      %v1653 = vsub.s32 0, %v1652
      %v1654 = vrot.slane %v1649, %v1653
      %v1656 = vadd.f32 %v1648, %v1654
      %v1657 = vld [vmem:[%s6] sm:$0x1]
      %v1658 = vsel %vm387, %v1656, 0.0
      %v1659 = vrot.slane %v1658, 4
      %v1660 = vadd.f32 %v1658, %v1659
      %v1661 = vrot.slane %v1660, 2
      %v1662 = vadd.f32 %v1660, %v1661
      %v1663 = vrot.slane %v1662, 1
      %v1664 = vadd.f32 %v1662, %v1663
      %v1665 = vadd.f32 %v1657, %v1664
      %1666 = vst.msk [vmem:[%s6] sm:$0x1] %vm1634, %v1665
      %v1667 = vld [vmem:[%s7] sm:$0x1]
      %v1668 = vmul.f32 %v1656, %v1656
      %v1669 = vsel %vm387, %v1668, 0.0
      %v1670 = vrot.slane %v1669, 4
      %v1671 = vadd.f32 %v1669, %v1670
      %v1672 = vrot.slane %v1671, 2
      %v1673 = vadd.f32 %v1671, %v1672
      %v1674 = vrot.slane %v1673, 1
      %v1675 = vadd.f32 %v1673, %v1674
      %v1676 = vadd.f32 %v1667, %v1675
      %1677 = vst.msk [vmem:[%s7] sm:$0x1] %vm1634, %v1676
      %s1678 = scalar_lea.vmem %s273, 8
      %1679 = vst.msk [vmem:[%s1678] sm:$0xff] %vm387, %v1656
      %v1680 = vld [vmem:[#allocation3 + $0x14] sm:$0xff]
      %v1681 = vld [vmem:[%s4] sm:$0x1]
      %v1683 = vlaneseq
      %v1684 = vshrl.u32 %v1683, 7
      %v1685 = vsub.s32 0, %v1684
      %v1686 = vrot.slane %v1681, %v1685
      %v1688 = vadd.f32 %v1680, %v1686
      %v1689 = vld [vmem:[%s6] sm:$0x1]
      %v1690 = vsel %vm387, %v1688, 0.0
      %v1691 = vrot.slane %v1690, 4
      %v1692 = vadd.f32 %v1690, %v1691
      %v1693 = vrot.slane %v1692, 2
      %v1694 = vadd.f32 %v1692, %v1693
      %v1695 = vrot.slane %v1694, 1
      %v1696 = vadd.f32 %v1694, %v1695
      %v1697 = vadd.f32 %v1689, %v1696
      %1698 = vst.msk [vmem:[%s6] sm:$0x1] %vm1634, %v1697
      %v1699 = vld [vmem:[%s7] sm:$0x1]
      %v1700 = vmul.f32 %v1688, %v1688
      %v1701 = vsel %vm387, %v1700, 0.0
      %v1702 = vrot.slane %v1701, 4
      %v1703 = vadd.f32 %v1701, %v1702
      %v1704 = vrot.slane %v1703, 2
      %v1705 = vadd.f32 %v1703, %v1704
      %v1706 = vrot.slane %v1705, 1
      %v1707 = vadd.f32 %v1705, %v1706
      %v1708 = vadd.f32 %v1699, %v1707
      %1709 = vst.msk [vmem:[%s7] sm:$0x1] %vm1634, %v1708
      %s1710 = scalar_lea.vmem %s273, 16
      %1711 = vst.msk [vmem:[%s1710] sm:$0xff] %vm387, %v1688
      %v1712 = vld [vmem:[#allocation3 + $0x1e] sm:$0xff]
      %v1713 = vld [vmem:[%s4] sm:$0x1]
      %v1715 = vlaneseq
      %v1716 = vshrl.u32 %v1715, 7
      %v1717 = vsub.s32 0, %v1716
      %v1718 = vrot.slane %v1713, %v1717
      %v1720 = vadd.f32 %v1712, %v1718
      %v1721 = vld [vmem:[%s6] sm:$0x1]
      %v1722 = vsel %vm387, %v1720, 0.0
      %v1723 = vrot.slane %v1722, 4
      %v1724 = vadd.f32 %v1722, %v1723
      %v1725 = vrot.slane %v1724, 2
      %v1726 = vadd.f32 %v1724, %v1725
      %v1727 = vrot.slane %v1726, 1
      %v1728 = vadd.f32 %v1726, %v1727
      %v1729 = vadd.f32 %v1721, %v1728
      %1730 = vst.msk [vmem:[%s6] sm:$0x1] %vm1634, %v1729
      %v1731 = vld [vmem:[%s7] sm:$0x1]
      %v1732 = vmul.f32 %v1720, %v1720
      %v1733 = vsel %vm387, %v1732, 0.0
      %v1734 = vrot.slane %v1733, 4
      %v1735 = vadd.f32 %v1733, %v1734
      %v1736 = vrot.slane %v1735, 2
      %v1737 = vadd.f32 %v1735, %v1736
      %v1738 = vrot.slane %v1737, 1
      %v1739 = vadd.f32 %v1737, %v1738
      %v1740 = vadd.f32 %v1731, %v1739
      %1741 = vst.msk [vmem:[%s7] sm:$0x1] %vm1634, %v1740
      %s1742 = scalar_lea.vmem %s273, 24
      %1743 = vst.msk [vmem:[%s1742] sm:$0xff] %vm387, %v1720
      %p1744 = scmp.lt.s32.totalorder %s19, 1
      %s1745 = scalar_select %p1744, %s19, 1
      %s1746 = smul.addr %s1745, 4
      %s1747 = smul.addr %s1746, 8
      %s1748 = scalar_lea.vmem %s5, %s1747
      // Predicated region
      $region45: #{res_block_3d.4} parent=39 // pred_check
        %p1749 = pneg %p147
      $region46: #{res_block_3d.4} parent=39 // pred_check_branch
        %1751 = sbr.rel (%p1749) target = $region48
      $region47: #{res_block_3d.4} parent=39 // pred_region
        _
      $region48: #{res_block_3d.4} parent=39 // pred_fallthru
        _
      // Predicated region
      $region49: #{res_block_3d.4} parent=39 // pred_check
        %p1752 = pneg %p168
      $region50: #{res_block_3d.4} parent=39 // pred_check_branch
        %1754 = sbr.rel (%p1752) target = $region52
      $region51: #{res_block_3d.4} parent=39 // pred_region
        _
      $region52: #{res_block_3d.4} parent=39 // pred_fallthru
        _
      // Predicated region
      $region53: #{res_block_3d.4} parent=39 // pred_check
        %p1755 = pneg %p189
      $region54: #{res_block_3d.4} parent=39 // pred_check_branch
        %1757 = sbr.rel (%p1755) target = $region56
      $region55: #{res_block_3d.4} parent=39 // pred_region
        _
      $region56: #{res_block_3d.4} parent=39 // pred_fallthru
        _
      // Predicated region
      $region57: #{res_block_3d.4} parent=39 // pred_check
        %p1758 = pneg %p168
      $region58: #{res_block_3d.4} parent=39 // pred_check_branch
        %1760 = sbr.rel (%p1758) target = $region60
      $region59: #{res_block_3d.4} parent=39 // pred_region
        _
      $region60: #{res_block_3d.4} parent=39 // pred_fallthru
        _
      // Predicated region
      $region61: #{res_block_3d.4} parent=39 // pred_check
        %p1761 = pneg %p189
      $region62: #{res_block_3d.4} parent=39 // pred_check_branch
        %1763 = sbr.rel (%p1761) target = $region64
      $region63: #{res_block_3d.4} parent=39 // pred_region
        _
      $region64: #{res_block_3d.4} parent=39 // pred_fallthru
        _
    $region40: #{res_block_3d.4} parent=5 // pred_fallthru
      _
    %p1764 = scmp.le.s32.totalorder 2, %s14
    // Predicated region
    $region65: #{res_block_3d.4} parent=5 // pred_check
      %p1765 = pneg %p1764
    $region66: #{res_block_3d.4} parent=5 // pred_check_branch
      %1767 = sbr.rel (%p1765) target = $region68
    $region67: #{res_block_3d.4} parent=5 // pred_region
      %s1768 = ssub.s32 %s14, 2
      // Predicated region
      $region69: #{res_block_3d.4} parent=67 // pred_check
        %p1769 = pneg %p153
      $region70: #{res_block_3d.4} parent=67 // pred_check_branch
        %1771 = sbr.rel (%p1769) target = $region72
      $region71: #{res_block_3d.4} parent=67 // pred_region
        %p1772 = scmp.lt.s32.totalorder %s20, 1
        %s1773 = scalar_select %p1772, %s20, 1
        %s1774 = smul.addr %s1773, 4
        %s1775 = smul.addr %s1774, 8
        %s1776 = scalar_lea.vmem %s5, %s1775
      $region72: #{res_block_3d.4} parent=67 // pred_fallthru
        _
    $region68: #{res_block_3d.4} parent=5 // pred_fallthru
      _
  $region6: #{res_block_3d.4} parent=0 // loop_footer
    %s18 = sadd.s32 1, %s14
  $region7: #{res_block_3d.4} parent=0 // loop_footer_branch
    %13 = sbr.rel target = $region3
  $region8: #{res_block_3d.4} parent=0 // loop_exit
    _

// kernel: res_block_3d.5
$region0: #{res_block_3d.5}
  #allocation0 [shape = 'u32[]', space=smem, size = 0x4, offset = 0x4, fixed_abs, tag = 'smem constant byte address 0x4 - core index']
  #allocation1 [shape = 'u32[144,128]{1,0:T(1,128)}', space=vmem, size = 0x12000, scoped, tag = 'internal scratch']
  #allocation2 [shape = 'f32[62,80]{1,0:T(8,128)}', space=vmem, size = 0x8000, scoped, tag = 'scratch operand']
  #allocation3 [shape = 'f32[40,64]{1,0:T(8,128)}', space=vmem, size = 0x5000, scoped, tag = 'scratch operand']
  %s0 = inlined_call_operand.vmem [shape: f32[2,4,8,64], index: 0, kind: input, shape index: {}]
  %s1 = inlined_call_operand.vmem [shape: f32[1,64], index: 1, kind: input, shape index: {}]
  %s2 = inlined_call_operand.vmem [shape: f32[1,64], index: 2, kind: input, shape index: {}]
  %s3 = inlined_call_operand.vmem [shape: f32[9,80,64], index: 3, kind: input, shape index: {}]
  %s4 = inlined_call_operand.vmem [shape: f32[1,64], index: 4, kind: input, shape index: {}]
  %s5 = inlined_call_operand.vmem [shape: f32[2,4,8,64], index: 5, kind: input, shape index: {}]
  %s6 = inlined_call_operand.vmem [shape: f32[2,4,8,64], index: 6, kind: output, shape index: {}]
  %s7 = sld [smem:[#allocation0]]
  $region57: #{res_block_3d.5} parent=0
    _
  %s9 = ssub.s32 1, %s7
  %s10 = scalar_select 0, %s9, %s7
  loop: start=0, step=1, limit=4
  $region2: #{res_block_3d.5} parent=0 // loop_pre_header
    _
  $region3: #{res_block_3d.5} parent=0 // loop_header
    %s12 = sphi 0, %s16
    %p13 = scmp.ge.s32.totalorder %s12, 4
    %s22 = sphi 0, %s24
    %s25 = sphi 0, %s22
    %s26 = sphi 0, %s25
    %s42 = sphi 0, %s26
    %s46 = sphi 0, %s46
    %s48 = sphi 0, %s46
    %s49 = sphi 0, %s48
    %s63 = sphi 0, %s49
    %s67 = sphi 0, %s67
    %s69 = sphi 0, %s67
    %s70 = sphi 0, %s69
    %s84 = sphi 0, %s70
    %s88 = sphi 0, %s88
    %s90 = sphi 0, %s88
    %s91 = sphi 0, %s90
    %s105 = sphi 0, %s91
    %s109 = sphi 0, %s109
    %s111 = sphi 0, %s109
    %s112 = sphi 0, %s111
    %s126 = sphi 0, %s112
    %s132 = sphi 0, %s134
    %s135 = sphi 0, %s132
    %s136 = sphi 0, %s135
    %s152 = sphi 0, %s136
    %s158 = sphi 0, %s160
    %s161 = sphi 0, %s158
    %s162 = sphi 0, %s161
    %s178 = sphi 0, %s162
  $region4: #{res_block_3d.5} parent=0 // loop_header_branch
    %15 = sbr.rel (%p13) target = $region8
  $region5: #{res_block_3d.5} parent=0 // loop_body
    %s17 = ssub.s32 %s12, 1
    %s18 = ssub.s32 %s12, 2
    %s19 = sadd.s32 %s12, 1
    %s20 = ssub.s32 %s12, %s19
    %p21 = scmp.eq.s32.totalorder %s20, 0
    %s23 = sadd.s32 %s22, 1
    %s24 = scalar_select %p21, %s22, %s23
    %p27 = pneg %p21
    %p28 = scmp.eq.s32.totalorder %s12, 1
    %p29 = por %p27, %p28
    %p30 = scmp.ne.s32.totalorder %s22, %s25
    %p31 = scmp.eq.s32.totalorder %s12, 0
    %p32 = por %p30, %p31
    %p33 = scmp.ne.s32.totalorder %s22, %s25
    %p34 = scmp.eq.s32.totalorder %s17, 1
    %p35 = por %p33, %p34
    %p36 = scmp.ne.s32.totalorder %s25, %s26
    %p37 = scmp.eq.s32.totalorder %s17, 0
    %p38 = por %p36, %p37
    %p39 = scmp.ne.s32.totalorder %s25, %s26
    %p40 = scmp.eq.s32.totalorder %s18, 1
    %p41 = por %p39, %p40
    %p43 = scmp.ne.s32.totalorder %s26, %s42
    %p44 = scmp.eq.s32.totalorder %s18, 0
    %p45 = por %p43, %p44
    %s47 = sadd.s32 %s46, 1
    %p50 = scmp.eq.s32.totalorder %s12, 1
    %p51 = scmp.ne.s32.totalorder %s46, %s48
    %p52 = scmp.eq.s32.totalorder %s12, 0
    %p53 = por %p51, %p52
    %p54 = scmp.ne.s32.totalorder %s46, %s48
    %p55 = scmp.eq.s32.totalorder %s17, 1
    %p56 = por %p54, %p55
    %p57 = scmp.ne.s32.totalorder %s48, %s49
    %p58 = scmp.eq.s32.totalorder %s17, 0
    %p59 = por %p57, %p58
    %p60 = scmp.ne.s32.totalorder %s48, %s49
    %p61 = scmp.eq.s32.totalorder %s18, 1
    %p62 = por %p60, %p61
    %p64 = scmp.ne.s32.totalorder %s49, %s63
    %p65 = scmp.eq.s32.totalorder %s18, 0
    %p66 = por %p64, %p65
    %s68 = sadd.s32 %s67, 1
    %p71 = scmp.eq.s32.totalorder %s12, 1
    %p72 = scmp.ne.s32.totalorder %s67, %s69
    %p73 = scmp.eq.s32.totalorder %s12, 0
    %p74 = por %p72, %p73
    %p75 = scmp.ne.s32.totalorder %s67, %s69
    %p76 = scmp.eq.s32.totalorder %s17, 1
    %p77 = por %p75, %p76
    %p78 = scmp.ne.s32.totalorder %s69, %s70
    %p79 = scmp.eq.s32.totalorder %s17, 0
    %p80 = por %p78, %p79
    %p81 = scmp.ne.s32.totalorder %s69, %s70
    %p82 = scmp.eq.s32.totalorder %s18, 1
    %p83 = por %p81, %p82
    %p85 = scmp.ne.s32.totalorder %s70, %s84
    %p86 = scmp.eq.s32.totalorder %s18, 0
    %p87 = por %p85, %p86
    %s89 = sadd.s32 %s88, 1
    %p92 = scmp.eq.s32.totalorder %s12, 1
    %p93 = scmp.ne.s32.totalorder %s88, %s90
    %p94 = scmp.eq.s32.totalorder %s12, 0
    %p95 = por %p93, %p94
    %p96 = scmp.ne.s32.totalorder %s88, %s90
    %p97 = scmp.eq.s32.totalorder %s17, 1
    %p98 = por %p96, %p97
    %p99 = scmp.ne.s32.totalorder %s90, %s91
    %p100 = scmp.eq.s32.totalorder %s17, 0
    %p101 = por %p99, %p100
    %p102 = scmp.ne.s32.totalorder %s90, %s91
    %p103 = scmp.eq.s32.totalorder %s18, 1
    %p104 = por %p102, %p103
    %p106 = scmp.ne.s32.totalorder %s91, %s105
    %p107 = scmp.eq.s32.totalorder %s18, 0
    %p108 = por %p106, %p107
    %s110 = sadd.s32 %s109, 1
    %p113 = scmp.eq.s32.totalorder %s12, 1
    %p114 = scmp.ne.s32.totalorder %s109, %s111
    %p115 = scmp.eq.s32.totalorder %s12, 0
    %p116 = por %p114, %p115
    %p117 = scmp.ne.s32.totalorder %s109, %s111
    %p118 = scmp.eq.s32.totalorder %s17, 1
    %p119 = por %p117, %p118
    %p120 = scmp.ne.s32.totalorder %s111, %s112
    %p121 = scmp.eq.s32.totalorder %s17, 0
    %p122 = por %p120, %p121
    %p123 = scmp.ne.s32.totalorder %s111, %s112
    %p124 = scmp.eq.s32.totalorder %s18, 1
    %p125 = por %p123, %p124
    %p127 = scmp.ne.s32.totalorder %s112, %s126
    %p128 = scmp.eq.s32.totalorder %s18, 0
    %p129 = por %p127, %p128
    %s130 = ssub.s32 %s12, %s19
    %p131 = scmp.eq.s32.totalorder %s130, 0
    %s133 = sadd.s32 %s132, 1
    %s134 = scalar_select %p131, %s132, %s133
    %p137 = pneg %p131
    %p138 = scmp.eq.s32.totalorder %s12, 1
    %p139 = por %p137, %p138
    %p140 = scmp.ne.s32.totalorder %s132, %s135
    %p141 = scmp.eq.s32.totalorder %s12, 0
    %p142 = por %p140, %p141
    %p143 = scmp.ne.s32.totalorder %s132, %s135
    %p144 = scmp.eq.s32.totalorder %s17, 1
    %p145 = por %p143, %p144
    %p146 = scmp.ne.s32.totalorder %s135, %s136
    %p147 = scmp.eq.s32.totalorder %s17, 0
    %p148 = por %p146, %p147
    %p149 = scmp.ne.s32.totalorder %s135, %s136
    %p150 = scmp.eq.s32.totalorder %s18, 1
    %p151 = por %p149, %p150
    %p153 = scmp.ne.s32.totalorder %s136, %s152
    %p154 = scmp.eq.s32.totalorder %s18, 0
    %p155 = por %p153, %p154
    %s156 = ssub.s32 %s12, %s19
    %p157 = scmp.eq.s32.totalorder %s156, 0
    %s159 = sadd.s32 %s158, 1
    %s160 = scalar_select %p157, %s158, %s159
    %p163 = pneg %p157
    %p164 = scmp.eq.s32.totalorder %s12, 1
    %p165 = por %p163, %p164
    %p166 = scmp.ne.s32.totalorder %s158, %s161
    %p167 = scmp.eq.s32.totalorder %s12, 0
    %p168 = por %p166, %p167
    %p169 = scmp.ne.s32.totalorder %s158, %s161
    %p170 = scmp.eq.s32.totalorder %s17, 1
    %p171 = por %p169, %p170
    %p172 = scmp.ne.s32.totalorder %s161, %s162
    %p173 = scmp.eq.s32.totalorder %s17, 0
    %p174 = por %p172, %p173
    %p175 = scmp.ne.s32.totalorder %s161, %s162
    %p176 = scmp.eq.s32.totalorder %s18, 1
    %p177 = por %p175, %p176
    %p179 = scmp.ne.s32.totalorder %s162, %s178
    %p180 = scmp.eq.s32.totalorder %s18, 0
    %p181 = por %p179, %p180
    %p182 = scmp.le.s32.totalorder 1, %s12
    %p183 = scmp.lt.s32.totalorder %s12, 3
    %p184 = pnand %p182, %p183
    %p185 = pneg %p184
    // Predicated region
    $region9: #{res_block_3d.5} parent=5 // pred_check
      _
    $region10: #{res_block_3d.5} parent=5 // pred_check_branch
      %187 = sbr.rel (%p184) target = $region12
    $region11: #{res_block_3d.5} parent=5 // pred_region
      %s188 = ssub.s32 %s12, 1
      // Predicated region
      $region13: #{res_block_3d.5} parent=11 // pred_check
        %p189 = pneg %p59
      $region14: #{res_block_3d.5} parent=11 // pred_check_branch
        %191 = sbr.rel (%p189) target = $region16
      $region15: #{res_block_3d.5} parent=11 // pred_region
        _
      $region16: #{res_block_3d.5} parent=11 // pred_fallthru
        _
      // Predicated region
      $region17: #{res_block_3d.5} parent=11 // pred_check
        %p192 = pneg %p80
      $region18: #{res_block_3d.5} parent=11 // pred_check_branch
        %194 = sbr.rel (%p192) target = $region20
      $region19: #{res_block_3d.5} parent=11 // pred_region
        _
      $region20: #{res_block_3d.5} parent=11 // pred_fallthru
        _
      // Predicated region
      $region21: #{res_block_3d.5} parent=11 // pred_check
        %p195 = pneg %p101
      $region22: #{res_block_3d.5} parent=11 // pred_check_branch
        %197 = sbr.rel (%p195) target = $region24
      $region23: #{res_block_3d.5} parent=11 // pred_region
        _
      $region24: #{res_block_3d.5} parent=11 // pred_fallthru
        _
      // Predicated region
      $region25: #{res_block_3d.5} parent=11 // pred_check
        %p198 = pneg %p122
      $region26: #{res_block_3d.5} parent=11 // pred_check_branch
        %200 = sbr.rel (%p198) target = $region28
      $region27: #{res_block_3d.5} parent=11 // pred_region
        _
      $region28: #{res_block_3d.5} parent=11 // pred_fallthru
        _
    $region12: #{res_block_3d.5} parent=5 // pred_fallthru
      _
    %p201 = scmp.lt.s32.totalorder %s12, 2
    // Predicated region
    $region29: #{res_block_3d.5} parent=5 // pred_check
      %p202 = pneg %p201
    $region30: #{res_block_3d.5} parent=5 // pred_check_branch
      %204 = sbr.rel (%p202) target = $region32
    $region31: #{res_block_3d.5} parent=5 // pred_region
      // Predicated region
      $region33: #{res_block_3d.5} parent=31 // pred_check
        %p205 = pneg %p32
      $region34: #{res_block_3d.5} parent=31 // pred_check_branch
        %207 = sbr.rel (%p205) target = $region36
      $region35: #{res_block_3d.5} parent=31 // pred_region
        %p208 = scmp.lt.s32.totalorder %s12, 1
        %s209 = scalar_select %p208, %s12, 1
        %s210 = smul.addr %s209, 4
        %s211 = smul.addr %s210, 8
        %s212 = scalar_lea.vmem %s0, %s211
      $region36: #{res_block_3d.5} parent=31 // pred_fallthru
        _
      // Predicated region
      $region37: #{res_block_3d.5} parent=31 // pred_check
        %p213 = pneg %p142
      $region38: #{res_block_3d.5} parent=31 // pred_check_branch
        %215 = sbr.rel (%p213) target = $region40
      $region39: #{res_block_3d.5} parent=31 // pred_region
        %p216 = scmp.lt.s32.totalorder %s12, 1
        %s217 = scalar_select %p216, %s12, 1
        %s218 = smul.addr %s217, 4
        %s219 = smul.addr %s218, 8
        %s220 = scalar_lea.vmem %s5, %s219
      $region40: #{res_block_3d.5} parent=31 // pred_fallthru
        _
    $region32: #{res_block_3d.5} parent=5 // pred_fallthru
      _
    %p221 = scmp.le.s32.totalorder 1, %s12
    %p222 = scmp.lt.s32.totalorder %s12, 3
    %p223 = pnand %p221, %p222
    %p224 = pneg %p223
    // Predicated region
    $region41: #{res_block_3d.5} parent=5 // pred_check
      _
    $region42: #{res_block_3d.5} parent=5 // pred_check_branch
      %226 = sbr.rel (%p223) target = $region44
    $region43: #{res_block_3d.5} parent=5 // pred_region
      %s227 = ssub.s32 %s12, 1
      %p228 = scmp.lt.s32.totalorder %s17, 1
      %s229 = scalar_select %p228, %s17, 1
      %s230 = smul.addr %s229, 4
      %s231 = smul.addr %s230, 8
      %s232 = scalar_lea.vmem %s0, %s231
      %p233 = pneg %p38
      %p234 = pneg %p35
      %p235 = pneg %p59
      %p236 = pneg %p56
      %p237 = pneg %p80
      %p238 = pneg %p77
      %p239 = pneg %p101
      %p240 = pneg %p98
      %p241 = pneg %p122
      %p242 = pneg %p119
      %p243 = scmp.lt.s32.totalorder %s17, 1
      %s244 = scalar_select %p243, %s17, 1
      %s245 = smul.addr %s244, 4
      %s246 = smul.addr %s245, 8
      %s247 = scalar_lea.vmem %s5, %s246
      %p248 = pneg %p148
      %p249 = pneg %p145
      %p250 = pneg %p174
      %p251 = pneg %p171
      %p252 = scmp.lt.s32.totalorder %s17, 1
      %s253 = scalar_select %p252, %s17, 1
      %s254 = smul.addr %s253, 4
      %s255 = smul.addr %s254, 8
      %s256 = scalar_lea.vmem %s6, %s255
      %p257 = scmp.lt.s32.totalorder %s17, 1
      %s258 = scalar_select %p257, %s17, 1
      %s259 = smul.addr %s258, 4
      %s260 = smul.addr %s259, 8
      %s261 = scalar_lea.vmem %s0, %s260
      %p262 = scmp.lt.s32.totalorder %s17, 1
      %s263 = scalar_select %p262, %s17, 1
      %s264 = smul.addr %s263, 4
      %s265 = smul.addr %s264, 8
      %s266 = scalar_lea.vmem %s5, %s265
      %p267 = scmp.lt.s32.totalorder %s17, 1
      %s268 = scalar_select %p267, %s17, 1
      %s269 = smul.addr %s268, 4
      %s270 = smul.addr %s269, 8
      %s271 = scalar_lea.vmem %s6, %s270
      %vm272 = vcmask 654336
      %273 = vst.msk [vmem:[#allocation2] sm:$0xff] %vm272, 0.0
      %274 = vst.msk [vmem:[#allocation2 + $0x8] sm:$0xff] %vm272, 0.0
      %275 = vst.msk [vmem:[#allocation2 + $0x10] sm:$0xff] %vm272, 0.0
      %276 = vst.msk [vmem:[#allocation2 + $0x18] sm:$0xff] %vm272, 0.0
      %277 = vst.msk [vmem:[#allocation2 + $0x20] sm:$0xff] %vm272, 0.0
      %278 = vst.msk [vmem:[#allocation2 + $0x28] sm:$0xff] %vm272, 0.0
      %279 = vst.msk [vmem:[#allocation2 + $0x30] sm:$0xff] %vm272, 0.0
      %vm280 = vcmask 652288
      %281 = vst.msk [vmem:[#allocation2 + $0x38] sm:$0x3f] %vm280, 0.0
      %v282 = vld [vmem:[%s261] sm:$0xff]
      %v283 = vld [vmem:[%s1] sm:$0x1]
      %v285 = vlaneseq
      %v286 = vshrl.u32 %v285, 7
      %v287 = vsub.s32 0, %v286
      %v288 = vrot.slane %v283, %v287
      %v290 = vmul.f32 %v282, %v288
      %v291 = vld [vmem:[%s2] sm:$0x1]
      %v293 = vlaneseq
      %v294 = vshrl.u32 %v293, 7
      %v295 = vsub.s32 0, %v294
      %v296 = vrot.slane %v291, %v295
      %v298 = vadd.f32 %v290, %v296
      %v299 = vmax.f32 %v298, 0.0
      %301 = vrot.lane.b32.xlu0 %v299, 8
      %v302 = vpop.permute.xlu0 %301
      %vm304 = vcmask 588864
      %305 = vst.msk [vmem:[#allocation2 + $0xb] sm:$0xff] %vm304, %v302
      %s306 = scalar_lea.vmem %s261, 8
      %v307 = vld [vmem:[%s306] sm:$0xff]
      %v308 = vld [vmem:[%s1] sm:$0x1]
      %v310 = vlaneseq
      %v311 = vshrl.u32 %v310, 7
      %v312 = vsub.s32 0, %v311
      %v313 = vrot.slane %v308, %v312
      %v315 = vmul.f32 %v307, %v313
      %v316 = vld [vmem:[%s2] sm:$0x1]
      %v318 = vlaneseq
      %v319 = vshrl.u32 %v318, 7
      %v320 = vsub.s32 0, %v319
      %v321 = vrot.slane %v316, %v320
      %v323 = vadd.f32 %v315, %v321
      %v324 = vmax.f32 %v323, 0.0
      %326 = vrot.lane.b32.xlu0 %v324, 8
      %v327 = vpop.permute.xlu0 %326
      %329 = vst.msk [vmem:[#allocation2 + $0x15] sm:$0xff] %vm304, %v327
      %s330 = scalar_lea.vmem %s261, 16
      %v331 = vld [vmem:[%s330] sm:$0xff]
      %v332 = vld [vmem:[%s1] sm:$0x1]
      %v334 = vlaneseq
      %v335 = vshrl.u32 %v334, 7
      %v336 = vsub.s32 0, %v335
      %v337 = vrot.slane %v332, %v336
      %v339 = vmul.f32 %v331, %v337
      %v340 = vld [vmem:[%s2] sm:$0x1]
      %v342 = vlaneseq
      %v343 = vshrl.u32 %v342, 7
      %v344 = vsub.s32 0, %v343
      %v345 = vrot.slane %v340, %v344
      %v347 = vadd.f32 %v339, %v345
      %v348 = vmax.f32 %v347, 0.0
      %350 = vrot.lane.b32.xlu0 %v348, 8
      %v351 = vpop.permute.xlu0 %350
      %353 = vst.msk [vmem:[#allocation2 + $0x1f] sm:$0xff] %vm304, %v351
      %s354 = scalar_lea.vmem %s261, 24
      %v355 = vld [vmem:[%s354] sm:$0xff]
      %v356 = vld [vmem:[%s1] sm:$0x1]
      %v358 = vlaneseq
      %v359 = vshrl.u32 %v358, 7
      %v360 = vsub.s32 0, %v359
      %v361 = vrot.slane %v356, %v360
      %v363 = vmul.f32 %v355, %v361
      %v364 = vld [vmem:[%s2] sm:$0x1]
      %v366 = vlaneseq
      %v367 = vshrl.u32 %v366, 7
      %v368 = vsub.s32 0, %v367
      %v369 = vrot.slane %v364, %v368
      %v371 = vadd.f32 %v363, %v369
      %v372 = vmax.f32 %v371, 0.0
      %374 = vrot.lane.b32.xlu0 %v372, 8
      %v375 = vpop.permute.xlu0 %374
      %377 = vst.msk [vmem:[#allocation2 + $0x29] sm:$0xff] %vm304, %v375
      %vm378 = vcmask 523264
      %379 = vst.msk [vmem:[#allocation3] sm:$0xff] %vm378, 0.0
      %380 = vst.msk [vmem:[#allocation3 + $0x8] sm:$0xff] %vm378, 0.0
      %381 = vst.msk [vmem:[#allocation3 + $0x10] sm:$0xff] %vm378, 0.0
      %382 = vst.msk [vmem:[#allocation3 + $0x18] sm:$0xff] %vm378, 0.0
      %383 = vst.msk [vmem:[#allocation3 + $0x20] sm:$0xff] %vm378, 0.0
      %v384 = vld [vmem:[#allocation2] sm:$0xff]
      %v385 = vld [vmem:[#allocation2 + $0x8] sm:$0xff]
      %v386 = vld [vmem:[#allocation2 + $0x10] sm:$0xff]
      %v387 = vld [vmem:[#allocation2 + $0x18] sm:$0xff]
      %v388 = vld [vmem:[#allocation2 + $0x20] sm:$0xff]
      %v389 = vld [vmem:[#allocation3] sm:$0xff]
      %v390 = vld [vmem:[#allocation3 + $0x8] sm:$0xff]
      %v391 = vld [vmem:[#allocation3 + $0x10] sm:$0xff]
      %v392 = vld [vmem:[#allocation3 + $0x18] sm:$0xff]
      %v393 = vld [vmem:[#allocation3 + $0x20] sm:$0xff]
      %v394 = vld [vmem:[%s3] sm:$0xff]
      %v395 = vld [vmem:[%s3 + $0x8] sm:$0xff]
      %v396 = vld [vmem:[%s3 + $0x10] sm:$0xff]
      %v397 = vld [vmem:[%s3 + $0x18] sm:$0xff]
      %v398 = vld [vmem:[%s3 + $0x20] sm:$0xff]
      %v399 = vld [vmem:[%s3 + $0x28] sm:$0xff]
      %v400 = vld [vmem:[%s3 + $0x30] sm:$0xff]
      %v401 = vld [vmem:[%s3 + $0x38] sm:$0xff]
      %v402 = vld [vmem:[%s3 + $0x40] sm:$0xff]
      %v403 = vld [vmem:[%s3 + $0x48] sm:$0xff]
      %v405 = vsel %vm272, %v384, 0
      %v408 = vsel %vm272, %v385, 0
      %v411 = vsel %vm272, %v386, 0
      %v414 = vsel %vm272, %v387, 0
      %v417 = vsel %vm272, %v388, 0
      %419 = vmatprep.subr.mxu0 0.0
      %420 = vmatpush1.msra.mxu0 0.0
      %421 = vmatprep.subr.mxu0 0.0
      %422 = vmatpush1.msra.mxu0 0.0
      %423 = vmatprep.subr.mxu0 0.0
      %424 = vmatpush1.msra.mxu0 0.0
      %425 = vmatprep.subr.mxu0 0.0
      %426 = vmatpush1.msra.mxu0 0.0
      %427 = vmatprep.subr.mxu0 0.0
      %428 = vmatpush1.msra.mxu0 0.0
      %429 = vmatprep.subr.mxu0 0.0
      %430 = vmatpush1.msra.mxu0 0.0
      %431 = vmatprep.subr.mxu0 0.0
      %432 = vmatpush1.msra.mxu0 %v403
      %433 = vmatprep.subr.mxu0 0.0
      %434 = vmatpush1.msra.mxu0 %v402
      %435 = vmatprep.subr.mxu0 0.0
      %436 = vmatpush1.msra.mxu0 %v401
      %437 = vmatprep.subr.mxu0 0.0
      %438 = vmatpush1.msra.mxu0 %v400
      %439 = vmatprep.subr.mxu0 0.0
      %440 = vmatpush1.msra.mxu0 %v399
      %441 = vmatprep.subr.mxu0 0.0
      %442 = vmatpush1.msra.mxu0 %v398
      %443 = vmatprep.subr.mxu0 0.0
      %444 = vmatpush1.msra.mxu0 %v397
      %445 = vmatprep.subr.mxu0 0.0
      %446 = vmatpush1.msra.mxu0 %v396
      %447 = vmatprep.subr.mxu0 0.0
      %448 = vmatpush1.msra.mxu0 %v395
      %449 = vmatprep.subr.mxu0 0.0
      %450 = vmatpush1.msra.mxu0 %v394
      %451 = vmatprep.subr.mxu0 0.0
      %452 = vmatpush2.msra.mxu0 0.0
      %453 = vmatprep.subr.mxu0 0.0
      %454 = vmatpush2.msra.mxu0 0.0
      %455 = vmatprep.subr.mxu0 0.0
      %456 = vmatpush2.msra.mxu0 0.0
      %457 = vmatprep.subr.mxu0 0.0
      %458 = vmatpush2.msra.mxu0 0.0
      %459 = vmatprep.subr.mxu0 0.0
      %460 = vmatpush2.msra.mxu0 0.0
      %461 = vmatprep.subr.mxu0 0.0
      %462 = vmatpush2.msra.mxu0 0.0
      %463 = vmatprep.subr.mxu0 0.0
      %464 = vmatpush2.msra.mxu0 0.0
      %465 = vmatprep.subr.mxu0 0.0
      %466 = vmatpush2.msra.mxu0 0.0
      %467 = vmatprep.subr.mxu0 0.0
      %468 = vmatpush2.msra.mxu0 0.0
      %469 = vmatprep.subr.mxu0 0.0
      %470 = vmatpush2.msra.mxu0 0.0
      %471 = vmatprep.subr.mxu0 0.0
      %472 = vmatpush2.msra.mxu0 0.0
      %473 = vmatprep.subr.mxu0 0.0
      %474 = vmatpush2.msra.mxu0 0.0
      %475 = vmatprep.subr.mxu0 0.0
      %476 = vmatpush2.msra.mxu0 0.0
      %477 = vmatprep.subr.mxu0 0.0
      %478 = vmatpush2.msra.mxu0 0.0
      %479 = vmatprep.subr.mxu0 0.0
      %480 = vmatpush2.msra.mxu0 0.0
      %481 = vmatprep.subr.mxu0 0.0
      %482 = vmatpush2.msra.mxu0 0.0
      %483 = vmatprep.mubr.f32.mxu0 0.0
      %484 = vmatmul.mubr.f32.gmra.mxu0 %v405
      %v485 = vpop.f32.mrf.mxu0
      %v486 = vadd.f32 0.0, %v485
      %v487 = vpop.f32.mrf.mxu0
      %488 = vmatprep.mubr.f32.mxu0 0.0
      %489 = vmatmul.mubr.f32.gmra.mxu0 %v408
      %v490 = vpop.f32.mrf.mxu0
      %v491 = vadd.f32 0.0, %v490
      %v492 = vpop.f32.mrf.mxu0
      %493 = vmatprep.mubr.f32.mxu0 0.0
      %494 = vmatmul.mubr.f32.gmra.mxu0 %v411
      %v495 = vpop.f32.mrf.mxu0
      %v496 = vadd.f32 0.0, %v495
      %v497 = vpop.f32.mrf.mxu0
      %498 = vmatprep.mubr.f32.mxu0 0.0
      %499 = vmatmul.mubr.f32.gmra.mxu0 %v414
      %v500 = vpop.f32.mrf.mxu0
      %v501 = vadd.f32 0.0, %v500
      %v502 = vpop.f32.mrf.mxu0
      %503 = vmatprep.mubr.f32.mxu0 0.0
      %504 = vmatmul.mubr.f32.gmra.mxu0 %v417
      %v505 = vpop.f32.mrf.mxu0
      %v506 = vadd.f32 0.0, %v505
      %v507 = vpop.f32.mrf.mxu0
      %508 = vdwg.mxu0
      %v509 = vadd.f32 %v389, %v486
      %v510 = vadd.f32 %v390, %v491
      %v511 = vadd.f32 %v391, %v496
      %v512 = vadd.f32 %v392, %v501
      %v513 = vadd.f32 %v393, %v506
      %514 = vst.msk [vmem:[#allocation3] sm:$0xff] %vm378, %v509
      %515 = vst.msk [vmem:[#allocation3 + $0x8] sm:$0xff] %vm378, %v510
      %516 = vst.msk [vmem:[#allocation3 + $0x10] sm:$0xff] %vm378, %v511
      %517 = vst.msk [vmem:[#allocation3 + $0x18] sm:$0xff] %vm378, %v512
      %518 = vst.msk [vmem:[#allocation3 + $0x20] sm:$0xff] %vm378, %v513
      %v519 = vld [vmem:[#allocation2 + $0x1] sm:$0xff]
      %v520 = vld [vmem:[#allocation2 + $0x9] sm:$0xff]
      %v521 = vld [vmem:[#allocation2 + $0x11] sm:$0xff]
      %v522 = vld [vmem:[#allocation2 + $0x19] sm:$0xff]
      %v523 = vld [vmem:[#allocation2 + $0x21] sm:$0xff]
      %v524 = vld [vmem:[#allocation3] sm:$0xff]
      %v525 = vld [vmem:[#allocation3 + $0x8] sm:$0xff]
      %v526 = vld [vmem:[#allocation3 + $0x10] sm:$0xff]
      %v527 = vld [vmem:[#allocation3 + $0x18] sm:$0xff]
      %v528 = vld [vmem:[#allocation3 + $0x20] sm:$0xff]
      %s529 = scalar_lea.vmem %s3, 80
      %v530 = vld [vmem:[%s529] sm:$0xff]
      %v531 = vld [vmem:[%s529 + $0x8] sm:$0xff]
      %v532 = vld [vmem:[%s529 + $0x10] sm:$0xff]
      %v533 = vld [vmem:[%s529 + $0x18] sm:$0xff]
      %v534 = vld [vmem:[%s529 + $0x20] sm:$0xff]
      %v535 = vld [vmem:[%s529 + $0x28] sm:$0xff]
      %v536 = vld [vmem:[%s529 + $0x30] sm:$0xff]
      %v537 = vld [vmem:[%s529 + $0x38] sm:$0xff]
      %v538 = vld [vmem:[%s529 + $0x40] sm:$0xff]
      %v539 = vld [vmem:[%s529 + $0x48] sm:$0xff]
      %v541 = vsel %vm272, %v519, 0
      %v544 = vsel %vm272, %v520, 0
      %v547 = vsel %vm272, %v521, 0
      %v550 = vsel %vm272, %v522, 0
      %v553 = vsel %vm272, %v523, 0
      %555 = vmatprep.subr.mxu0 0.0
      %556 = vmatpush1.msra.mxu0 0.0
      %557 = vmatprep.subr.mxu0 0.0
      %558 = vmatpush1.msra.mxu0 0.0
      %559 = vmatprep.subr.mxu0 0.0
      %560 = vmatpush1.msra.mxu0 0.0
      %561 = vmatprep.subr.mxu0 0.0
      %562 = vmatpush1.msra.mxu0 0.0
      %563 = vmatprep.subr.mxu0 0.0
      %564 = vmatpush1.msra.mxu0 0.0
      %565 = vmatprep.subr.mxu0 0.0
      %566 = vmatpush1.msra.mxu0 0.0
      %567 = vmatprep.subr.mxu0 0.0
      %568 = vmatpush1.msra.mxu0 %v539
      %569 = vmatprep.subr.mxu0 0.0
      %570 = vmatpush1.msra.mxu0 %v538
      %571 = vmatprep.subr.mxu0 0.0
      %572 = vmatpush1.msra.mxu0 %v537
      %573 = vmatprep.subr.mxu0 0.0
      %574 = vmatpush1.msra.mxu0 %v536
      %575 = vmatprep.subr.mxu0 0.0
      %576 = vmatpush1.msra.mxu0 %v535
      %577 = vmatprep.subr.mxu0 0.0
      %578 = vmatpush1.msra.mxu0 %v534
      %579 = vmatprep.subr.mxu0 0.0
      %580 = vmatpush1.msra.mxu0 %v533
      %581 = vmatprep.subr.mxu0 0.0
      %582 = vmatpush1.msra.mxu0 %v532
      %583 = vmatprep.subr.mxu0 0.0
      %584 = vmatpush1.msra.mxu0 %v531
      %585 = vmatprep.subr.mxu0 0.0
      %586 = vmatpush1.msra.mxu0 %v530
      %587 = vmatprep.subr.mxu0 0.0
      %588 = vmatpush2.msra.mxu0 0.0
      %589 = vmatprep.subr.mxu0 0.0
      %590 = vmatpush2.msra.mxu0 0.0
      %591 = vmatprep.subr.mxu0 0.0
      %592 = vmatpush2.msra.mxu0 0.0
      %593 = vmatprep.subr.mxu0 0.0
      %594 = vmatpush2.msra.mxu0 0.0
      %595 = vmatprep.subr.mxu0 0.0
      %596 = vmatpush2.msra.mxu0 0.0
      %597 = vmatprep.subr.mxu0 0.0
      %598 = vmatpush2.msra.mxu0 0.0
      %599 = vmatprep.subr.mxu0 0.0
      %600 = vmatpush2.msra.mxu0 0.0
      %601 = vmatprep.subr.mxu0 0.0
      %602 = vmatpush2.msra.mxu0 0.0
      %603 = vmatprep.subr.mxu0 0.0
      %604 = vmatpush2.msra.mxu0 0.0
      %605 = vmatprep.subr.mxu0 0.0
      %606 = vmatpush2.msra.mxu0 0.0
      %607 = vmatprep.subr.mxu0 0.0
      %608 = vmatpush2.msra.mxu0 0.0
      %609 = vmatprep.subr.mxu0 0.0
      %610 = vmatpush2.msra.mxu0 0.0
      %611 = vmatprep.subr.mxu0 0.0
      %612 = vmatpush2.msra.mxu0 0.0
      %613 = vmatprep.subr.mxu0 0.0
      %614 = vmatpush2.msra.mxu0 0.0
      %615 = vmatprep.subr.mxu0 0.0
      %616 = vmatpush2.msra.mxu0 0.0
      %617 = vmatprep.subr.mxu0 0.0
      %618 = vmatpush2.msra.mxu0 0.0
      %619 = vmatprep.mubr.f32.mxu0 0.0
      %620 = vmatmul.mubr.f32.gmra.mxu0 %v541
      %v621 = vpop.f32.mrf.mxu0
      %v622 = vadd.f32 0.0, %v621
      %v623 = vpop.f32.mrf.mxu0
      %624 = vmatprep.mubr.f32.mxu0 0.0
      %625 = vmatmul.mubr.f32.gmra.mxu0 %v544
      %v626 = vpop.f32.mrf.mxu0
      %v627 = vadd.f32 0.0, %v626
      %v628 = vpop.f32.mrf.mxu0
      %629 = vmatprep.mubr.f32.mxu0 0.0
      %630 = vmatmul.mubr.f32.gmra.mxu0 %v547
      %v631 = vpop.f32.mrf.mxu0
      %v632 = vadd.f32 0.0, %v631
      %v633 = vpop.f32.mrf.mxu0
      %634 = vmatprep.mubr.f32.mxu0 0.0
      %635 = vmatmul.mubr.f32.gmra.mxu0 %v550
      %v636 = vpop.f32.mrf.mxu0
      %v637 = vadd.f32 0.0, %v636
      %v638 = vpop.f32.mrf.mxu0
      %639 = vmatprep.mubr.f32.mxu0 0.0
      %640 = vmatmul.mubr.f32.gmra.mxu0 %v553
      %v641 = vpop.f32.mrf.mxu0
      %v642 = vadd.f32 0.0, %v641
      %v643 = vpop.f32.mrf.mxu0
      %644 = vdwg.mxu0
      %v645 = vadd.f32 %v524, %v622
      %v646 = vadd.f32 %v525, %v627
      %v647 = vadd.f32 %v526, %v632
      %v648 = vadd.f32 %v527, %v637
      %v649 = vadd.f32 %v528, %v642
      %650 = vst.msk [vmem:[#allocation3] sm:$0xff] %vm378, %v645
      %651 = vst.msk [vmem:[#allocation3 + $0x8] sm:$0xff] %vm378, %v646
      %652 = vst.msk [vmem:[#allocation3 + $0x10] sm:$0xff] %vm378, %v647
      %653 = vst.msk [vmem:[#allocation3 + $0x18] sm:$0xff] %vm378, %v648
      %654 = vst.msk [vmem:[#allocation3 + $0x20] sm:$0xff] %vm378, %v649
      %v655 = vld [vmem:[#allocation2 + $0x2] sm:$0xff]
      %v656 = vld [vmem:[#allocation2 + $0xa] sm:$0xff]
      %v657 = vld [vmem:[#allocation2 + $0x12] sm:$0xff]
      %v658 = vld [vmem:[#allocation2 + $0x1a] sm:$0xff]
      %v659 = vld [vmem:[#allocation2 + $0x22] sm:$0xff]
      %v660 = vld [vmem:[#allocation3] sm:$0xff]
      %v661 = vld [vmem:[#allocation3 + $0x8] sm:$0xff]
      %v662 = vld [vmem:[#allocation3 + $0x10] sm:$0xff]
      %v663 = vld [vmem:[#allocation3 + $0x18] sm:$0xff]
      %v664 = vld [vmem:[#allocation3 + $0x20] sm:$0xff]
      %s665 = scalar_lea.vmem %s3, 160
      %v666 = vld [vmem:[%s665] sm:$0xff]
      %v667 = vld [vmem:[%s665 + $0x8] sm:$0xff]
      %v668 = vld [vmem:[%s665 + $0x10] sm:$0xff]
      %v669 = vld [vmem:[%s665 + $0x18] sm:$0xff]
      %v670 = vld [vmem:[%s665 + $0x20] sm:$0xff]
      %v671 = vld [vmem:[%s665 + $0x28] sm:$0xff]
      %v672 = vld [vmem:[%s665 + $0x30] sm:$0xff]
      %v673 = vld [vmem:[%s665 + $0x38] sm:$0xff]
      %v674 = vld [vmem:[%s665 + $0x40] sm:$0xff]
      %v675 = vld [vmem:[%s665 + $0x48] sm:$0xff]
      %v677 = vsel %vm272, %v655, 0
      %v680 = vsel %vm272, %v656, 0
      %v683 = vsel %vm272, %v657, 0
      %v686 = vsel %vm272, %v658, 0
      %v689 = vsel %vm272, %v659, 0
      %691 = vmatprep.subr.mxu0 0.0
      %692 = vmatpush1.msra.mxu0 0.0
      %693 = vmatprep.subr.mxu0 0.0
      %694 = vmatpush1.msra.mxu0 0.0
      %695 = vmatprep.subr.mxu0 0.0
      %696 = vmatpush1.msra.mxu0 0.0
      %697 = vmatprep.subr.mxu0 0.0
      %698 = vmatpush1.msra.mxu0 0.0
      %699 = vmatprep.subr.mxu0 0.0
      %700 = vmatpush1.msra.mxu0 0.0
      %701 = vmatprep.subr.mxu0 0.0
      %702 = vmatpush1.msra.mxu0 0.0
      %703 = vmatprep.subr.mxu0 0.0
      %704 = vmatpush1.msra.mxu0 %v675
      %705 = vmatprep.subr.mxu0 0.0
      %706 = vmatpush1.msra.mxu0 %v674
      %707 = vmatprep.subr.mxu0 0.0
      %708 = vmatpush1.msra.mxu0 %v673
      %709 = vmatprep.subr.mxu0 0.0
      %710 = vmatpush1.msra.mxu0 %v672
      %711 = vmatprep.subr.mxu0 0.0
      %712 = vmatpush1.msra.mxu0 %v671
      %713 = vmatprep.subr.mxu0 0.0
      %714 = vmatpush1.msra.mxu0 %v670
      %715 = vmatprep.subr.mxu0 0.0
      %716 = vmatpush1.msra.mxu0 %v669
      %717 = vmatprep.subr.mxu0 0.0
      %718 = vmatpush1.msra.mxu0 %v668
      %719 = vmatprep.subr.mxu0 0.0
      %720 = vmatpush1.msra.mxu0 %v667
      %721 = vmatprep.subr.mxu0 0.0
      %722 = vmatpush1.msra.mxu0 %v666
      %723 = vmatprep.subr.mxu0 0.0
      %724 = vmatpush2.msra.mxu0 0.0
      %725 = vmatprep.subr.mxu0 0.0
      %726 = vmatpush2.msra.mxu0 0.0
      %727 = vmatprep.subr.mxu0 0.0
      %728 = vmatpush2.msra.mxu0 0.0
      %729 = vmatprep.subr.mxu0 0.0
      %730 = vmatpush2.msra.mxu0 0.0
      %731 = vmatprep.subr.mxu0 0.0
      %732 = vmatpush2.msra.mxu0 0.0
      %733 = vmatprep.subr.mxu0 0.0
      %734 = vmatpush2.msra.mxu0 0.0
      %735 = vmatprep.subr.mxu0 0.0
      %736 = vmatpush2.msra.mxu0 0.0
      %737 = vmatprep.subr.mxu0 0.0
      %738 = vmatpush2.msra.mxu0 0.0
      %739 = vmatprep.subr.mxu0 0.0
      %740 = vmatpush2.msra.mxu0 0.0
      %741 = vmatprep.subr.mxu0 0.0
      %742 = vmatpush2.msra.mxu0 0.0
      %743 = vmatprep.subr.mxu0 0.0
      %744 = vmatpush2.msra.mxu0 0.0
      %745 = vmatprep.subr.mxu0 0.0
      %746 = vmatpush2.msra.mxu0 0.0
      %747 = vmatprep.subr.mxu0 0.0
      %748 = vmatpush2.msra.mxu0 0.0
      %749 = vmatprep.subr.mxu0 0.0
      %750 = vmatpush2.msra.mxu0 0.0
      %751 = vmatprep.subr.mxu0 0.0
      %752 = vmatpush2.msra.mxu0 0.0
      %753 = vmatprep.subr.mxu0 0.0
      %754 = vmatpush2.msra.mxu0 0.0
      %755 = vmatprep.mubr.f32.mxu0 0.0
      %756 = vmatmul.mubr.f32.gmra.mxu0 %v677
      %v757 = vpop.f32.mrf.mxu0
      %v758 = vadd.f32 0.0, %v757
      %v759 = vpop.f32.mrf.mxu0
      %760 = vmatprep.mubr.f32.mxu0 0.0
      %761 = vmatmul.mubr.f32.gmra.mxu0 %v680
      %v762 = vpop.f32.mrf.mxu0
      %v763 = vadd.f32 0.0, %v762
      %v764 = vpop.f32.mrf.mxu0
      %765 = vmatprep.mubr.f32.mxu0 0.0
      %766 = vmatmul.mubr.f32.gmra.mxu0 %v683
      %v767 = vpop.f32.mrf.mxu0
      %v768 = vadd.f32 0.0, %v767
      %v769 = vpop.f32.mrf.mxu0
      %770 = vmatprep.mubr.f32.mxu0 0.0
      %771 = vmatmul.mubr.f32.gmra.mxu0 %v686
      %v772 = vpop.f32.mrf.mxu0
      %v773 = vadd.f32 0.0, %v772
      %v774 = vpop.f32.mrf.mxu0
      %775 = vmatprep.mubr.f32.mxu0 0.0
      %776 = vmatmul.mubr.f32.gmra.mxu0 %v689
      %v777 = vpop.f32.mrf.mxu0
      %v778 = vadd.f32 0.0, %v777
      %v779 = vpop.f32.mrf.mxu0
      %780 = vdwg.mxu0
      %v781 = vadd.f32 %v660, %v758
      %v782 = vadd.f32 %v661, %v763
      %v783 = vadd.f32 %v662, %v768
      %v784 = vadd.f32 %v663, %v773
      %v785 = vadd.f32 %v664, %v778
      %786 = vst.msk [vmem:[#allocation3] sm:$0xff] %vm378, %v781
      %787 = vst.msk [vmem:[#allocation3 + $0x8] sm:$0xff] %vm378, %v782
      %788 = vst.msk [vmem:[#allocation3 + $0x10] sm:$0xff] %vm378, %v783
      %789 = vst.msk [vmem:[#allocation3 + $0x18] sm:$0xff] %vm378, %v784
      %790 = vst.msk [vmem:[#allocation3 + $0x20] sm:$0xff] %vm378, %v785
      %v791 = vld [vmem:[#allocation2 + $0xa] sm:$0xff]
      %v792 = vld [vmem:[#allocation2 + $0x12] sm:$0xff]
      %v793 = vld [vmem:[#allocation2 + $0x1a] sm:$0xff]
      %v794 = vld [vmem:[#allocation2 + $0x22] sm:$0xff]
      %v795 = vld [vmem:[#allocation2 + $0x2a] sm:$0xff]
      %v796 = vld [vmem:[#allocation3] sm:$0xff]
      %v797 = vld [vmem:[#allocation3 + $0x8] sm:$0xff]
      %v798 = vld [vmem:[#allocation3 + $0x10] sm:$0xff]
      %v799 = vld [vmem:[#allocation3 + $0x18] sm:$0xff]
      %v800 = vld [vmem:[#allocation3 + $0x20] sm:$0xff]
      %s801 = scalar_lea.vmem %s3, 240
      %v802 = vld [vmem:[%s801] sm:$0xff]
      %v803 = vld [vmem:[%s801 + $0x8] sm:$0xff]
      %v804 = vld [vmem:[%s801 + $0x10] sm:$0xff]
      %v805 = vld [vmem:[%s801 + $0x18] sm:$0xff]
      %v806 = vld [vmem:[%s801 + $0x20] sm:$0xff]
      %v807 = vld [vmem:[%s801 + $0x28] sm:$0xff]
      %v808 = vld [vmem:[%s801 + $0x30] sm:$0xff]
      %v809 = vld [vmem:[%s801 + $0x38] sm:$0xff]
      %v810 = vld [vmem:[%s801 + $0x40] sm:$0xff]
      %v811 = vld [vmem:[%s801 + $0x48] sm:$0xff]
      %v813 = vsel %vm272, %v791, 0
      %v816 = vsel %vm272, %v792, 0
      %v819 = vsel %vm272, %v793, 0
      %v822 = vsel %vm272, %v794, 0
      %v825 = vsel %vm272, %v795, 0
      %827 = vmatprep.subr.mxu0 0.0
      %828 = vmatpush1.msra.mxu0 0.0
      %829 = vmatprep.subr.mxu0 0.0
      %830 = vmatpush1.msra.mxu0 0.0
      %831 = vmatprep.subr.mxu0 0.0
      %832 = vmatpush1.msra.mxu0 0.0
      %833 = vmatprep.subr.mxu0 0.0
      %834 = vmatpush1.msra.mxu0 0.0
      %835 = vmatprep.subr.mxu0 0.0
      %836 = vmatpush1.msra.mxu0 0.0
      %837 = vmatprep.subr.mxu0 0.0
      %838 = vmatpush1.msra.mxu0 0.0
      %839 = vmatprep.subr.mxu0 0.0
      %840 = vmatpush1.msra.mxu0 %v811
      %841 = vmatprep.subr.mxu0 0.0
      %842 = vmatpush1.msra.mxu0 %v810
      %843 = vmatprep.subr.mxu0 0.0
      %844 = vmatpush1.msra.mxu0 %v809
      %845 = vmatprep.subr.mxu0 0.0
      %846 = vmatpush1.msra.mxu0 %v808
      %847 = vmatprep.subr.mxu0 0.0
      %848 = vmatpush1.msra.mxu0 %v807
      %849 = vmatprep.subr.mxu0 0.0
      %850 = vmatpush1.msra.mxu0 %v806
      %851 = vmatprep.subr.mxu0 0.0
      %852 = vmatpush1.msra.mxu0 %v805
      %853 = vmatprep.subr.mxu0 0.0
      %854 = vmatpush1.msra.mxu0 %v804
      %855 = vmatprep.subr.mxu0 0.0
      %856 = vmatpush1.msra.mxu0 %v803
      %857 = vmatprep.subr.mxu0 0.0
      %858 = vmatpush1.msra.mxu0 %v802
      %859 = vmatprep.subr.mxu0 0.0
      %860 = vmatpush2.msra.mxu0 0.0
      %861 = vmatprep.subr.mxu0 0.0
      %862 = vmatpush2.msra.mxu0 0.0
      %863 = vmatprep.subr.mxu0 0.0
      %864 = vmatpush2.msra.mxu0 0.0
      %865 = vmatprep.subr.mxu0 0.0
      %866 = vmatpush2.msra.mxu0 0.0
      %867 = vmatprep.subr.mxu0 0.0
      %868 = vmatpush2.msra.mxu0 0.0
      %869 = vmatprep.subr.mxu0 0.0
      %870 = vmatpush2.msra.mxu0 0.0
      %871 = vmatprep.subr.mxu0 0.0
      %872 = vmatpush2.msra.mxu0 0.0
      %873 = vmatprep.subr.mxu0 0.0
      %874 = vmatpush2.msra.mxu0 0.0
      %875 = vmatprep.subr.mxu0 0.0
      %876 = vmatpush2.msra.mxu0 0.0
      %877 = vmatprep.subr.mxu0 0.0
      %878 = vmatpush2.msra.mxu0 0.0
      %879 = vmatprep.subr.mxu0 0.0
      %880 = vmatpush2.msra.mxu0 0.0
      %881 = vmatprep.subr.mxu0 0.0
      %882 = vmatpush2.msra.mxu0 0.0
      %883 = vmatprep.subr.mxu0 0.0
      %884 = vmatpush2.msra.mxu0 0.0
      %885 = vmatprep.subr.mxu0 0.0
      %886 = vmatpush2.msra.mxu0 0.0
      %887 = vmatprep.subr.mxu0 0.0
      %888 = vmatpush2.msra.mxu0 0.0
      %889 = vmatprep.subr.mxu0 0.0
      %890 = vmatpush2.msra.mxu0 0.0
      %891 = vmatprep.mubr.f32.mxu0 0.0
      %892 = vmatmul.mubr.f32.gmra.mxu0 %v813
      %v893 = vpop.f32.mrf.mxu0
      %v894 = vadd.f32 0.0, %v893
      %v895 = vpop.f32.mrf.mxu0
      %896 = vmatprep.mubr.f32.mxu0 0.0
      %897 = vmatmul.mubr.f32.gmra.mxu0 %v816
      %v898 = vpop.f32.mrf.mxu0
      %v899 = vadd.f32 0.0, %v898
      %v900 = vpop.f32.mrf.mxu0
      %901 = vmatprep.mubr.f32.mxu0 0.0
      %902 = vmatmul.mubr.f32.gmra.mxu0 %v819
      %v903 = vpop.f32.mrf.mxu0
      %v904 = vadd.f32 0.0, %v903
      %v905 = vpop.f32.mrf.mxu0
      %906 = vmatprep.mubr.f32.mxu0 0.0
      %907 = vmatmul.mubr.f32.gmra.mxu0 %v822
      %v908 = vpop.f32.mrf.mxu0
      %v909 = vadd.f32 0.0, %v908
      %v910 = vpop.f32.mrf.mxu0
      %911 = vmatprep.mubr.f32.mxu0 0.0
      %912 = vmatmul.mubr.f32.gmra.mxu0 %v825
      %v913 = vpop.f32.mrf.mxu0
      %v914 = vadd.f32 0.0, %v913
      %v915 = vpop.f32.mrf.mxu0
      %916 = vdwg.mxu0
      %v917 = vadd.f32 %v796, %v894
      %v918 = vadd.f32 %v797, %v899
      %v919 = vadd.f32 %v798, %v904
      %v920 = vadd.f32 %v799, %v909
      %v921 = vadd.f32 %v800, %v914
      %922 = vst.msk [vmem:[#allocation3] sm:$0xff] %vm378, %v917
      %923 = vst.msk [vmem:[#allocation3 + $0x8] sm:$0xff] %vm378, %v918
      %924 = vst.msk [vmem:[#allocation3 + $0x10] sm:$0xff] %vm378, %v919
      %925 = vst.msk [vmem:[#allocation3 + $0x18] sm:$0xff] %vm378, %v920
      %926 = vst.msk [vmem:[#allocation3 + $0x20] sm:$0xff] %vm378, %v921
      %v927 = vld [vmem:[#allocation2 + $0xb] sm:$0xff]
      %v928 = vld [vmem:[#allocation2 + $0x13] sm:$0xff]
      %v929 = vld [vmem:[#allocation2 + $0x1b] sm:$0xff]
      %v930 = vld [vmem:[#allocation2 + $0x23] sm:$0xff]
      %v931 = vld [vmem:[#allocation2 + $0x2b] sm:$0xff]
      %v932 = vld [vmem:[#allocation3] sm:$0xff]
      %v933 = vld [vmem:[#allocation3 + $0x8] sm:$0xff]
      %v934 = vld [vmem:[#allocation3 + $0x10] sm:$0xff]
      %v935 = vld [vmem:[#allocation3 + $0x18] sm:$0xff]
      %v936 = vld [vmem:[#allocation3 + $0x20] sm:$0xff]
      %s937 = scalar_lea.vmem %s3, 320
      %v938 = vld [vmem:[%s937] sm:$0xff]
      %v939 = vld [vmem:[%s937 + $0x8] sm:$0xff]
      %v940 = vld [vmem:[%s937 + $0x10] sm:$0xff]
      %v941 = vld [vmem:[%s937 + $0x18] sm:$0xff]
      %v942 = vld [vmem:[%s937 + $0x20] sm:$0xff]
      %v943 = vld [vmem:[%s937 + $0x28] sm:$0xff]
      %v944 = vld [vmem:[%s937 + $0x30] sm:$0xff]
      %v945 = vld [vmem:[%s937 + $0x38] sm:$0xff]
      %v946 = vld [vmem:[%s937 + $0x40] sm:$0xff]
      %v947 = vld [vmem:[%s937 + $0x48] sm:$0xff]
      %v949 = vsel %vm272, %v927, 0
      %v952 = vsel %vm272, %v928, 0
      %v955 = vsel %vm272, %v929, 0
      %v958 = vsel %vm272, %v930, 0
      %v961 = vsel %vm272, %v931, 0
      %963 = vmatprep.subr.mxu0 0.0
      %964 = vmatpush1.msra.mxu0 0.0
      %965 = vmatprep.subr.mxu0 0.0
      %966 = vmatpush1.msra.mxu0 0.0
      %967 = vmatprep.subr.mxu0 0.0
      %968 = vmatpush1.msra.mxu0 0.0
      %969 = vmatprep.subr.mxu0 0.0
      %970 = vmatpush1.msra.mxu0 0.0
      %971 = vmatprep.subr.mxu0 0.0
      %972 = vmatpush1.msra.mxu0 0.0
      %973 = vmatprep.subr.mxu0 0.0
      %974 = vmatpush1.msra.mxu0 0.0
      %975 = vmatprep.subr.mxu0 0.0
      %976 = vmatpush1.msra.mxu0 %v947
      %977 = vmatprep.subr.mxu0 0.0
      %978 = vmatpush1.msra.mxu0 %v946
      %979 = vmatprep.subr.mxu0 0.0
      %980 = vmatpush1.msra.mxu0 %v945
      %981 = vmatprep.subr.mxu0 0.0
      %982 = vmatpush1.msra.mxu0 %v944
      %983 = vmatprep.subr.mxu0 0.0
      %984 = vmatpush1.msra.mxu0 %v943
      %985 = vmatprep.subr.mxu0 0.0
      %986 = vmatpush1.msra.mxu0 %v942
      %987 = vmatprep.subr.mxu0 0.0
      %988 = vmatpush1.msra.mxu0 %v941
      %989 = vmatprep.subr.mxu0 0.0
      %990 = vmatpush1.msra.mxu0 %v940
      %991 = vmatprep.subr.mxu0 0.0
      %992 = vmatpush1.msra.mxu0 %v939
      %993 = vmatprep.subr.mxu0 0.0
      %994 = vmatpush1.msra.mxu0 %v938
      %995 = vmatprep.subr.mxu0 0.0
      %996 = vmatpush2.msra.mxu0 0.0
      %997 = vmatprep.subr.mxu0 0.0
      %998 = vmatpush2.msra.mxu0 0.0
      %999 = vmatprep.subr.mxu0 0.0
      %1000 = vmatpush2.msra.mxu0 0.0
      %1001 = vmatprep.subr.mxu0 0.0
      %1002 = vmatpush2.msra.mxu0 0.0
      %1003 = vmatprep.subr.mxu0 0.0
      %1004 = vmatpush2.msra.mxu0 0.0
      %1005 = vmatprep.subr.mxu0 0.0
      %1006 = vmatpush2.msra.mxu0 0.0
      %1007 = vmatprep.subr.mxu0 0.0
      %1008 = vmatpush2.msra.mxu0 0.0
      %1009 = vmatprep.subr.mxu0 0.0
      %1010 = vmatpush2.msra.mxu0 0.0
      %1011 = vmatprep.subr.mxu0 0.0
      %1012 = vmatpush2.msra.mxu0 0.0
      %1013 = vmatprep.subr.mxu0 0.0
      %1014 = vmatpush2.msra.mxu0 0.0
      %1015 = vmatprep.subr.mxu0 0.0
      %1016 = vmatpush2.msra.mxu0 0.0
      %1017 = vmatprep.subr.mxu0 0.0
      %1018 = vmatpush2.msra.mxu0 0.0
      %1019 = vmatprep.subr.mxu0 0.0
      %1020 = vmatpush2.msra.mxu0 0.0
      %1021 = vmatprep.subr.mxu0 0.0
      %1022 = vmatpush2.msra.mxu0 0.0
      %1023 = vmatprep.subr.mxu0 0.0
      %1024 = vmatpush2.msra.mxu0 0.0
      %1025 = vmatprep.subr.mxu0 0.0
      %1026 = vmatpush2.msra.mxu0 0.0
      %1027 = vmatprep.mubr.f32.mxu0 0.0
      %1028 = vmatmul.mubr.f32.gmra.mxu0 %v949
      %v1029 = vpop.f32.mrf.mxu0
      %v1030 = vadd.f32 0.0, %v1029
      %v1031 = vpop.f32.mrf.mxu0
      %1032 = vmatprep.mubr.f32.mxu0 0.0
      %1033 = vmatmul.mubr.f32.gmra.mxu0 %v952
      %v1034 = vpop.f32.mrf.mxu0
      %v1035 = vadd.f32 0.0, %v1034
      %v1036 = vpop.f32.mrf.mxu0
      %1037 = vmatprep.mubr.f32.mxu0 0.0
      %1038 = vmatmul.mubr.f32.gmra.mxu0 %v955
      %v1039 = vpop.f32.mrf.mxu0
      %v1040 = vadd.f32 0.0, %v1039
      %v1041 = vpop.f32.mrf.mxu0
      %1042 = vmatprep.mubr.f32.mxu0 0.0
      %1043 = vmatmul.mubr.f32.gmra.mxu0 %v958
      %v1044 = vpop.f32.mrf.mxu0
      %v1045 = vadd.f32 0.0, %v1044
      %v1046 = vpop.f32.mrf.mxu0
      %1047 = vmatprep.mubr.f32.mxu0 0.0
      %1048 = vmatmul.mubr.f32.gmra.mxu0 %v961
      %v1049 = vpop.f32.mrf.mxu0
      %v1050 = vadd.f32 0.0, %v1049
      %v1051 = vpop.f32.mrf.mxu0
      %1052 = vdwg.mxu0
      %v1053 = vadd.f32 %v932, %v1030
      %v1054 = vadd.f32 %v933, %v1035
      %v1055 = vadd.f32 %v934, %v1040
      %v1056 = vadd.f32 %v935, %v1045
      %v1057 = vadd.f32 %v936, %v1050
      %1058 = vst.msk [vmem:[#allocation3] sm:$0xff] %vm378, %v1053
      %1059 = vst.msk [vmem:[#allocation3 + $0x8] sm:$0xff] %vm378, %v1054
      %1060 = vst.msk [vmem:[#allocation3 + $0x10] sm:$0xff] %vm378, %v1055
      %1061 = vst.msk [vmem:[#allocation3 + $0x18] sm:$0xff] %vm378, %v1056
      %1062 = vst.msk [vmem:[#allocation3 + $0x20] sm:$0xff] %vm378, %v1057
      %v1063 = vld [vmem:[#allocation2 + $0xc] sm:$0xff]
      %v1064 = vld [vmem:[#allocation2 + $0x14] sm:$0xff]
      %v1065 = vld [vmem:[#allocation2 + $0x1c] sm:$0xff]
      %v1066 = vld [vmem:[#allocation2 + $0x24] sm:$0xff]
      %v1067 = vld [vmem:[#allocation2 + $0x2c] sm:$0xff]
      %v1068 = vld [vmem:[#allocation3] sm:$0xff]
      %v1069 = vld [vmem:[#allocation3 + $0x8] sm:$0xff]
      %v1070 = vld [vmem:[#allocation3 + $0x10] sm:$0xff]
      %v1071 = vld [vmem:[#allocation3 + $0x18] sm:$0xff]
      %v1072 = vld [vmem:[#allocation3 + $0x20] sm:$0xff]
      %s1073 = scalar_lea.vmem %s3, 400
      %v1074 = vld [vmem:[%s1073] sm:$0xff]
      %v1075 = vld [vmem:[%s1073 + $0x8] sm:$0xff]
      %v1076 = vld [vmem:[%s1073 + $0x10] sm:$0xff]
      %v1077 = vld [vmem:[%s1073 + $0x18] sm:$0xff]
      %v1078 = vld [vmem:[%s1073 + $0x20] sm:$0xff]
      %v1079 = vld [vmem:[%s1073 + $0x28] sm:$0xff]
      %v1080 = vld [vmem:[%s1073 + $0x30] sm:$0xff]
      %v1081 = vld [vmem:[%s1073 + $0x38] sm:$0xff]
      %v1082 = vld [vmem:[%s1073 + $0x40] sm:$0xff]
      %v1083 = vld [vmem:[%s1073 + $0x48] sm:$0xff]
      %v1085 = vsel %vm272, %v1063, 0
      %v1088 = vsel %vm272, %v1064, 0
      %v1091 = vsel %vm272, %v1065, 0
      %v1094 = vsel %vm272, %v1066, 0
      %v1097 = vsel %vm272, %v1067, 0
      %1099 = vmatprep.subr.mxu0 0.0
      %1100 = vmatpush1.msra.mxu0 0.0
      %1101 = vmatprep.subr.mxu0 0.0
      %1102 = vmatpush1.msra.mxu0 0.0
      %1103 = vmatprep.subr.mxu0 0.0
      %1104 = vmatpush1.msra.mxu0 0.0
      %1105 = vmatprep.subr.mxu0 0.0
      %1106 = vmatpush1.msra.mxu0 0.0
      %1107 = vmatprep.subr.mxu0 0.0
      %1108 = vmatpush1.msra.mxu0 0.0
      %1109 = vmatprep.subr.mxu0 0.0
      %1110 = vmatpush1.msra.mxu0 0.0
      %1111 = vmatprep.subr.mxu0 0.0
      %1112 = vmatpush1.msra.mxu0 %v1083
      %1113 = vmatprep.subr.mxu0 0.0
      %1114 = vmatpush1.msra.mxu0 %v1082
      %1115 = vmatprep.subr.mxu0 0.0
      %1116 = vmatpush1.msra.mxu0 %v1081
      %1117 = vmatprep.subr.mxu0 0.0
      %1118 = vmatpush1.msra.mxu0 %v1080
      %1119 = vmatprep.subr.mxu0 0.0
      %1120 = vmatpush1.msra.mxu0 %v1079
      %1121 = vmatprep.subr.mxu0 0.0
      %1122 = vmatpush1.msra.mxu0 %v1078
      %1123 = vmatprep.subr.mxu0 0.0
      %1124 = vmatpush1.msra.mxu0 %v1077
      %1125 = vmatprep.subr.mxu0 0.0
      %1126 = vmatpush1.msra.mxu0 %v1076
      %1127 = vmatprep.subr.mxu0 0.0
      %1128 = vmatpush1.msra.mxu0 %v1075
      %1129 = vmatprep.subr.mxu0 0.0
      %1130 = vmatpush1.msra.mxu0 %v1074
      %1131 = vmatprep.subr.mxu0 0.0
      %1132 = vmatpush2.msra.mxu0 0.0
      %1133 = vmatprep.subr.mxu0 0.0
      %1134 = vmatpush2.msra.mxu0 0.0
      %1135 = vmatprep.subr.mxu0 0.0
      %1136 = vmatpush2.msra.mxu0 0.0
      %1137 = vmatprep.subr.mxu0 0.0
      %1138 = vmatpush2.msra.mxu0 0.0
      %1139 = vmatprep.subr.mxu0 0.0
      %1140 = vmatpush2.msra.mxu0 0.0
      %1141 = vmatprep.subr.mxu0 0.0
      %1142 = vmatpush2.msra.mxu0 0.0
      %1143 = vmatprep.subr.mxu0 0.0
      %1144 = vmatpush2.msra.mxu0 0.0
      %1145 = vmatprep.subr.mxu0 0.0
      %1146 = vmatpush2.msra.mxu0 0.0
      %1147 = vmatprep.subr.mxu0 0.0
      %1148 = vmatpush2.msra.mxu0 0.0
      %1149 = vmatprep.subr.mxu0 0.0
      %1150 = vmatpush2.msra.mxu0 0.0
      %1151 = vmatprep.subr.mxu0 0.0
      %1152 = vmatpush2.msra.mxu0 0.0
      %1153 = vmatprep.subr.mxu0 0.0
      %1154 = vmatpush2.msra.mxu0 0.0
      %1155 = vmatprep.subr.mxu0 0.0
      %1156 = vmatpush2.msra.mxu0 0.0
      %1157 = vmatprep.subr.mxu0 0.0
      %1158 = vmatpush2.msra.mxu0 0.0
      %1159 = vmatprep.subr.mxu0 0.0
      %1160 = vmatpush2.msra.mxu0 0.0
      %1161 = vmatprep.subr.mxu0 0.0
      %1162 = vmatpush2.msra.mxu0 0.0
      %1163 = vmatprep.mubr.f32.mxu0 0.0
      %1164 = vmatmul.mubr.f32.gmra.mxu0 %v1085
      %v1165 = vpop.f32.mrf.mxu0
      %v1166 = vadd.f32 0.0, %v1165
      %v1167 = vpop.f32.mrf.mxu0
      %1168 = vmatprep.mubr.f32.mxu0 0.0
      %1169 = vmatmul.mubr.f32.gmra.mxu0 %v1088
      %v1170 = vpop.f32.mrf.mxu0
      %v1171 = vadd.f32 0.0, %v1170
      %v1172 = vpop.f32.mrf.mxu0
      %1173 = vmatprep.mubr.f32.mxu0 0.0
      %1174 = vmatmul.mubr.f32.gmra.mxu0 %v1091
      %v1175 = vpop.f32.mrf.mxu0
      %v1176 = vadd.f32 0.0, %v1175
      %v1177 = vpop.f32.mrf.mxu0
      %1178 = vmatprep.mubr.f32.mxu0 0.0
      %1179 = vmatmul.mubr.f32.gmra.mxu0 %v1094
      %v1180 = vpop.f32.mrf.mxu0
      %v1181 = vadd.f32 0.0, %v1180
      %v1182 = vpop.f32.mrf.mxu0
      %1183 = vmatprep.mubr.f32.mxu0 0.0
      %1184 = vmatmul.mubr.f32.gmra.mxu0 %v1097
      %v1185 = vpop.f32.mrf.mxu0
      %v1186 = vadd.f32 0.0, %v1185
      %v1187 = vpop.f32.mrf.mxu0
      %1188 = vdwg.mxu0
      %v1189 = vadd.f32 %v1068, %v1166
      %v1190 = vadd.f32 %v1069, %v1171
      %v1191 = vadd.f32 %v1070, %v1176
      %v1192 = vadd.f32 %v1071, %v1181
      %v1193 = vadd.f32 %v1072, %v1186
      %1194 = vst.msk [vmem:[#allocation3] sm:$0xff] %vm378, %v1189
      %1195 = vst.msk [vmem:[#allocation3 + $0x8] sm:$0xff] %vm378, %v1190
      %1196 = vst.msk [vmem:[#allocation3 + $0x10] sm:$0xff] %vm378, %v1191
      %1197 = vst.msk [vmem:[#allocation3 + $0x18] sm:$0xff] %vm378, %v1192
      %1198 = vst.msk [vmem:[#allocation3 + $0x20] sm:$0xff] %vm378, %v1193
      %v1199 = vld [vmem:[#allocation2 + $0x14] sm:$0xff]
      %v1200 = vld [vmem:[#allocation2 + $0x1c] sm:$0xff]
      %v1201 = vld [vmem:[#allocation2 + $0x24] sm:$0xff]
      %v1202 = vld [vmem:[#allocation2 + $0x2c] sm:$0xff]
      %v1203 = vld [vmem:[#allocation2 + $0x34] sm:$0xff]
      %v1204 = vld [vmem:[#allocation3] sm:$0xff]
      %v1205 = vld [vmem:[#allocation3 + $0x8] sm:$0xff]
      %v1206 = vld [vmem:[#allocation3 + $0x10] sm:$0xff]
      %v1207 = vld [vmem:[#allocation3 + $0x18] sm:$0xff]
      %v1208 = vld [vmem:[#allocation3 + $0x20] sm:$0xff]
      %s1209 = scalar_lea.vmem %s3, 480
      %v1210 = vld [vmem:[%s1209] sm:$0xff]
      %v1211 = vld [vmem:[%s1209 + $0x8] sm:$0xff]
      %v1212 = vld [vmem:[%s1209 + $0x10] sm:$0xff]
      %v1213 = vld [vmem:[%s1209 + $0x18] sm:$0xff]
      %v1214 = vld [vmem:[%s1209 + $0x20] sm:$0xff]
      %v1215 = vld [vmem:[%s1209 + $0x28] sm:$0xff]
      %v1216 = vld [vmem:[%s1209 + $0x30] sm:$0xff]
      %v1217 = vld [vmem:[%s1209 + $0x38] sm:$0xff]
      %v1218 = vld [vmem:[%s1209 + $0x40] sm:$0xff]
      %v1219 = vld [vmem:[%s1209 + $0x48] sm:$0xff]
      %v1221 = vsel %vm272, %v1199, 0
      %v1224 = vsel %vm272, %v1200, 0
      %v1227 = vsel %vm272, %v1201, 0
      %v1230 = vsel %vm272, %v1202, 0
      %v1233 = vsel %vm272, %v1203, 0
      %1235 = vmatprep.subr.mxu0 0.0
      %1236 = vmatpush1.msra.mxu0 0.0
      %1237 = vmatprep.subr.mxu0 0.0
      %1238 = vmatpush1.msra.mxu0 0.0
      %1239 = vmatprep.subr.mxu0 0.0
      %1240 = vmatpush1.msra.mxu0 0.0
      %1241 = vmatprep.subr.mxu0 0.0
      %1242 = vmatpush1.msra.mxu0 0.0
      %1243 = vmatprep.subr.mxu0 0.0
      %1244 = vmatpush1.msra.mxu0 0.0
      %1245 = vmatprep.subr.mxu0 0.0
      %1246 = vmatpush1.msra.mxu0 0.0
      %1247 = vmatprep.subr.mxu0 0.0
      %1248 = vmatpush1.msra.mxu0 %v1219
      %1249 = vmatprep.subr.mxu0 0.0
      %1250 = vmatpush1.msra.mxu0 %v1218
      %1251 = vmatprep.subr.mxu0 0.0
      %1252 = vmatpush1.msra.mxu0 %v1217
      %1253 = vmatprep.subr.mxu0 0.0
      %1254 = vmatpush1.msra.mxu0 %v1216
      %1255 = vmatprep.subr.mxu0 0.0
      %1256 = vmatpush1.msra.mxu0 %v1215
      %1257 = vmatprep.subr.mxu0 0.0
      %1258 = vmatpush1.msra.mxu0 %v1214
      %1259 = vmatprep.subr.mxu0 0.0
      %1260 = vmatpush1.msra.mxu0 %v1213
      %1261 = vmatprep.subr.mxu0 0.0
      %1262 = vmatpush1.msra.mxu0 %v1212
      %1263 = vmatprep.subr.mxu0 0.0
      %1264 = vmatpush1.msra.mxu0 %v1211
      %1265 = vmatprep.subr.mxu0 0.0
      %1266 = vmatpush1.msra.mxu0 %v1210
      %1267 = vmatprep.subr.mxu0 0.0
      %1268 = vmatpush2.msra.mxu0 0.0
      %1269 = vmatprep.subr.mxu0 0.0
      %1270 = vmatpush2.msra.mxu0 0.0
      %1271 = vmatprep.subr.mxu0 0.0
      %1272 = vmatpush2.msra.mxu0 0.0
      %1273 = vmatprep.subr.mxu0 0.0
      %1274 = vmatpush2.msra.mxu0 0.0
      %1275 = vmatprep.subr.mxu0 0.0
      %1276 = vmatpush2.msra.mxu0 0.0
      %1277 = vmatprep.subr.mxu0 0.0
      %1278 = vmatpush2.msra.mxu0 0.0
      %1279 = vmatprep.subr.mxu0 0.0
      %1280 = vmatpush2.msra.mxu0 0.0
      %1281 = vmatprep.subr.mxu0 0.0
      %1282 = vmatpush2.msra.mxu0 0.0
      %1283 = vmatprep.subr.mxu0 0.0
      %1284 = vmatpush2.msra.mxu0 0.0
      %1285 = vmatprep.subr.mxu0 0.0
      %1286 = vmatpush2.msra.mxu0 0.0
      %1287 = vmatprep.subr.mxu0 0.0
      %1288 = vmatpush2.msra.mxu0 0.0
      %1289 = vmatprep.subr.mxu0 0.0
      %1290 = vmatpush2.msra.mxu0 0.0
      %1291 = vmatprep.subr.mxu0 0.0
      %1292 = vmatpush2.msra.mxu0 0.0
      %1293 = vmatprep.subr.mxu0 0.0
      %1294 = vmatpush2.msra.mxu0 0.0
      %1295 = vmatprep.subr.mxu0 0.0
      %1296 = vmatpush2.msra.mxu0 0.0
      %1297 = vmatprep.subr.mxu0 0.0
      %1298 = vmatpush2.msra.mxu0 0.0
      %1299 = vmatprep.mubr.f32.mxu0 0.0
      %1300 = vmatmul.mubr.f32.gmra.mxu0 %v1221
      %v1301 = vpop.f32.mrf.mxu0
      %v1302 = vadd.f32 0.0, %v1301
      %v1303 = vpop.f32.mrf.mxu0
      %1304 = vmatprep.mubr.f32.mxu0 0.0
      %1305 = vmatmul.mubr.f32.gmra.mxu0 %v1224
      %v1306 = vpop.f32.mrf.mxu0
      %v1307 = vadd.f32 0.0, %v1306
      %v1308 = vpop.f32.mrf.mxu0
      %1309 = vmatprep.mubr.f32.mxu0 0.0
      %1310 = vmatmul.mubr.f32.gmra.mxu0 %v1227
      %v1311 = vpop.f32.mrf.mxu0
      %v1312 = vadd.f32 0.0, %v1311
      %v1313 = vpop.f32.mrf.mxu0
      %1314 = vmatprep.mubr.f32.mxu0 0.0
      %1315 = vmatmul.mubr.f32.gmra.mxu0 %v1230
      %v1316 = vpop.f32.mrf.mxu0
      %v1317 = vadd.f32 0.0, %v1316
      %v1318 = vpop.f32.mrf.mxu0
      %1319 = vmatprep.mubr.f32.mxu0 0.0
      %1320 = vmatmul.mubr.f32.gmra.mxu0 %v1233
      %v1321 = vpop.f32.mrf.mxu0
      %v1322 = vadd.f32 0.0, %v1321
      %v1323 = vpop.f32.mrf.mxu0
      %1324 = vdwg.mxu0
      %v1325 = vadd.f32 %v1204, %v1302
      %v1326 = vadd.f32 %v1205, %v1307
      %v1327 = vadd.f32 %v1206, %v1312
      %v1328 = vadd.f32 %v1207, %v1317
      %v1329 = vadd.f32 %v1208, %v1322
      %1330 = vst.msk [vmem:[#allocation3] sm:$0xff] %vm378, %v1325
      %1331 = vst.msk [vmem:[#allocation3 + $0x8] sm:$0xff] %vm378, %v1326
      %1332 = vst.msk [vmem:[#allocation3 + $0x10] sm:$0xff] %vm378, %v1327
      %1333 = vst.msk [vmem:[#allocation3 + $0x18] sm:$0xff] %vm378, %v1328
      %1334 = vst.msk [vmem:[#allocation3 + $0x20] sm:$0xff] %vm378, %v1329
      %v1335 = vld [vmem:[#allocation2 + $0x15] sm:$0xff]
      %v1336 = vld [vmem:[#allocation2 + $0x1d] sm:$0xff]
      %v1337 = vld [vmem:[#allocation2 + $0x25] sm:$0xff]
      %v1338 = vld [vmem:[#allocation2 + $0x2d] sm:$0xff]
      %v1339 = vld [vmem:[#allocation2 + $0x35] sm:$0xff]
      %v1340 = vld [vmem:[#allocation3] sm:$0xff]
      %v1341 = vld [vmem:[#allocation3 + $0x8] sm:$0xff]
      %v1342 = vld [vmem:[#allocation3 + $0x10] sm:$0xff]
      %v1343 = vld [vmem:[#allocation3 + $0x18] sm:$0xff]
      %v1344 = vld [vmem:[#allocation3 + $0x20] sm:$0xff]
      %s1345 = scalar_lea.vmem %s3, 560
      %v1346 = vld [vmem:[%s1345] sm:$0xff]
      %v1347 = vld [vmem:[%s1345 + $0x8] sm:$0xff]
      %v1348 = vld [vmem:[%s1345 + $0x10] sm:$0xff]
      %v1349 = vld [vmem:[%s1345 + $0x18] sm:$0xff]
      %v1350 = vld [vmem:[%s1345 + $0x20] sm:$0xff]
      %v1351 = vld [vmem:[%s1345 + $0x28] sm:$0xff]
      %v1352 = vld [vmem:[%s1345 + $0x30] sm:$0xff]
      %v1353 = vld [vmem:[%s1345 + $0x38] sm:$0xff]
      %v1354 = vld [vmem:[%s1345 + $0x40] sm:$0xff]
      %v1355 = vld [vmem:[%s1345 + $0x48] sm:$0xff]
      %v1357 = vsel %vm272, %v1335, 0
      %v1360 = vsel %vm272, %v1336, 0
      %v1363 = vsel %vm272, %v1337, 0
      %v1366 = vsel %vm272, %v1338, 0
      %v1369 = vsel %vm272, %v1339, 0
      %1371 = vmatprep.subr.mxu0 0.0
      %1372 = vmatpush1.msra.mxu0 0.0
      %1373 = vmatprep.subr.mxu0 0.0
      %1374 = vmatpush1.msra.mxu0 0.0
      %1375 = vmatprep.subr.mxu0 0.0
      %1376 = vmatpush1.msra.mxu0 0.0
      %1377 = vmatprep.subr.mxu0 0.0
      %1378 = vmatpush1.msra.mxu0 0.0
      %1379 = vmatprep.subr.mxu0 0.0
      %1380 = vmatpush1.msra.mxu0 0.0
      %1381 = vmatprep.subr.mxu0 0.0
      %1382 = vmatpush1.msra.mxu0 0.0
      %1383 = vmatprep.subr.mxu0 0.0
      %1384 = vmatpush1.msra.mxu0 %v1355
      %1385 = vmatprep.subr.mxu0 0.0
      %1386 = vmatpush1.msra.mxu0 %v1354
      %1387 = vmatprep.subr.mxu0 0.0
      %1388 = vmatpush1.msra.mxu0 %v1353
      %1389 = vmatprep.subr.mxu0 0.0
      %1390 = vmatpush1.msra.mxu0 %v1352
      %1391 = vmatprep.subr.mxu0 0.0
      %1392 = vmatpush1.msra.mxu0 %v1351
      %1393 = vmatprep.subr.mxu0 0.0
      %1394 = vmatpush1.msra.mxu0 %v1350
      %1395 = vmatprep.subr.mxu0 0.0
      %1396 = vmatpush1.msra.mxu0 %v1349
      %1397 = vmatprep.subr.mxu0 0.0
      %1398 = vmatpush1.msra.mxu0 %v1348
      %1399 = vmatprep.subr.mxu0 0.0
      %1400 = vmatpush1.msra.mxu0 %v1347
      %1401 = vmatprep.subr.mxu0 0.0
      %1402 = vmatpush1.msra.mxu0 %v1346
      %1403 = vmatprep.subr.mxu0 0.0
      %1404 = vmatpush2.msra.mxu0 0.0
      %1405 = vmatprep.subr.mxu0 0.0
      %1406 = vmatpush2.msra.mxu0 0.0
      %1407 = vmatprep.subr.mxu0 0.0
      %1408 = vmatpush2.msra.mxu0 0.0
      %1409 = vmatprep.subr.mxu0 0.0
      %1410 = vmatpush2.msra.mxu0 0.0
      %1411 = vmatprep.subr.mxu0 0.0
      %1412 = vmatpush2.msra.mxu0 0.0
      %1413 = vmatprep.subr.mxu0 0.0
      %1414 = vmatpush2.msra.mxu0 0.0
      %1415 = vmatprep.subr.mxu0 0.0
      %1416 = vmatpush2.msra.mxu0 0.0
      %1417 = vmatprep.subr.mxu0 0.0
      %1418 = vmatpush2.msra.mxu0 0.0
      %1419 = vmatprep.subr.mxu0 0.0
      %1420 = vmatpush2.msra.mxu0 0.0
      %1421 = vmatprep.subr.mxu0 0.0
      %1422 = vmatpush2.msra.mxu0 0.0
      %1423 = vmatprep.subr.mxu0 0.0
      %1424 = vmatpush2.msra.mxu0 0.0
      %1425 = vmatprep.subr.mxu0 0.0
      %1426 = vmatpush2.msra.mxu0 0.0
      %1427 = vmatprep.subr.mxu0 0.0
      %1428 = vmatpush2.msra.mxu0 0.0
      %1429 = vmatprep.subr.mxu0 0.0
      %1430 = vmatpush2.msra.mxu0 0.0
      %1431 = vmatprep.subr.mxu0 0.0
      %1432 = vmatpush2.msra.mxu0 0.0
      %1433 = vmatprep.subr.mxu0 0.0
      %1434 = vmatpush2.msra.mxu0 0.0
      %1435 = vmatprep.mubr.f32.mxu0 0.0
      %1436 = vmatmul.mubr.f32.gmra.mxu0 %v1357
      %v1437 = vpop.f32.mrf.mxu0
      %v1438 = vadd.f32 0.0, %v1437
      %v1439 = vpop.f32.mrf.mxu0
      %1440 = vmatprep.mubr.f32.mxu0 0.0
      %1441 = vmatmul.mubr.f32.gmra.mxu0 %v1360
      %v1442 = vpop.f32.mrf.mxu0
      %v1443 = vadd.f32 0.0, %v1442
      %v1444 = vpop.f32.mrf.mxu0
      %1445 = vmatprep.mubr.f32.mxu0 0.0
      %1446 = vmatmul.mubr.f32.gmra.mxu0 %v1363
      %v1447 = vpop.f32.mrf.mxu0
      %v1448 = vadd.f32 0.0, %v1447
      %v1449 = vpop.f32.mrf.mxu0
      %1450 = vmatprep.mubr.f32.mxu0 0.0
      %1451 = vmatmul.mubr.f32.gmra.mxu0 %v1366
      %v1452 = vpop.f32.mrf.mxu0
      %v1453 = vadd.f32 0.0, %v1452
      %v1454 = vpop.f32.mrf.mxu0
      %1455 = vmatprep.mubr.f32.mxu0 0.0
      %1456 = vmatmul.mubr.f32.gmra.mxu0 %v1369
      %v1457 = vpop.f32.mrf.mxu0
      %v1458 = vadd.f32 0.0, %v1457
      %v1459 = vpop.f32.mrf.mxu0
      %1460 = vdwg.mxu0
      %v1461 = vadd.f32 %v1340, %v1438
      %v1462 = vadd.f32 %v1341, %v1443
      %v1463 = vadd.f32 %v1342, %v1448
      %v1464 = vadd.f32 %v1343, %v1453
      %v1465 = vadd.f32 %v1344, %v1458
      %1466 = vst.msk [vmem:[#allocation3] sm:$0xff] %vm378, %v1461
      %1467 = vst.msk [vmem:[#allocation3 + $0x8] sm:$0xff] %vm378, %v1462
      %1468 = vst.msk [vmem:[#allocation3 + $0x10] sm:$0xff] %vm378, %v1463
      %1469 = vst.msk [vmem:[#allocation3 + $0x18] sm:$0xff] %vm378, %v1464
      %1470 = vst.msk [vmem:[#allocation3 + $0x20] sm:$0xff] %vm378, %v1465
      %v1471 = vld [vmem:[#allocation2 + $0x16] sm:$0xff]
      %v1472 = vld [vmem:[#allocation2 + $0x1e] sm:$0xff]
      %v1473 = vld [vmem:[#allocation2 + $0x26] sm:$0xff]
      %v1474 = vld [vmem:[#allocation2 + $0x2e] sm:$0xff]
      %v1475 = vld [vmem:[#allocation2 + $0x36] sm:$0xff]
      %v1476 = vld [vmem:[#allocation3] sm:$0xff]
      %v1477 = vld [vmem:[#allocation3 + $0x8] sm:$0xff]
      %v1478 = vld [vmem:[#allocation3 + $0x10] sm:$0xff]
      %v1479 = vld [vmem:[#allocation3 + $0x18] sm:$0xff]
      %v1480 = vld [vmem:[#allocation3 + $0x20] sm:$0xff]
      %s1481 = scalar_lea.vmem %s3, 640
      %v1482 = vld [vmem:[%s1481] sm:$0xff]
      %v1483 = vld [vmem:[%s1481 + $0x8] sm:$0xff]
      %v1484 = vld [vmem:[%s1481 + $0x10] sm:$0xff]
      %v1485 = vld [vmem:[%s1481 + $0x18] sm:$0xff]
      %v1486 = vld [vmem:[%s1481 + $0x20] sm:$0xff]
      %v1487 = vld [vmem:[%s1481 + $0x28] sm:$0xff]
      %v1488 = vld [vmem:[%s1481 + $0x30] sm:$0xff]
      %v1489 = vld [vmem:[%s1481 + $0x38] sm:$0xff]
      %v1490 = vld [vmem:[%s1481 + $0x40] sm:$0xff]
      %v1491 = vld [vmem:[%s1481 + $0x48] sm:$0xff]
      %v1493 = vsel %vm272, %v1471, 0
      %v1496 = vsel %vm272, %v1472, 0
      %v1499 = vsel %vm272, %v1473, 0
      %v1502 = vsel %vm272, %v1474, 0
      %v1505 = vsel %vm272, %v1475, 0
      %1507 = vmatprep.subr.mxu0 0.0
      %1508 = vmatpush1.msra.mxu0 0.0
      %1509 = vmatprep.subr.mxu0 0.0
      %1510 = vmatpush1.msra.mxu0 0.0
      %1511 = vmatprep.subr.mxu0 0.0
      %1512 = vmatpush1.msra.mxu0 0.0
      %1513 = vmatprep.subr.mxu0 0.0
      %1514 = vmatpush1.msra.mxu0 0.0
      %1515 = vmatprep.subr.mxu0 0.0
      %1516 = vmatpush1.msra.mxu0 0.0
      %1517 = vmatprep.subr.mxu0 0.0
      %1518 = vmatpush1.msra.mxu0 0.0
      %1519 = vmatprep.subr.mxu0 0.0
      %1520 = vmatpush1.msra.mxu0 %v1491
      %1521 = vmatprep.subr.mxu0 0.0
      %1522 = vmatpush1.msra.mxu0 %v1490
      %1523 = vmatprep.subr.mxu0 0.0
      %1524 = vmatpush1.msra.mxu0 %v1489
      %1525 = vmatprep.subr.mxu0 0.0
      %1526 = vmatpush1.msra.mxu0 %v1488
      %1527 = vmatprep.subr.mxu0 0.0
      %1528 = vmatpush1.msra.mxu0 %v1487
      %1529 = vmatprep.subr.mxu0 0.0
      %1530 = vmatpush1.msra.mxu0 %v1486
      %1531 = vmatprep.subr.mxu0 0.0
      %1532 = vmatpush1.msra.mxu0 %v1485
      %1533 = vmatprep.subr.mxu0 0.0
      %1534 = vmatpush1.msra.mxu0 %v1484
      %1535 = vmatprep.subr.mxu0 0.0
      %1536 = vmatpush1.msra.mxu0 %v1483
      %1537 = vmatprep.subr.mxu0 0.0
      %1538 = vmatpush1.msra.mxu0 %v1482
      %1539 = vmatprep.subr.mxu0 0.0
      %1540 = vmatpush2.msra.mxu0 0.0
      %1541 = vmatprep.subr.mxu0 0.0
      %1542 = vmatpush2.msra.mxu0 0.0
      %1543 = vmatprep.subr.mxu0 0.0
      %1544 = vmatpush2.msra.mxu0 0.0
      %1545 = vmatprep.subr.mxu0 0.0
      %1546 = vmatpush2.msra.mxu0 0.0
      %1547 = vmatprep.subr.mxu0 0.0
      %1548 = vmatpush2.msra.mxu0 0.0
      %1549 = vmatprep.subr.mxu0 0.0
      %1550 = vmatpush2.msra.mxu0 0.0
      %1551 = vmatprep.subr.mxu0 0.0
      %1552 = vmatpush2.msra.mxu0 0.0
      %1553 = vmatprep.subr.mxu0 0.0
      %1554 = vmatpush2.msra.mxu0 0.0
      %1555 = vmatprep.subr.mxu0 0.0
      %1556 = vmatpush2.msra.mxu0 0.0
      %1557 = vmatprep.subr.mxu0 0.0
      %1558 = vmatpush2.msra.mxu0 0.0
      %1559 = vmatprep.subr.mxu0 0.0
      %1560 = vmatpush2.msra.mxu0 0.0
      %1561 = vmatprep.subr.mxu0 0.0
      %1562 = vmatpush2.msra.mxu0 0.0
      %1563 = vmatprep.subr.mxu0 0.0
      %1564 = vmatpush2.msra.mxu0 0.0
      %1565 = vmatprep.subr.mxu0 0.0
      %1566 = vmatpush2.msra.mxu0 0.0
      %1567 = vmatprep.subr.mxu0 0.0
      %1568 = vmatpush2.msra.mxu0 0.0
      %1569 = vmatprep.subr.mxu0 0.0
      %1570 = vmatpush2.msra.mxu0 0.0
      %1571 = vmatprep.mubr.f32.mxu0 0.0
      %1572 = vmatmul.mubr.f32.gmra.mxu0 %v1493
      %v1573 = vpop.f32.mrf.mxu0
      %v1574 = vadd.f32 0.0, %v1573
      %v1575 = vpop.f32.mrf.mxu0
      %1576 = vmatprep.mubr.f32.mxu0 0.0
      %1577 = vmatmul.mubr.f32.gmra.mxu0 %v1496
      %v1578 = vpop.f32.mrf.mxu0
      %v1579 = vadd.f32 0.0, %v1578
      %v1580 = vpop.f32.mrf.mxu0
      %1581 = vmatprep.mubr.f32.mxu0 0.0
      %1582 = vmatmul.mubr.f32.gmra.mxu0 %v1499
      %v1583 = vpop.f32.mrf.mxu0
      %v1584 = vadd.f32 0.0, %v1583
      %v1585 = vpop.f32.mrf.mxu0
      %1586 = vmatprep.mubr.f32.mxu0 0.0
      %1587 = vmatmul.mubr.f32.gmra.mxu0 %v1502
      %v1588 = vpop.f32.mrf.mxu0
      %v1589 = vadd.f32 0.0, %v1588
      %v1590 = vpop.f32.mrf.mxu0
      %1591 = vmatprep.mubr.f32.mxu0 0.0
      %1592 = vmatmul.mubr.f32.gmra.mxu0 %v1505
      %v1593 = vpop.f32.mrf.mxu0
      %v1594 = vadd.f32 0.0, %v1593
      %v1595 = vpop.f32.mrf.mxu0
      %1596 = vdwg.mxu0
      %v1597 = vadd.f32 %v1476, %v1574
      %v1598 = vadd.f32 %v1477, %v1579
      %v1599 = vadd.f32 %v1478, %v1584
      %v1600 = vadd.f32 %v1479, %v1589
      %v1601 = vadd.f32 %v1480, %v1594
      %1602 = vst.msk [vmem:[#allocation3] sm:$0xff] %vm378, %v1597
      %1603 = vst.msk [vmem:[#allocation3 + $0x8] sm:$0xff] %vm378, %v1598
      %1604 = vst.msk [vmem:[#allocation3 + $0x10] sm:$0xff] %vm378, %v1599
      %1605 = vst.msk [vmem:[#allocation3 + $0x18] sm:$0xff] %vm378, %v1600
      %1606 = vst.msk [vmem:[#allocation3 + $0x20] sm:$0xff] %vm378, %v1601
      %v1607 = vld [vmem:[#allocation3] sm:$0xff]
      %v1608 = vld [vmem:[%s4] sm:$0x1]
      %v1610 = vlaneseq
      %v1611 = vshrl.u32 %v1610, 7
      %v1612 = vsub.s32 0, %v1611
      %v1613 = vrot.slane %v1608, %v1612
      %v1615 = vadd.f32 %v1607, %v1613
      %v1616 = vld [vmem:[%s266] sm:$0xff]
      %v1617 = vadd.f32 %v1615, %v1616
      %1618 = vst.msk [vmem:[%s271] sm:$0xff] %vm378, %v1617
      %v1619 = vld [vmem:[#allocation3 + $0xa] sm:$0xff]
      %v1620 = vld [vmem:[%s4] sm:$0x1]
      %v1622 = vlaneseq
      %v1623 = vshrl.u32 %v1622, 7
      %v1624 = vsub.s32 0, %v1623
      %v1625 = vrot.slane %v1620, %v1624
      %v1627 = vadd.f32 %v1619, %v1625
      %s1628 = scalar_lea.vmem %s266, 8
      %v1629 = vld [vmem:[%s1628] sm:$0xff]
      %v1630 = vadd.f32 %v1627, %v1629
      %s1631 = scalar_lea.vmem %s271, 8
      %1632 = vst.msk [vmem:[%s1631] sm:$0xff] %vm378, %v1630
      %v1633 = vld [vmem:[#allocation3 + $0x14] sm:$0xff]
      %v1634 = vld [vmem:[%s4] sm:$0x1]
      %v1636 = vlaneseq
      %v1637 = vshrl.u32 %v1636, 7
      %v1638 = vsub.s32 0, %v1637
      %v1639 = vrot.slane %v1634, %v1638
      %v1641 = vadd.f32 %v1633, %v1639
      %s1642 = scalar_lea.vmem %s266, 16
      %v1643 = vld [vmem:[%s1642] sm:$0xff]
      %v1644 = vadd.f32 %v1641, %v1643
      %s1645 = scalar_lea.vmem %s271, 16
      %1646 = vst.msk [vmem:[%s1645] sm:$0xff] %vm378, %v1644
      %v1647 = vld [vmem:[#allocation3 + $0x1e] sm:$0xff]
      %v1648 = vld [vmem:[%s4] sm:$0x1]
      %v1650 = vlaneseq
      %v1651 = vshrl.u32 %v1650, 7
      %v1652 = vsub.s32 0, %v1651
      %v1653 = vrot.slane %v1648, %v1652
      %v1655 = vadd.f32 %v1647, %v1653
      %s1656 = scalar_lea.vmem %s266, 24
      %v1657 = vld [vmem:[%s1656] sm:$0xff]
      %v1658 = vadd.f32 %v1655, %v1657
      %s1659 = scalar_lea.vmem %s271, 24
      %1660 = vst.msk [vmem:[%s1659] sm:$0xff] %vm378, %v1658
      %p1661 = scmp.lt.s32.totalorder %s17, 1
      %s1662 = scalar_select %p1661, %s17, 1
      %s1663 = smul.addr %s1662, 4
      %s1664 = smul.addr %s1663, 8
      %s1665 = scalar_lea.vmem %s6, %s1664
      // Predicated region
      $region45: #{res_block_3d.5} parent=43 // pred_check
        %p1666 = pneg %p171
      $region46: #{res_block_3d.5} parent=43 // pred_check_branch
        %1668 = sbr.rel (%p1666) target = $region48
      $region47: #{res_block_3d.5} parent=43 // pred_region
        _
      $region48: #{res_block_3d.5} parent=43 // pred_fallthru
        _
    $region44: #{res_block_3d.5} parent=5 // pred_fallthru
      _
    %p1669 = scmp.le.s32.totalorder 2, %s12
    // Predicated region
    $region49: #{res_block_3d.5} parent=5 // pred_check
      %p1670 = pneg %p1669
    $region50: #{res_block_3d.5} parent=5 // pred_check_branch
      %1672 = sbr.rel (%p1670) target = $region52
    $region51: #{res_block_3d.5} parent=5 // pred_region
      %s1673 = ssub.s32 %s12, 2
      // Predicated region
      $region53: #{res_block_3d.5} parent=51 // pred_check
        %p1674 = pneg %p177
      $region54: #{res_block_3d.5} parent=51 // pred_check_branch
        %1676 = sbr.rel (%p1674) target = $region56
      $region55: #{res_block_3d.5} parent=51 // pred_region
        %p1677 = scmp.lt.s32.totalorder %s18, 1
        %s1678 = scalar_select %p1677, %s18, 1
        %s1679 = smul.addr %s1678, 4
        %s1680 = smul.addr %s1679, 8
        %s1681 = scalar_lea.vmem %s6, %s1680
      $region56: #{res_block_3d.5} parent=51 // pred_fallthru
        _
    $region52: #{res_block_3d.5} parent=5 // pred_fallthru
      _
  $region6: #{res_block_3d.5} parent=0 // loop_footer
    %s16 = sadd.s32 1, %s12
  $region7: #{res_block_3d.5} parent=0 // loop_footer_branch
    %11 = sbr.rel target = $region3
  $region8: #{res_block_3d.5} parent=0 // loop_exit
    _

</llo_original>
